<compile_context>
chip_gen: v5e
topology: v5e:2x2
jax: 0.10.0
libtpu: 0.0.40
codegen_flags: <defaults>
</compile_context>

<pallas_src>
import jax
import jax.numpy as jnp
from jax.experimental import pallas as pl
from jax.experimental.pallas import tpu as pltpu

GATE = 128  # lane-padded gate width (hp1 = H+1 = 33 -> 128)


def _make_bigru_kernel(t_max, hidden_dim):
    H = hidden_dim
    G = GATE

    def kernel(seq_ref, wih_ref, bih_ref, whh_ref, bhh_ref, out_ref):
        seq = seq_ref[0]                    # (Tmax, 2G)  [h0_f_pad | h0_b_pad] per row
        wih = wih_ref[...]                  # (2G, 6G) fused fwd+bwd, fold-absorbing
        bih = bih_ref[...]                  # (1, 6G)

        # Hoisted hidden-side matmul: gh for ALL steps in one batched MXU dot.
        gh_all = jnp.dot(seq, whh_ref[...],
                         preferred_element_type=jnp.float32) + bhh_ref[...]  # (Tmax, 6G)

        # Recurrent state: [hf_pad(128) | hb_pad(128)]; zeros == init_hidden at t=0.
        hcat = jnp.zeros((1, 2 * G), jnp.float32)
        rows = []
        # Tiny static trip count (T<=8): fully unrolled.
        # TODO(synk): switch to lax.fori_loop(..., unroll=k) if T ever grows past ~16.
        for t in range(t_max):
            # One matmul per step; the prev-output fold is baked into wih's rows.
            gi = jnp.dot(hcat, wih, preferred_element_type=jnp.float32) + bih  # (1, 6G)
            gh = gh_all[t:t + 1, :]                                            # (1, 6G)
            h0 = seq[t:t + 1, :]                                               # (1, 2G)
            halves = []
            for d in range(2):                      # 0 = forward, 1 = backward
                o = d * 3 * G
                r = jax.nn.sigmoid(gi[:, o:o + G] + gh[:, o:o + G])
                z = jax.nn.sigmoid(gi[:, o + G:o + 2 * G] + gh[:, o + G:o + 2 * G])
                # PyTorch GRU: b_hn sits inside r*(...)
                n = jnp.tanh(gi[:, o + 2 * G:o + 3 * G] + r * gh[:, o + 2 * G:o + 3 * G])
                h0_d = h0[:, d * G:(d + 1) * G]
                halves.append((1.0 - z) * n + z * h0_d)   # (1, G); padded lanes stay 0
            hcat = jnp.concatenate(halves, axis=1)        # (1, 2G)
            rows.append(hcat)

        # Single lane-dense bulk store of all steps.
        out_ref[0] = jnp.concatenate(rows, axis=0)        # (Tmax, 2G)

    return kernel


def pack_params(params, hidden_dim):
    """Pre-pack GRU weights ONCE: lane-pad gates to 128, fuse fwd/bwd, absorb the
    prev-output fold into the input-side weight, build block-diag hidden-side weight."""
    H = hidden_dim
    hp1 = H + 1
    G = GATE

    def pad_gate_cols(w_t):  # (rows, 3*hp1) -> (rows, 3*G), each gate zero-padded to G
        blocks = [jnp.pad(w_t[:, g * hp1:(g + 1) * hp1], ((0, 0), (0, G - hp1)))
                  for g in range(3)]
        return jnp.concatenate(blocks, axis=1)

    def pad_gate_bias(b):    # (3*hp1,) -> (3*G,)
        blocks = [jnp.pad(b[g * hp1:(g + 1) * hp1], (0, G - hp1)) for g in range(3)]
        return jnp.concatenate(blocks)

    # --- input side: fused fwd|bwd and fold-absorbed -------------------------------
    # reference: x[0] = hf[0] + hf[H];  x[j] = hf[j] + hb[j-1]  (j = 1..H-1)
    w_all = jnp.concatenate([pad_gate_cols(params["wih_f"].T),     # (H, 3G)
                             pad_gate_cols(params["wih_b"].T)],    # (H, 3G)
                            axis=1).astype(jnp.float32)            # (H, 6G)
    Wih = jnp.zeros((2 * G, 6 * G), jnp.float32)
    Wih = Wih.at[:H, :].set(w_all)                    # hf[j]  -> x[j]
    Wih = Wih.at[H, :].set(w_all[0, :])               # hf[H]  -> x[0]
    Wih = Wih.at[G:G + H - 1, :].set(w_all[1:H, :])   # hb[j]  -> x[j+1]
    bih = jnp.concatenate([pad_gate_bias(params["bih_f"]),
                           pad_gate_bias(params["bih_b"])]).reshape(1, -1)

    # --- hidden side: block-diagonal for the hoisted batched matmul -----------------
    Whh = jnp.zeros((2 * G, 6 * G), jnp.float32)
    Whh = Whh.at[:hp1, :3 * G].set(pad_gate_cols(params["whh_f"].T))
    Whh = Whh.at[G:G + hp1, 3 * G:].set(pad_gate_cols(params["whh_b"].T))
    bhh = jnp.concatenate([pad_gate_bias(params["bhh_f"]),
                           pad_gate_bias(params["bhh_b"])]).reshape(1, -1)

    return dict(Wih=Wih, bih=bih.astype(jnp.float32),
                Whh=Whh, bhh=bhh.astype(jnp.float32))


def _bigru_pair(seq_q, seq_p, packed, hidden_dim):
    """Run both sequences (query + passages) in ONE pallas_call, grid=(2,)."""
    H = hidden_dim
    hp1 = H + 1
    G = GATE
    Tq, Tp = seq_q.shape[0], seq_p.shape[0]
    t_max = max(Tq, Tp)

    def pack_seq(seq):
        T = seq.shape[0]
        h0f = jnp.pad(seq[:, :hp1], ((0, t_max - T), (0, G - hp1)))
        h0b = jnp.pad(seq[:, hp1:2 * hp1], ((0, t_max - T), (0, G - hp1)))
        return jnp.concatenate([h0f, h0b], axis=1)          # (Tmax, 2G)

    seq_all = jnp.stack([pack_seq(seq_q), pack_seq(seq_p)]).astype(jnp.float32)

    out = pl.pallas_call(
        _make_bigru_kernel(t_max, H),
        out_shape=jax.ShapeDtypeStruct((2, t_max, 2 * G), jnp.float32),
        grid=(2,),
        in_specs=[
            pl.BlockSpec((1, t_max, 2 * G), lambda b: (b, 0, 0)),
            pl.BlockSpec((2 * G, 6 * G), lambda b: (0, 0)),
            pl.BlockSpec((1, 6 * G), lambda b: (0, 0)),
            pl.BlockSpec((2 * G, 6 * G), lambda b: (0, 0)),
            pl.BlockSpec((1, 6 * G), lambda b: (0, 0)),
        ],
        out_specs=pl.BlockSpec((1, t_max, 2 * G), lambda b: (b, 0, 0)),
        compiler_params=pltpu.CompilerParams(dimension_semantics=("parallel",)),
    )(seq_all, packed["Wih"], packed["bih"], packed["Whh"], packed["bhh"])

    # extract [fwd_h[:H] | bwd_h[:H]] and drop padded steps (cheap wrapper-side slicing)
    h_q = jnp.concatenate([out[0, :Tq, :H], out[0, :Tq, G:G + H]], axis=1)
    h_p = jnp.concatenate([out[1, :Tp, :H], out[1, :Tp, G:G + H]], axis=1)
    return h_q, h_p


def answer_synthesis_encoder(e_q, e_p, f_s, f_e, packed, hidden_dim):
    """Matches AnswerSynthesisEncoder.forward. Returns (h_q (m,2H), h_p (N,2H))."""
    m = e_q.shape[0]
    seq_p = jnp.concatenate([e_p, f_s, f_e], axis=1).astype(jnp.float32)
    seq_q = jnp.concatenate(
        [e_q, jnp.zeros((m, 2), jnp.float32)], axis=1).astype(jnp.float32)
    return _bigru_pair(seq_q, seq_p, packed, hidden_dim)


def init_params(key, hidden_dim):
    """Deterministic GRU params: uniform(-1/sqrt(hidden_size), +), like nn.GRU."""
    H = hidden_dim
    hp1 = H + 1
    k = 1.0 / float(jnp.sqrt(jnp.float32(hp1)))
    keys = jax.random.split(key, 8)
    u = lambda kk, shape: jax.random.uniform(kk, shape, jnp.float32, -k, k)
    return dict(
        wih_f=u(keys[0], (3 * hp1, H)),     # weight_ih_l0
        whh_f=u(keys[1], (3 * hp1, hp1)),   # weight_hh_l0
        bih_f=u(keys[2], (3 * hp1,)),
        bhh_f=u(keys[3], (3 * hp1,)),
        wih_b=u(keys[4], (3 * hp1, H)),     # weight_ih_l0_reverse
        whh_b=u(keys[5], (3 * hp1, hp1)),
        bih_b=u(keys[6], (3 * hp1,)),
        bhh_b=u(keys[7], (3 * hp1,)),
    )


def _ref_gru_seq(seq, params, H):
    """Pure-JAX reference of the same recurrence (mirrors PyTorch forward)."""
    hp1 = H + 1

    def cell(x, h, wih, whh, bih, bhh):
        gi = x @ wih.T + bih
        gh = h @ whh.T + bhh
        r = jax.nn.sigmoid(gi[:hp1] + gh[:hp1])
        z = jax.nn.sigmoid(gi[hp1:2 * hp1] + gh[hp1:2 * hp1])
        n = jnp.tanh(gi[2 * hp1:] + r * gh[2 * hp1:])
        return (1.0 - z) * n + z * h

    outs = []
    prev = jnp.zeros((2 * hp1,), jnp.float32)
    for t in range(seq.shape[0]):
        x = prev[:H] + prev[H:2 * H]
        hf = cell(x, seq[t, :hp1], params["wih_f"], params["whh_f"],
                  params["bih_f"], params["bhh_f"])
        hb = cell(x, seq[t, hp1:], params["wih_b"], params["whh_b"],
                  params["bih_b"], params["bhh_b"])
        prev = jnp.concatenate([hf, hb])
        outs.append(jnp.concatenate([hf[:H], hb[:H]]))
    return jnp.stack(outs)


if __name__ == "__main__":
    H = 32                 # hidden_dim
    E = 2 * H              # embedding_dim implied by reshape(2,1,-1) -> (2,1,H+1)
    m, N = 4, 6            # query length, total passage length

    key = jax.random.PRNGKey(0)
    k1, k2, k3, k4, kp = jax.random.split(key, 5)
    e_q = jax.random.normal(k1, (m, E), jnp.float32)
    e_p = jax.random.normal(k2, (N, E), jnp.float32)
    f_s = jax.nn.softmax(jax.random.normal(k3, (N,), jnp.float32)).reshape(N, 1)
    f_e = jax.nn.softmax(jax.random.normal(k4, (N,), jnp.float32)).reshape(N, 1)
    params = init_params(kp, H)
    packed = pack_params(params, H)          # packed ONCE, outside the hot path

    h_q, h_p = answer_synthesis_encoder(e_q, e_p, f_s, f_e, packed, H)
    jax.block_until_ready((h_q, h_p))

    # correctness check against pure-JAX reference of the same recurrence
    seq_p = jnp.concatenate([e_p, f_s, f_e], axis=1)
    seq_q = jnp.concatenate([e_q, jnp.zeros((m, 2), jnp.float32)], axis=1)
    ref_p = _ref_gru_seq(seq_p, params, H)
    ref_q = _ref_gru_seq(seq_q, params, H)
    assert h_q.shape == (m, 2 * H) and h_p.shape == (N, 2 * H)
    assert jnp.allclose(h_p, ref_p, atol=1e-4, rtol=1e-4)
    assert jnp.allclose(h_q, ref_q, atol=1e-4, rtol=1e-4)
    print("KERNEL_OK")
</pallas_src>

<mosaic_0001>
module attributes {stable_mosaic.version = 11 : i64} {
  func.func @kernel(%arg0: i32, %arg1: memref<1x6x256xf32, #tpu.memory_space<vmem>>, %arg2: memref<256x768xf32, #tpu.memory_space<vmem>>, %arg3: memref<1x768xf32, #tpu.memory_space<vmem>>, %arg4: memref<256x768xf32, #tpu.memory_space<vmem>>, %arg5: memref<1x768xf32, #tpu.memory_space<vmem>>, %arg6: memref<1x6x256xf32, #tpu.memory_space<vmem>>) attributes {dimension_semantics = [#tpu.dimension_semantics<parallel>], iteration_bounds = array<i64: 2>, scalar_prefetch = 0 : i64, scratch_operands = 0 : i64, tpu.core_type = #tpu.core_type<tc>, window_params = [{transform_indices = @transform_0, window_bounds = array<i64: 1, 6, 256>}, {pipeline_mode = #tpu.pipeline_mode<synchronous>, transform_indices = @transform_1, window_bounds = array<i64: 256, 768>}, {pipeline_mode = #tpu.pipeline_mode<synchronous>, transform_indices = @transform_2, window_bounds = array<i64: 1, 768>}, {pipeline_mode = #tpu.pipeline_mode<synchronous>, transform_indices = @transform_3, window_bounds = array<i64: 256, 768>}, {pipeline_mode = #tpu.pipeline_mode<synchronous>, transform_indices = @transform_4, window_bounds = array<i64: 1, 768>}, {transform_indices = @transform_5, window_bounds = array<i64: 1, 6, 256>}]} {
    %c0 = arith.constant 0 : index
    %c0_0 = arith.constant 0 : index
    %c0_1 = arith.constant 0 : index
    %0 = vector.load %arg1[%c0, %c0_0, %c0_1] : memref<1x6x256xf32, #tpu.memory_space<vmem>>, vector<1x6x256xf32>
    %1 = vector.shape_cast %0 : vector<1x6x256xf32> to vector<6x256xf32>
    %c0_2 = arith.constant 0 : index
    %c0_3 = arith.constant 0 : index
    %2 = vector.load %arg2[%c0_2, %c0_3] : memref<256x768xf32, #tpu.memory_space<vmem>>, vector<256x768xf32>
    %c0_4 = arith.constant 0 : index
    %c0_5 = arith.constant 0 : index
    %3 = vector.load %arg3[%c0_4, %c0_5] : memref<1x768xf32, #tpu.memory_space<vmem>>, vector<1x768xf32>
    %c0_6 = arith.constant 0 : index
    %c0_7 = arith.constant 0 : index
    %4 = vector.load %arg4[%c0_6, %c0_7] : memref<256x768xf32, #tpu.memory_space<vmem>>, vector<256x768xf32>
    %cst = arith.constant dense<0.000000e+00> : vector<6x768xf32>
    %5 = tpu.matmul %1, %4, %cst {dimension_numbers = #tpu.dot_dimension_numbers<[1], [0], [0], [1], [0, 0, 1, 1], [], []>} : vector<6x256xf32>, vector<256x768xf32>, vector<6x768xf32> -> vector<6x768xf32>
    %c0_8 = arith.constant 0 : index
    %c0_9 = arith.constant 0 : index
    %6 = vector.load %arg5[%c0_8, %c0_9] : memref<1x768xf32, #tpu.memory_space<vmem>>, vector<1x768xf32>
    %7 = vector.broadcast %6 : vector<1x768xf32> to vector<6x768xf32>
    %8 = arith.addf %5, %7 : vector<6x768xf32>
    %cst_10 = arith.constant 0.000000e+00 : f32
    %9 = vector.broadcast %cst_10 : f32 to vector<1x256xf32>
    %cst_11 = arith.constant dense<0.000000e+00> : vector<1x768xf32>
    %10 = tpu.matmul %9, %2, %cst_11 {dimension_numbers = #tpu.dot_dimension_numbers<[1], [0], [0], [1], [0, 0, 1, 1], [], []>} : vector<1x256xf32>, vector<256x768xf32>, vector<1x768xf32> -> vector<1x768xf32>
    %11 = arith.addf %10, %3 : vector<1x768xf32>
    %12 = vector.extract_strided_slice %8 {offsets = [0, 0], sizes = [1, 768], strides = [1, 1]} : vector<6x768xf32> to vector<1x768xf32>
    %13 = vector.extract_strided_slice %1 {offsets = [0, 0], sizes = [1, 256], strides = [1, 1]} : vector<6x256xf32> to vector<1x256xf32>
    %14 = vector.extract_strided_slice %11 {offsets = [0, 0], sizes = [1, 128], strides = [1, 1]} : vector<1x768xf32> to vector<1x128xf32>
    %15 = vector.extract_strided_slice %12 {offsets = [0, 0], sizes = [1, 128], strides = [1, 1]} : vector<1x768xf32> to vector<1x128xf32>
    %16 = arith.addf %14, %15 : vector<1x128xf32>
    %17 = arith.negf %16 : vector<1x128xf32>
    %18 = math.exp %17 : vector<1x128xf32>
    %cst_12 = arith.constant 1.000000e+00 : f32
    %19 = vector.broadcast %cst_12 : f32 to vector<1x128xf32>
    %20 = arith.addf %19, %18 : vector<1x128xf32>
    %21 = arith.divf %19, %20 : vector<1x128xf32>
    %22 = vector.extract_strided_slice %11 {offsets = [0, 128], sizes = [1, 128], strides = [1, 1]} : vector<1x768xf32> to vector<1x128xf32>
    %23 = vector.extract_strided_slice %12 {offsets = [0, 128], sizes = [1, 128], strides = [1, 1]} : vector<1x768xf32> to vector<1x128xf32>
    %24 = arith.addf %22, %23 : vector<1x128xf32>
    %25 = arith.negf %24 : vector<1x128xf32>
    %26 = math.exp %25 : vector<1x128xf32>
    %cst_13 = arith.constant 1.000000e+00 : f32
    %27 = vector.broadcast %cst_13 : f32 to vector<1x128xf32>
    %28 = arith.addf %27, %26 : vector<1x128xf32>
    %29 = arith.divf %27, %28 : vector<1x128xf32>
    %30 = vector.extract_strided_slice %11 {offsets = [0, 256], sizes = [1, 128], strides = [1, 1]} : vector<1x768xf32> to vector<1x128xf32>
    %31 = vector.extract_strided_slice %12 {offsets = [0, 256], sizes = [1, 128], strides = [1, 1]} : vector<1x768xf32> to vector<1x128xf32>
    %32 = arith.mulf %21, %31 : vector<1x128xf32>
    %33 = arith.addf %30, %32 : vector<1x128xf32>
    %34 = math.tanh %33 : vector<1x128xf32>
    %35 = vector.extract_strided_slice %13 {offsets = [0, 0], sizes = [1, 128], strides = [1, 1]} : vector<1x256xf32> to vector<1x128xf32>
    %cst_14 = arith.constant 1.000000e+00 : f32
    %36 = vector.broadcast %cst_14 : f32 to vector<1x128xf32>
    %37 = arith.subf %36, %29 : vector<1x128xf32>
    %38 = arith.mulf %37, %34 : vector<1x128xf32>
    %39 = arith.mulf %29, %35 : vector<1x128xf32>
    %40 = arith.addf %38, %39 : vector<1x128xf32>
    %41 = vector.extract_strided_slice %11 {offsets = [0, 384], sizes = [1, 128], strides = [1, 1]} : vector<1x768xf32> to vector<1x128xf32>
    %42 = vector.extract_strided_slice %12 {offsets = [0, 384], sizes = [1, 128], strides = [1, 1]} : vector<1x768xf32> to vector<1x128xf32>
    %43 = arith.addf %41, %42 : vector<1x128xf32>
    %44 = arith.negf %43 : vector<1x128xf32>
    %45 = math.exp %44 : vector<1x128xf32>
    %cst_15 = arith.constant 1.000000e+00 : f32
    %46 = vector.broadcast %cst_15 : f32 to vector<1x128xf32>
    %47 = arith.addf %46, %45 : vector<1x128xf32>
    %48 = arith.divf %46, %47 : vector<1x128xf32>
    %49 = vector.extract_strided_slice %11 {offsets = [0, 512], sizes = [1, 128], strides = [1, 1]} : vector<1x768xf32> to vector<1x128xf32>
    %50 = vector.extract_strided_slice %12 {offsets = [0, 512], sizes = [1, 128], strides = [1, 1]} : vector<1x768xf32> to vector<1x128xf32>
    %51 = arith.addf %49, %50 : vector<1x128xf32>
    %52 = arith.negf %51 : vector<1x128xf32>
    %53 = math.exp %52 : vector<1x128xf32>
    %cst_16 = arith.constant 1.000000e+00 : f32
    %54 = vector.broadcast %cst_16 : f32 to vector<1x128xf32>
    %55 = arith.addf %54, %53 : vector<1x128xf32>
    %56 = arith.divf %54, %55 : vector<1x128xf32>
    %57 = vector.extract_strided_slice %11 {offsets = [0, 640], sizes = [1, 128], strides = [1, 1]} : vector<1x768xf32> to vector<1x128xf32>
    %58 = vector.extract_strided_slice %12 {offsets = [0, 640], sizes = [1, 128], strides = [1, 1]} : vector<1x768xf32> to vector<1x128xf32>
    %59 = arith.mulf %48, %58 : vector<1x128xf32>
    %60 = arith.addf %57, %59 : vector<1x128xf32>
    %61 = math.tanh %60 : vector<1x128xf32>
    %62 = vector.extract_strided_slice %13 {offsets = [0, 128], sizes = [1, 128], strides = [1, 1]} : vector<1x256xf32> to vector<1x128xf32>
    %cst_17 = arith.constant 1.000000e+00 : f32
    %63 = vector.broadcast %cst_17 : f32 to vector<1x128xf32>
    %64 = arith.subf %63, %56 : vector<1x128xf32>
    %65 = arith.mulf %64, %61 : vector<1x128xf32>
    %66 = arith.mulf %56, %62 : vector<1x128xf32>
    %67 = arith.addf %65, %66 : vector<1x128xf32>
    %68 = tpu.concatenate %40, %67 in 1 : vector<1x128xf32>, vector<1x128xf32> -> vector<1x256xf32>
    %cst_18 = arith.constant dense<0.000000e+00> : vector<1x768xf32>
    %69 = tpu.matmul %68, %2, %cst_18 {dimension_numbers = #tpu.dot_dimension_numbers<[1], [0], [0], [1], [0, 0, 1, 1], [], []>} : vector<1x256xf32>, vector<256x768xf32>, vector<1x768xf32> -> vector<1x768xf32>
    %70 = arith.addf %69, %3 : vector<1x768xf32>
    %71 = vector.extract_strided_slice %8 {offsets = [1, 0], sizes = [1, 768], strides = [1, 1]} : vector<6x768xf32> to vector<1x768xf32>
    %72 = vector.extract_strided_slice %1 {offsets = [1, 0], sizes = [1, 256], strides = [1, 1]} : vector<6x256xf32> to vector<1x256xf32>
    %73 = vector.extract_strided_slice %70 {offsets = [0, 0], sizes = [1, 128], strides = [1, 1]} : vector<1x768xf32> to vector<1x128xf32>
    %74 = vector.extract_strided_slice %71 {offsets = [0, 0], sizes = [1, 128], strides = [1, 1]} : vector<1x768xf32> to vector<1x128xf32>
    %75 = arith.addf %73, %74 : vector<1x128xf32>
    %76 = arith.negf %75 : vector<1x128xf32>
    %77 = math.exp %76 : vector<1x128xf32>
    %cst_19 = arith.constant 1.000000e+00 : f32
    %78 = vector.broadcast %cst_19 : f32 to vector<1x128xf32>
    %79 = arith.addf %78, %77 : vector<1x128xf32>
    %80 = arith.divf %78, %79 : vector<1x128xf32>
    %81 = vector.extract_strided_slice %70 {offsets = [0, 128], sizes = [1, 128], strides = [1, 1]} : vector<1x768xf32> to vector<1x128xf32>
    %82 = vector.extract_strided_slice %71 {offsets = [0, 128], sizes = [1, 128], strides = [1, 1]} : vector<1x768xf32> to vector<1x128xf32>
    %83 = arith.addf %81, %82 : vector<1x128xf32>
    %84 = arith.negf %83 : vector<1x128xf32>
    %85 = math.exp %84 : vector<1x128xf32>
    %cst_20 = arith.constant 1.000000e+00 : f32
    %86 = vector.broadcast %cst_20 : f32 to vector<1x128xf32>
    %87 = arith.addf %86, %85 : vector<1x128xf32>
    %88 = arith.divf %86, %87 : vector<1x128xf32>
    %89 = vector.extract_strided_slice %70 {offsets = [0, 256], sizes = [1, 128], strides = [1, 1]} : vector<1x768xf32> to vector<1x128xf32>
    %90 = vector.extract_strided_slice %71 {offsets = [0, 256], sizes = [1, 128], strides = [1, 1]} : vector<1x768xf32> to vector<1x128xf32>
    %91 = arith.mulf %80, %90 : vector<1x128xf32>
    %92 = arith.addf %89, %91 : vector<1x128xf32>
    %93 = math.tanh %92 : vector<1x128xf32>
    %94 = vector.extract_strided_slice %72 {offsets = [0, 0], sizes = [1, 128], strides = [1, 1]} : vector<1x256xf32> to vector<1x128xf32>
    %cst_21 = arith.constant 1.000000e+00 : f32
    %95 = vector.broadcast %cst_21 : f32 to vector<1x128xf32>
    %96 = arith.subf %95, %88 : vector<1x128xf32>
    %97 = arith.mulf %96, %93 : vector<1x128xf32>
    %98 = arith.mulf %88, %94 : vector<1x128xf32>
    %99 = arith.addf %97, %98 : vector<1x128xf32>
    %100 = vector.extract_strided_slice %70 {offsets = [0, 384], sizes = [1, 128], strides = [1, 1]} : vector<1x768xf32> to vector<1x128xf32>
    %101 = vector.extract_strided_slice %71 {offsets = [0, 384], sizes = [1, 128], strides = [1, 1]} : vector<1x768xf32> to vector<1x128xf32>
    %102 = arith.addf %100, %101 : vector<1x128xf32>
    %103 = arith.negf %102 : vector<1x128xf32>
    %104 = math.exp %103 : vector<1x128xf32>
    %cst_22 = arith.constant 1.000000e+00 : f32
    %105 = vector.broadcast %cst_22 : f32 to vector<1x128xf32>
    %106 = arith.addf %105, %104 : vector<1x128xf32>
    %107 = arith.divf %105, %106 : vector<1x128xf32>
    %108 = vector.extract_strided_slice %70 {offsets = [0, 512], sizes = [1, 128], strides = [1, 1]} : vector<1x768xf32> to vector<1x128xf32>
    %109 = vector.extract_strided_slice %71 {offsets = [0, 512], sizes = [1, 128], strides = [1, 1]} : vector<1x768xf32> to vector<1x128xf32>
    %110 = arith.addf %108, %109 : vector<1x128xf32>
    %111 = arith.negf %110 : vector<1x128xf32>
    %112 = math.exp %111 : vector<1x128xf32>
    %cst_23 = arith.constant 1.000000e+00 : f32
    %113 = vector.broadcast %cst_23 : f32 to vector<1x128xf32>
    %114 = arith.addf %113, %112 : vector<1x128xf32>
    %115 = arith.divf %113, %114 : vector<1x128xf32>
    %116 = vector.extract_strided_slice %70 {offsets = [0, 640], sizes = [1, 128], strides = [1, 1]} : vector<1x768xf32> to vector<1x128xf32>
    %117 = vector.extract_strided_slice %71 {offsets = [0, 640], sizes = [1, 128], strides = [1, 1]} : vector<1x768xf32> to vector<1x128xf32>
    %118 = arith.mulf %107, %117 : vector<1x128xf32>
    %119 = arith.addf %116, %118 : vector<1x128xf32>
    %120 = math.tanh %119 : vector<1x128xf32>
    %121 = vector.extract_strided_slice %72 {offsets = [0, 128], sizes = [1, 128], strides = [1, 1]} : vector<1x256xf32> to vector<1x128xf32>
    %cst_24 = arith.constant 1.000000e+00 : f32
    %122 = vector.broadcast %cst_24 : f32 to vector<1x128xf32>
    %123 = arith.subf %122, %115 : vector<1x128xf32>
    %124 = arith.mulf %123, %120 : vector<1x128xf32>
    %125 = arith.mulf %115, %121 : vector<1x128xf32>
    %126 = arith.addf %124, %125 : vector<1x128xf32>
    %127 = tpu.concatenate %99, %126 in 1 : vector<1x128xf32>, vector<1x128xf32> -> vector<1x256xf32>
    %cst_25 = arith.constant dense<0.000000e+00> : vector<1x768xf32>
    %128 = tpu.matmul %127, %2, %cst_25 {dimension_numbers = #tpu.dot_dimension_numbers<[1], [0], [0], [1], [0, 0, 1, 1], [], []>} : vector<1x256xf32>, vector<256x768xf32>, vector<1x768xf32> -> vector<1x768xf32>
    %129 = arith.addf %128, %3 : vector<1x768xf32>
    %130 = vector.extract_strided_slice %8 {offsets = [2, 0], sizes = [1, 768], strides = [1, 1]} : vector<6x768xf32> to vector<1x768xf32>
    %131 = vector.extract_strided_slice %1 {offsets = [2, 0], sizes = [1, 256], strides = [1, 1]} : vector<6x256xf32> to vector<1x256xf32>
    %132 = vector.extract_strided_slice %129 {offsets = [0, 0], sizes = [1, 128], strides = [1, 1]} : vector<1x768xf32> to vector<1x128xf32>
    %133 = vector.extract_strided_slice %130 {offsets = [0, 0], sizes = [1, 128], strides = [1, 1]} : vector<1x768xf32> to vector<1x128xf32>
    %134 = arith.addf %132, %133 : vector<1x128xf32>
    %135 = arith.negf %134 : vector<1x128xf32>
    %136 = math.exp %135 : vector<1x128xf32>
    %cst_26 = arith.constant 1.000000e+00 : f32
    %137 = vector.broadcast %cst_26 : f32 to vector<1x128xf32>
    %138 = arith.addf %137, %136 : vector<1x128xf32>
    %139 = arith.divf %137, %138 : vector<1x128xf32>
    %140 = vector.extract_strided_slice %129 {offsets = [0, 128], sizes = [1, 128], strides = [1, 1]} : vector<1x768xf32> to vector<1x128xf32>
    %141 = vector.extract_strided_slice %130 {offsets = [0, 128], sizes = [1, 128], strides = [1, 1]} : vector<1x768xf32> to vector<1x128xf32>
    %142 = arith.addf %140, %141 : vector<1x128xf32>
    %143 = arith.negf %142 : vector<1x128xf32>
    %144 = math.exp %143 : vector<1x128xf32>
    %cst_27 = arith.constant 1.000000e+00 : f32
    %145 = vector.broadcast %cst_27 : f32 to vector<1x128xf32>
    %146 = arith.addf %145, %144 : vector<1x128xf32>
    %147 = arith.divf %145, %146 : vector<1x128xf32>
    %148 = vector.extract_strided_slice %129 {offsets = [0, 256], sizes = [1, 128], strides = [1, 1]} : vector<1x768xf32> to vector<1x128xf32>
    %149 = vector.extract_strided_slice %130 {offsets = [0, 256], sizes = [1, 128], strides = [1, 1]} : vector<1x768xf32> to vector<1x128xf32>
    %150 = arith.mulf %139, %149 : vector<1x128xf32>
    %151 = arith.addf %148, %150 : vector<1x128xf32>
    %152 = math.tanh %151 : vector<1x128xf32>
    %153 = vector.extract_strided_slice %131 {offsets = [0, 0], sizes = [1, 128], strides = [1, 1]} : vector<1x256xf32> to vector<1x128xf32>
    %cst_28 = arith.constant 1.000000e+00 : f32
    %154 = vector.broadcast %cst_28 : f32 to vector<1x128xf32>
    %155 = arith.subf %154, %147 : vector<1x128xf32>
    %156 = arith.mulf %155, %152 : vector<1x128xf32>
    %157 = arith.mulf %147, %153 : vector<1x128xf32>
    %158 = arith.addf %156, %157 : vector<1x128xf32>
    %159 = vector.extract_strided_slice %129 {offsets = [0, 384], sizes = [1, 128], strides = [1, 1]} : vector<1x768xf32> to vector<1x128xf32>
    %160 = vector.extract_strided_slice %130 {offsets = [0, 384], sizes = [1, 128], strides = [1, 1]} : vector<1x768xf32> to vector<1x128xf32>
    %161 = arith.addf %159, %160 : vector<1x128xf32>
    %162 = arith.negf %161 : vector<1x128xf32>
    %163 = math.exp %162 : vector<1x128xf32>
    %cst_29 = arith.constant 1.000000e+00 : f32
    %164 = vector.broadcast %cst_29 : f32 to vector<1x128xf32>
    %165 = arith.addf %164, %163 : vector<1x128xf32>
    %166 = arith.divf %164, %165 : vector<1x128xf32>
    %167 = vector.extract_strided_slice %129 {offsets = [0, 512], sizes = [1, 128], strides = [1, 1]} : vector<1x768xf32> to vector<1x128xf32>
    %168 = vector.extract_strided_slice %130 {offsets = [0, 512], sizes = [1, 128], strides = [1, 1]} : vector<1x768xf32> to vector<1x128xf32>
    %169 = arith.addf %167, %168 : vector<1x128xf32>
    %170 = arith.negf %169 : vector<1x128xf32>
    %171 = math.exp %170 : vector<1x128xf32>
    %cst_30 = arith.constant 1.000000e+00 : f32
    %172 = vector.broadcast %cst_30 : f32 to vector<1x128xf32>
    %173 = arith.addf %172, %171 : vector<1x128xf32>
    %174 = arith.divf %172, %173 : vector<1x128xf32>
    %175 = vector.extract_strided_slice %129 {offsets = [0, 640], sizes = [1, 128], strides = [1, 1]} : vector<1x768xf32> to vector<1x128xf32>
    %176 = vector.extract_strided_slice %130 {offsets = [0, 640], sizes = [1, 128], strides = [1, 1]} : vector<1x768xf32> to vector<1x128xf32>
    %177 = arith.mulf %166, %176 : vector<1x128xf32>
    %178 = arith.addf %175, %177 : vector<1x128xf32>
    %179 = math.tanh %178 : vector<1x128xf32>
    %180 = vector.extract_strided_slice %131 {offsets = [0, 128], sizes = [1, 128], strides = [1, 1]} : vector<1x256xf32> to vector<1x128xf32>
    %cst_31 = arith.constant 1.000000e+00 : f32
    %181 = vector.broadcast %cst_31 : f32 to vector<1x128xf32>
    %182 = arith.subf %181, %174 : vector<1x128xf32>
    %183 = arith.mulf %182, %179 : vector<1x128xf32>
    %184 = arith.mulf %174, %180 : vector<1x128xf32>
    %185 = arith.addf %183, %184 : vector<1x128xf32>
    %186 = tpu.concatenate %158, %185 in 1 : vector<1x128xf32>, vector<1x128xf32> -> vector<1x256xf32>
    %cst_32 = arith.constant dense<0.000000e+00> : vector<1x768xf32>
    %187 = tpu.matmul %186, %2, %cst_32 {dimension_numbers = #tpu.dot_dimension_numbers<[1], [0], [0], [1], [0, 0, 1, 1], [], []>} : vector<1x256xf32>, vector<256x768xf32>, vector<1x768xf32> -> vector<1x768xf32>
    %188 = arith.addf %187, %3 : vector<1x768xf32>
    %189 = vector.extract_strided_slice %8 {offsets = [3, 0], sizes = [1, 768], strides = [1, 1]} : vector<6x768xf32> to vector<1x768xf32>
    %190 = vector.extract_strided_slice %1 {offsets = [3, 0], sizes = [1, 256], strides = [1, 1]} : vector<6x256xf32> to vector<1x256xf32>
    %191 = vector.extract_strided_slice %188 {offsets = [0, 0], sizes = [1, 128], strides = [1, 1]} : vector<1x768xf32> to vector<1x128xf32>
    %192 = vector.extract_strided_slice %189 {offsets = [0, 0], sizes = [1, 128], strides = [1, 1]} : vector<1x768xf32> to vector<1x128xf32>
    %193 = arith.addf %191, %192 : vector<1x128xf32>
    %194 = arith.negf %193 : vector<1x128xf32>
    %195 = math.exp %194 : vector<1x128xf32>
    %cst_33 = arith.constant 1.000000e+00 : f32
    %196 = vector.broadcast %cst_33 : f32 to vector<1x128xf32>
    %197 = arith.addf %196, %195 : vector<1x128xf32>
    %198 = arith.divf %196, %197 : vector<1x128xf32>
    %199 = vector.extract_strided_slice %188 {offsets = [0, 128], sizes = [1, 128], strides = [1, 1]} : vector<1x768xf32> to vector<1x128xf32>
    %200 = vector.extract_strided_slice %189 {offsets = [0, 128], sizes = [1, 128], strides = [1, 1]} : vector<1x768xf32> to vector<1x128xf32>
    %201 = arith.addf %199, %200 : vector<1x128xf32>
    %202 = arith.negf %201 : vector<1x128xf32>
    %203 = math.exp %202 : vector<1x128xf32>
    %cst_34 = arith.constant 1.000000e+00 : f32
    %204 = vector.broadcast %cst_34 : f32 to vector<1x128xf32>
    %205 = arith.addf %204, %203 : vector<1x128xf32>
    %206 = arith.divf %204, %205 : vector<1x128xf32>
    %207 = vector.extract_strided_slice %188 {offsets = [0, 256], sizes = [1, 128], strides = [1, 1]} : vector<1x768xf32> to vector<1x128xf32>
    %208 = vector.extract_strided_slice %189 {offsets = [0, 256], sizes = [1, 128], strides = [1, 1]} : vector<1x768xf32> to vector<1x128xf32>
    %209 = arith.mulf %198, %208 : vector<1x128xf32>
    %210 = arith.addf %207, %209 : vector<1x128xf32>
    %211 = math.tanh %210 : vector<1x128xf32>
    %212 = vector.extract_strided_slice %190 {offsets = [0, 0], sizes = [1, 128], strides = [1, 1]} : vector<1x256xf32> to vector<1x128xf32>
    %cst_35 = arith.constant 1.000000e+00 : f32
    %213 = vector.broadcast %cst_35 : f32 to vector<1x128xf32>
    %214 = arith.subf %213, %206 : vector<1x128xf32>
    %215 = arith.mulf %214, %211 : vector<1x128xf32>
    %216 = arith.mulf %206, %212 : vector<1x128xf32>
    %217 = arith.addf %215, %216 : vector<1x128xf32>
    %218 = vector.extract_strided_slice %188 {offsets = [0, 384], sizes = [1, 128], strides = [1, 1]} : vector<1x768xf32> to vector<1x128xf32>
    %219 = vector.extract_strided_slice %189 {offsets = [0, 384], sizes = [1, 128], strides = [1, 1]} : vector<1x768xf32> to vector<1x128xf32>
    %220 = arith.addf %218, %219 : vector<1x128xf32>
    %221 = arith.negf %220 : vector<1x128xf32>
    %222 = math.exp %221 : vector<1x128xf32>
    %cst_36 = arith.constant 1.000000e+00 : f32
    %223 = vector.broadcast %cst_36 : f32 to vector<1x128xf32>
    %224 = arith.addf %223, %222 : vector<1x128xf32>
    %225 = arith.divf %223, %224 : vector<1x128xf32>
    %226 = vector.extract_strided_slice %188 {offsets = [0, 512], sizes = [1, 128], strides = [1, 1]} : vector<1x768xf32> to vector<1x128xf32>
    %227 = vector.extract_strided_slice %189 {offsets = [0, 512], sizes = [1, 128], strides = [1, 1]} : vector<1x768xf32> to vector<1x128xf32>
    %228 = arith.addf %226, %227 : vector<1x128xf32>
    %229 = arith.negf %228 : vector<1x128xf32>
    %230 = math.exp %229 : vector<1x128xf32>
    %cst_37 = arith.constant 1.000000e+00 : f32
    %231 = vector.broadcast %cst_37 : f32 to vector<1x128xf32>
    %232 = arith.addf %231, %230 : vector<1x128xf32>
    %233 = arith.divf %231, %232 : vector<1x128xf32>
    %234 = vector.extract_strided_slice %188 {offsets = [0, 640], sizes = [1, 128], strides = [1, 1]} : vector<1x768xf32> to vector<1x128xf32>
    %235 = vector.extract_strided_slice %189 {offsets = [0, 640], sizes = [1, 128], strides = [1, 1]} : vector<1x768xf32> to vector<1x128xf32>
    %236 = arith.mulf %225, %235 : vector<1x128xf32>
    %237 = arith.addf %234, %236 : vector<1x128xf32>
    %238 = math.tanh %237 : vector<1x128xf32>
    %239 = vector.extract_strided_slice %190 {offsets = [0, 128], sizes = [1, 128], strides = [1, 1]} : vector<1x256xf32> to vector<1x128xf32>
    %cst_38 = arith.constant 1.000000e+00 : f32
    %240 = vector.broadcast %cst_38 : f32 to vector<1x128xf32>
    %241 = arith.subf %240, %233 : vector<1x128xf32>
    %242 = arith.mulf %241, %238 : vector<1x128xf32>
    %243 = arith.mulf %233, %239 : vector<1x128xf32>
    %244 = arith.addf %242, %243 : vector<1x128xf32>
    %245 = tpu.concatenate %217, %244 in 1 : vector<1x128xf32>, vector<1x128xf32> -> vector<1x256xf32>
    %cst_39 = arith.constant dense<0.000000e+00> : vector<1x768xf32>
    %246 = tpu.matmul %245, %2, %cst_39 {dimension_numbers = #tpu.dot_dimension_numbers<[1], [0], [0], [1], [0, 0, 1, 1], [], []>} : vector<1x256xf32>, vector<256x768xf32>, vector<1x768xf32> -> vector<1x768xf32>
    %247 = arith.addf %246, %3 : vector<1x768xf32>
    %248 = vector.extract_strided_slice %8 {offsets = [4, 0], sizes = [1, 768], strides = [1, 1]} : vector<6x768xf32> to vector<1x768xf32>
    %249 = vector.extract_strided_slice %1 {offsets = [4, 0], sizes = [1, 256], strides = [1, 1]} : vector<6x256xf32> to vector<1x256xf32>
    %250 = vector.extract_strided_slice %247 {offsets = [0, 0], sizes = [1, 128], strides = [1, 1]} : vector<1x768xf32> to vector<1x128xf32>
    %251 = vector.extract_strided_slice %248 {offsets = [0, 0], sizes = [1, 128], strides = [1, 1]} : vector<1x768xf32> to vector<1x128xf32>
    %252 = arith.addf %250, %251 : vector<1x128xf32>
    %253 = arith.negf %252 : vector<1x128xf32>
    %254 = math.exp %253 : vector<1x128xf32>
    %cst_40 = arith.constant 1.000000e+00 : f32
    %255 = vector.broadcast %cst_40 : f32 to vector<1x128xf32>
    %256 = arith.addf %255, %254 : vector<1x128xf32>
    %257 = arith.divf %255, %256 : vector<1x128xf32>
    %258 = vector.extract_strided_slice %247 {offsets = [0, 128], sizes = [1, 128], strides = [1, 1]} : vector<1x768xf32> to vector<1x128xf32>
    %259 = vector.extract_strided_slice %248 {offsets = [0, 128], sizes = [1, 128], strides = [1, 1]} : vector<1x768xf32> to vector<1x128xf32>
    %260 = arith.addf %258, %259 : vector<1x128xf32>
    %261 = arith.negf %260 : vector<1x128xf32>
    %262 = math.exp %261 : vector<1x128xf32>
    %cst_41 = arith.constant 1.000000e+00 : f32
    %263 = vector.broadcast %cst_41 : f32 to vector<1x128xf32>
    %264 = arith.addf %263, %262 : vector<1x128xf32>
    %265 = arith.divf %263, %264 : vector<1x128xf32>
    %266 = vector.extract_strided_slice %247 {offsets = [0, 256], sizes = [1, 128], strides = [1, 1]} : vector<1x768xf32> to vector<1x128xf32>
    %267 = vector.extract_strided_slice %248 {offsets = [0, 256], sizes = [1, 128], strides = [1, 1]} : vector<1x768xf32> to vector<1x128xf32>
    %268 = arith.mulf %257, %267 : vector<1x128xf32>
    %269 = arith.addf %266, %268 : vector<1x128xf32>
    %270 = math.tanh %269 : vector<1x128xf32>
    %271 = vector.extract_strided_slice %249 {offsets = [0, 0], sizes = [1, 128], strides = [1, 1]} : vector<1x256xf32> to vector<1x128xf32>
    %cst_42 = arith.constant 1.000000e+00 : f32
    %272 = vector.broadcast %cst_42 : f32 to vector<1x128xf32>
    %273 = arith.subf %272, %265 : vector<1x128xf32>
    %274 = arith.mulf %273, %270 : vector<1x128xf32>
    %275 = arith.mulf %265, %271 : vector<1x128xf32>
    %276 = arith.addf %274, %275 : vector<1x128xf32>
    %277 = vector.extract_strided_slice %247 {offsets = [0, 384], sizes = [1, 128], strides = [1, 1]} : vector<1x768xf32> to vector<1x128xf32>
    %278 = vector.extract_strided_slice %248 {offsets = [0, 384], sizes = [1, 128], strides = [1, 1]} : vector<1x768xf32> to vector<1x128xf32>
    %279 = arith.addf %277, %278 : vector<1x128xf32>
    %280 = arith.negf %279 : vector<1x128xf32>
    %281 = math.exp %280 : vector<1x128xf32>
    %cst_43 = arith.constant 1.000000e+00 : f32
    %282 = vector.broadcast %cst_43 : f32 to vector<1x128xf32>
    %283 = arith.addf %282, %281 : vector<1x128xf32>
    %284 = arith.divf %282, %283 : vector<1x128xf32>
    %285 = vector.extract_strided_slice %247 {offsets = [0, 512], sizes = [1, 128], strides = [1, 1]} : vector<1x768xf32> to vector<1x128xf32>
    %286 = vector.extract_strided_slice %248 {offsets = [0, 512], sizes = [1, 128], strides = [1, 1]} : vector<1x768xf32> to vector<1x128xf32>
    %287 = arith.addf %285, %286 : vector<1x128xf32>
    %288 = arith.negf %287 : vector<1x128xf32>
    %289 = math.exp %288 : vector<1x128xf32>
    %cst_44 = arith.constant 1.000000e+00 : f32
    %290 = vector.broadcast %cst_44 : f32 to vector<1x128xf32>
    %291 = arith.addf %290, %289 : vector<1x128xf32>
    %292 = arith.divf %290, %291 : vector<1x128xf32>
    %293 = vector.extract_strided_slice %247 {offsets = [0, 640], sizes = [1, 128], strides = [1, 1]} : vector<1x768xf32> to vector<1x128xf32>
    %294 = vector.extract_strided_slice %248 {offsets = [0, 640], sizes = [1, 128], strides = [1, 1]} : vector<1x768xf32> to vector<1x128xf32>
    %295 = arith.mulf %284, %294 : vector<1x128xf32>
    %296 = arith.addf %293, %295 : vector<1x128xf32>
    %297 = math.tanh %296 : vector<1x128xf32>
    %298 = vector.extract_strided_slice %249 {offsets = [0, 128], sizes = [1, 128], strides = [1, 1]} : vector<1x256xf32> to vector<1x128xf32>
    %cst_45 = arith.constant 1.000000e+00 : f32
    %299 = vector.broadcast %cst_45 : f32 to vector<1x128xf32>
    %300 = arith.subf %299, %292 : vector<1x128xf32>
    %301 = arith.mulf %300, %297 : vector<1x128xf32>
    %302 = arith.mulf %292, %298 : vector<1x128xf32>
    %303 = arith.addf %301, %302 : vector<1x128xf32>
    %304 = tpu.concatenate %276, %303 in 1 : vector<1x128xf32>, vector<1x128xf32> -> vector<1x256xf32>
    %cst_46 = arith.constant dense<0.000000e+00> : vector<1x768xf32>
    %305 = tpu.matmul %304, %2, %cst_46 {dimension_numbers = #tpu.dot_dimension_numbers<[1], [0], [0], [1], [0, 0, 1, 1], [], []>} : vector<1x256xf32>, vector<256x768xf32>, vector<1x768xf32> -> vector<1x768xf32>
    %306 = arith.addf %305, %3 : vector<1x768xf32>
    %307 = vector.extract_strided_slice %8 {offsets = [5, 0], sizes = [1, 768], strides = [1, 1]} : vector<6x768xf32> to vector<1x768xf32>
    %308 = vector.extract_strided_slice %1 {offsets = [5, 0], sizes = [1, 256], strides = [1, 1]} : vector<6x256xf32> to vector<1x256xf32>
    %309 = vector.extract_strided_slice %306 {offsets = [0, 0], sizes = [1, 128], strides = [1, 1]} : vector<1x768xf32> to vector<1x128xf32>
    %310 = vector.extract_strided_slice %307 {offsets = [0, 0], sizes = [1, 128], strides = [1, 1]} : vector<1x768xf32> to vector<1x128xf32>
    %311 = arith.addf %309, %310 : vector<1x128xf32>
    %312 = arith.negf %311 : vector<1x128xf32>
    %313 = math.exp %312 : vector<1x128xf32>
    %cst_47 = arith.constant 1.000000e+00 : f32
    %314 = vector.broadcast %cst_47 : f32 to vector<1x128xf32>
    %315 = arith.addf %314, %313 : vector<1x128xf32>
    %316 = arith.divf %314, %315 : vector<1x128xf32>
    %317 = vector.extract_strided_slice %306 {offsets = [0, 128], sizes = [1, 128], strides = [1, 1]} : vector<1x768xf32> to vector<1x128xf32>
    %318 = vector.extract_strided_slice %307 {offsets = [0, 128], sizes = [1, 128], strides = [1, 1]} : vector<1x768xf32> to vector<1x128xf32>
    %319 = arith.addf %317, %318 : vector<1x128xf32>
    %320 = arith.negf %319 : vector<1x128xf32>
    %321 = math.exp %320 : vector<1x128xf32>
    %cst_48 = arith.constant 1.000000e+00 : f32
    %322 = vector.broadcast %cst_48 : f32 to vector<1x128xf32>
    %323 = arith.addf %322, %321 : vector<1x128xf32>
    %324 = arith.divf %322, %323 : vector<1x128xf32>
    %325 = vector.extract_strided_slice %306 {offsets = [0, 256], sizes = [1, 128], strides = [1, 1]} : vector<1x768xf32> to vector<1x128xf32>
    %326 = vector.extract_strided_slice %307 {offsets = [0, 256], sizes = [1, 128], strides = [1, 1]} : vector<1x768xf32> to vector<1x128xf32>
    %327 = arith.mulf %316, %326 : vector<1x128xf32>
    %328 = arith.addf %325, %327 : vector<1x128xf32>
    %329 = math.tanh %328 : vector<1x128xf32>
    %330 = vector.extract_strided_slice %308 {offsets = [0, 0], sizes = [1, 128], strides = [1, 1]} : vector<1x256xf32> to vector<1x128xf32>
    %cst_49 = arith.constant 1.000000e+00 : f32
    %331 = vector.broadcast %cst_49 : f32 to vector<1x128xf32>
    %332 = arith.subf %331, %324 : vector<1x128xf32>
    %333 = arith.mulf %332, %329 : vector<1x128xf32>
    %334 = arith.mulf %324, %330 : vector<1x128xf32>
    %335 = arith.addf %333, %334 : vector<1x128xf32>
    %336 = vector.extract_strided_slice %306 {offsets = [0, 384], sizes = [1, 128], strides = [1, 1]} : vector<1x768xf32> to vector<1x128xf32>
    %337 = vector.extract_strided_slice %307 {offsets = [0, 384], sizes = [1, 128], strides = [1, 1]} : vector<1x768xf32> to vector<1x128xf32>
    %338 = arith.addf %336, %337 : vector<1x128xf32>
    %339 = arith.negf %338 : vector<1x128xf32>
    %340 = math.exp %339 : vector<1x128xf32>
    %cst_50 = arith.constant 1.000000e+00 : f32
    %341 = vector.broadcast %cst_50 : f32 to vector<1x128xf32>
    %342 = arith.addf %341, %340 : vector<1x128xf32>
    %343 = arith.divf %341, %342 : vector<1x128xf32>
    %344 = vector.extract_strided_slice %306 {offsets = [0, 512], sizes = [1, 128], strides = [1, 1]} : vector<1x768xf32> to vector<1x128xf32>
    %345 = vector.extract_strided_slice %307 {offsets = [0, 512], sizes = [1, 128], strides = [1, 1]} : vector<1x768xf32> to vector<1x128xf32>
    %346 = arith.addf %344, %345 : vector<1x128xf32>
    %347 = arith.negf %346 : vector<1x128xf32>
    %348 = math.exp %347 : vector<1x128xf32>
    %cst_51 = arith.constant 1.000000e+00 : f32
    %349 = vector.broadcast %cst_51 : f32 to vector<1x128xf32>
    %350 = arith.addf %349, %348 : vector<1x128xf32>
    %351 = arith.divf %349, %350 : vector<1x128xf32>
    %352 = vector.extract_strided_slice %306 {offsets = [0, 640], sizes = [1, 128], strides = [1, 1]} : vector<1x768xf32> to vector<1x128xf32>
    %353 = vector.extract_strided_slice %307 {offsets = [0, 640], sizes = [1, 128], strides = [1, 1]} : vector<1x768xf32> to vector<1x128xf32>
    %354 = arith.mulf %343, %353 : vector<1x128xf32>
    %355 = arith.addf %352, %354 : vector<1x128xf32>
    %356 = math.tanh %355 : vector<1x128xf32>
    %357 = vector.extract_strided_slice %308 {offsets = [0, 128], sizes = [1, 128], strides = [1, 1]} : vector<1x256xf32> to vector<1x128xf32>
    %cst_52 = arith.constant 1.000000e+00 : f32
    %358 = vector.broadcast %cst_52 : f32 to vector<1x128xf32>
    %359 = arith.subf %358, %351 : vector<1x128xf32>
    %360 = arith.mulf %359, %356 : vector<1x128xf32>
    %361 = arith.mulf %351, %357 : vector<1x128xf32>
    %362 = arith.addf %360, %361 : vector<1x128xf32>
    %363 = tpu.concatenate %335, %362 in 1 : vector<1x128xf32>, vector<1x128xf32> -> vector<1x256xf32>
    %364 = tpu.concatenate %68, %127, %186, %245, %304, %363 in 0 : vector<1x256xf32>, vector<1x256xf32>, vector<1x256xf32>, vector<1x256xf32>, vector<1x256xf32>, vector<1x256xf32> -> vector<6x256xf32>
    %c0_53 = arith.constant 0 : index
    %c0_54 = arith.constant 0 : index
    %c0_55 = arith.constant 0 : index
    %365 = vector.load %arg6[%c0_53, %c0_54, %c0_55] : memref<1x6x256xf32, #tpu.memory_space<vmem>>, vector<1x6x256xf32>
    %366 = vector.shape_cast %365 : vector<1x6x256xf32> to vector<6x256xf32>
    %367 = vector.shape_cast %364 : vector<6x256xf32> to vector<1x6x256xf32>
    tpu.vector_store %arg6[%c0_53, %c0_54, %c0_55], %367 {strides = array<i32>} : memref<1x6x256xf32, #tpu.memory_space<vmem>>, vector<1x6x256xf32>,
    return
  }
  func.func @transform_0(%arg0: i32) -> (i32, i32, i32) {
    %c0_i32 = arith.constant 0 : i32
    %c0_i32_0 = arith.constant 0 : i32
    %c0_i32_1 = arith.constant 0 : i32
    return %arg0, %c0_i32, %c0_i32_0 : i32, i32, i32
  }
  func.func @transform_1(%arg0: i32) -> (i32, i32) {
    %c0_i32 = arith.constant 0 : i32
    %c0_i32_0 = arith.constant 0 : i32
    %c0_i32_1 = arith.constant 0 : i32
    return %c0_i32, %c0_i32_0 : i32, i32
  }
  func.func @transform_2(%arg0: i32) -> (i32, i32) {
    %c0_i32 = arith.constant 0 : i32
    %c0_i32_0 = arith.constant 0 : i32
    %c0_i32_1 = arith.constant 0 : i32
    return %c0_i32, %c0_i32_0 : i32, i32
  }
  func.func @transform_3(%arg0: i32) -> (i32, i32) {
    %c0_i32 = arith.constant 0 : i32
    %c0_i32_0 = arith.constant 0 : i32
    %c0_i32_1 = arith.constant 0 : i32
    return %c0_i32, %c0_i32_0 : i32, i32
  }
  func.func @transform_4(%arg0: i32) -> (i32, i32) {
    %c0_i32 = arith.constant 0 : i32
    %c0_i32_0 = arith.constant 0 : i32
    %c0_i32_1 = arith.constant 0 : i32
    return %c0_i32, %c0_i32_0 : i32, i32
  }
  func.func @transform_5(%arg0: i32) -> (i32, i32, i32) {
    %c0_i32 = arith.constant 0 : i32
    %c0_i32_0 = arith.constant 0 : i32
    %c0_i32_1 = arith.constant 0 : i32
    return %arg0, %c0_i32, %c0_i32_0 : i32, i32, i32
  }
}

</mosaic_0001>

<llo_original>
// kernel: tpu_custom_call.1
$region0: #{tpu_custom_call.1}
  #allocation0 [shape = 'u32[]', space=smem, size = 0x4, offset = 0x4, fixed_abs, tag = 'smem constant byte address 0x4 - core index']
  #allocation1 [shape = 'u32[72,128]{1,0:T(1,128)}', space=vmem, size = 0x9000, scoped, tag = 'internal scratch']
  %s0 = inlined_call_operand.vmem [shape: f32[2,6,256], index: 0, kind: input, shape index: {}]
  %s1 = inlined_call_operand.hbm [shape: f32[256,768], index: 1, kind: input, shape index: {}]
  %s2 = inlined_call_operand.vmem [shape: f32[1,768], index: 2, kind: input, shape index: {}]
  %s3 = inlined_call_operand.hbm [shape: f32[256,768], index: 3, kind: input, shape index: {}]
  %s4 = inlined_call_operand.vmem [shape: f32[1,768], index: 4, kind: input, shape index: {}]
  %s5 = inlined_call_operand.vmem [shape: f32[2,6,256], index: 5, kind: output, shape index: {}]
  %s6 = sld [smem:[#allocation0]]
  $region61: #{tpu_custom_call.1} parent=0
    _
  %s8 = ssub.s32 1, %s6
  %s9 = scalar_select 0, %s8, %s6
  $region1: #{tpu_custom_call.1} parent=0
    #allocation2 [shape = 'u8[786432]{0}', space=vmem, size = 0xc0000, scoped, tag = 'input window, operand 1, single buffered']
    #allocation3 [shape = 's32[2]{0}', space=sflag, size = 0x8, scoped, tag = 'scoped memory for tpu_custom_call.1']
    #allocation4 [shape = 'u8[786432]{0}', space=vmem, size = 0xc0000, scoped, tag = 'input window, operand 3, single buffered']
    #allocation5 [shape = 's32[1]{0}', space=sflag, size = 0x4, scoped, tag = 'scoped memory for tpu_custom_call.1']
    %10 = vsyncpa [#allocation3], 0
    %11 = vsyncpa [#allocation5], 0
    loop: start=0, step=1, limit=4
    $region2: #{tpu_custom_call.1} parent=1 // loop_pre_header
      _
    $region3: #{tpu_custom_call.1} parent=1 // loop_header
      %s13 = sphi 0, %s17
      %p14 = scmp.ge.s32.totalorder %s13, 4
      %s23 = sphi 0, %s25
      %s26 = sphi 0, %s23
      %s27 = sphi 0, %s26
      %s43 = sphi 0, %s27
      %s47 = sphi 0, %s47
      %s49 = sphi 0, %s47
      %s50 = sphi 0, %s49
      %s64 = sphi 0, %s50
      %s68 = sphi 0, %s68
      %s70 = sphi 0, %s68
      %s71 = sphi 0, %s70
      %s85 = sphi 0, %s71
      %s89 = sphi 0, %s89
      %s91 = sphi 0, %s89
      %s92 = sphi 0, %s91
      %s106 = sphi 0, %s92
      %s110 = sphi 0, %s110
      %s112 = sphi 0, %s110
      %s113 = sphi 0, %s112
      %s127 = sphi 0, %s113
      %s133 = sphi 0, %s135
      %s136 = sphi 0, %s133
      %s137 = sphi 0, %s136
      %s153 = sphi 0, %s137
    $region4: #{tpu_custom_call.1} parent=1 // loop_header_branch
      %16 = sbr.rel (%p14) target = $region8
    $region5: #{tpu_custom_call.1} parent=1 // loop_body
      %s18 = ssub.s32 %s13, 1
      %s19 = ssub.s32 %s13, 2
      %s20 = sadd.s32 %s13, 1
      %s21 = ssub.s32 %s13, %s20
      %p22 = scmp.eq.s32.totalorder %s21, 0
      %s24 = sadd.s32 %s23, 1
      %s25 = scalar_select %p22, %s23, %s24
      %p28 = pneg %p22
      %p29 = scmp.eq.s32.totalorder %s13, 1
      %p30 = por %p28, %p29
      %p31 = scmp.ne.s32.totalorder %s23, %s26
      %p32 = scmp.eq.s32.totalorder %s13, 0
      %p33 = por %p31, %p32
      %p34 = scmp.ne.s32.totalorder %s23, %s26
      %p35 = scmp.eq.s32.totalorder %s18, 1
      %p36 = por %p34, %p35
      %p37 = scmp.ne.s32.totalorder %s26, %s27
      %p38 = scmp.eq.s32.totalorder %s18, 0
      %p39 = por %p37, %p38
      %p40 = scmp.ne.s32.totalorder %s26, %s27
      %p41 = scmp.eq.s32.totalorder %s19, 1
      %p42 = por %p40, %p41
      %p44 = scmp.ne.s32.totalorder %s27, %s43
      %p45 = scmp.eq.s32.totalorder %s19, 0
      %p46 = por %p44, %p45
      %s48 = sadd.s32 %s47, 1
      %p51 = scmp.eq.s32.totalorder %s13, 1
      %p52 = scmp.ne.s32.totalorder %s47, %s49
      %p53 = scmp.eq.s32.totalorder %s13, 0
      %p54 = por %p52, %p53
      %p55 = scmp.ne.s32.totalorder %s47, %s49
      %p56 = scmp.eq.s32.totalorder %s18, 1
      %p57 = por %p55, %p56
      %p58 = scmp.ne.s32.totalorder %s49, %s50
      %p59 = scmp.eq.s32.totalorder %s18, 0
      %p60 = por %p58, %p59
      %p61 = scmp.ne.s32.totalorder %s49, %s50
      %p62 = scmp.eq.s32.totalorder %s19, 1
      %p63 = por %p61, %p62
      %p65 = scmp.ne.s32.totalorder %s50, %s64
      %p66 = scmp.eq.s32.totalorder %s19, 0
      %p67 = por %p65, %p66
      %s69 = sadd.s32 %s68, 1
      %p72 = scmp.eq.s32.totalorder %s13, 1
      %p73 = scmp.ne.s32.totalorder %s68, %s70
      %p74 = scmp.eq.s32.totalorder %s13, 0
      %p75 = por %p73, %p74
      %p76 = scmp.ne.s32.totalorder %s68, %s70
      %p77 = scmp.eq.s32.totalorder %s18, 1
      %p78 = por %p76, %p77
      %p79 = scmp.ne.s32.totalorder %s70, %s71
      %p80 = scmp.eq.s32.totalorder %s18, 0
      %p81 = por %p79, %p80
      %p82 = scmp.ne.s32.totalorder %s70, %s71
      %p83 = scmp.eq.s32.totalorder %s19, 1
      %p84 = por %p82, %p83
      %p86 = scmp.ne.s32.totalorder %s71, %s85
      %p87 = scmp.eq.s32.totalorder %s19, 0
      %p88 = por %p86, %p87
      %s90 = sadd.s32 %s89, 1
      %p93 = scmp.eq.s32.totalorder %s13, 1
      %p94 = scmp.ne.s32.totalorder %s89, %s91
      %p95 = scmp.eq.s32.totalorder %s13, 0
      %p96 = por %p94, %p95
      %p97 = scmp.ne.s32.totalorder %s89, %s91
      %p98 = scmp.eq.s32.totalorder %s18, 1
      %p99 = por %p97, %p98
      %p100 = scmp.ne.s32.totalorder %s91, %s92
      %p101 = scmp.eq.s32.totalorder %s18, 0
      %p102 = por %p100, %p101
      %p103 = scmp.ne.s32.totalorder %s91, %s92
      %p104 = scmp.eq.s32.totalorder %s19, 1
      %p105 = por %p103, %p104
      %p107 = scmp.ne.s32.totalorder %s92, %s106
      %p108 = scmp.eq.s32.totalorder %s19, 0
      %p109 = por %p107, %p108
      %s111 = sadd.s32 %s110, 1
      %p114 = scmp.eq.s32.totalorder %s13, 1
      %p115 = scmp.ne.s32.totalorder %s110, %s112
      %p116 = scmp.eq.s32.totalorder %s13, 0
      %p117 = por %p115, %p116
      %p118 = scmp.ne.s32.totalorder %s110, %s112
      %p119 = scmp.eq.s32.totalorder %s18, 1
      %p120 = por %p118, %p119
      %p121 = scmp.ne.s32.totalorder %s112, %s113
      %p122 = scmp.eq.s32.totalorder %s18, 0
      %p123 = por %p121, %p122
      %p124 = scmp.ne.s32.totalorder %s112, %s113
      %p125 = scmp.eq.s32.totalorder %s19, 1
      %p126 = por %p124, %p125
      %p128 = scmp.ne.s32.totalorder %s113, %s127
      %p129 = scmp.eq.s32.totalorder %s19, 0
      %p130 = por %p128, %p129
      %s131 = ssub.s32 %s13, %s20
      %p132 = scmp.eq.s32.totalorder %s131, 0
      %s134 = sadd.s32 %s133, 1
      %s135 = scalar_select %p132, %s133, %s134
      %p138 = pneg %p132
      %p139 = scmp.eq.s32.totalorder %s13, 1
      %p140 = por %p138, %p139
      %p141 = scmp.ne.s32.totalorder %s133, %s136
      %p142 = scmp.eq.s32.totalorder %s13, 0
      %p143 = por %p141, %p142
      %p144 = scmp.ne.s32.totalorder %s133, %s136
      %p145 = scmp.eq.s32.totalorder %s18, 1
      %p146 = por %p144, %p145
      %p147 = scmp.ne.s32.totalorder %s136, %s137
      %p148 = scmp.eq.s32.totalorder %s18, 0
      %p149 = por %p147, %p148
      %p150 = scmp.ne.s32.totalorder %s136, %s137
      %p151 = scmp.eq.s32.totalorder %s19, 1
      %p152 = por %p150, %p151
      %p154 = scmp.ne.s32.totalorder %s137, %s153
      %p155 = scmp.eq.s32.totalorder %s19, 0
      %p156 = por %p154, %p155
      %p157 = scmp.le.s32.totalorder 1, %s13
      %p158 = scmp.lt.s32.totalorder %s13, 3
      %p159 = pnand %p157, %p158
      %p160 = pneg %p159
      // Predicated region
      $region9: #{tpu_custom_call.1} parent=5 // pred_check
        _
      $region10: #{tpu_custom_call.1} parent=5 // pred_check_branch
        %162 = sbr.rel (%p159) target = $region12
      $region11: #{tpu_custom_call.1} parent=5 // pred_region
        %s163 = ssub.s32 %s13, 1
        // Predicated region
        $region13: #{tpu_custom_call.1} parent=11 // pred_check
          %p164 = pneg %p60
        $region14: #{tpu_custom_call.1} parent=11 // pred_check_branch
          %166 = sbr.rel (%p164) target = $region16
        $region15: #{tpu_custom_call.1} parent=11 // pred_region
          %168 = vsyncadd [#allocation3], 0
          %s169 = sshll.u32 %s1, 4
          %s170 = int_to_ptr.hbm [resolvable:$true] %s169
          %s171 = sshll.u32 [#allocation2], 4
          %s172 = int_to_ptr.vmem [resolvable:$true] %s171
          %177 = dma.hbm_to_vmem [thread:$0]  %s170, 24576, %s172, [#allocation3], 768, 768, 48
        $region16: #{tpu_custom_call.1} parent=11 // pred_fallthru
          _
        // Predicated region
        $region17: #{tpu_custom_call.1} parent=11 // pred_check
          %p178 = pneg %p81
        $region18: #{tpu_custom_call.1} parent=11 // pred_check_branch
          %180 = sbr.rel (%p178) target = $region20
        $region19: #{tpu_custom_call.1} parent=11 // pred_region
          _
        $region20: #{tpu_custom_call.1} parent=11 // pred_fallthru
          _
        // Predicated region
        $region21: #{tpu_custom_call.1} parent=11 // pred_check
          %p181 = pneg %p102
        $region22: #{tpu_custom_call.1} parent=11 // pred_check_branch
          %183 = sbr.rel (%p181) target = $region24
        $region23: #{tpu_custom_call.1} parent=11 // pred_region
          %185 = vsyncadd [#allocation5], 0
          %s186 = sshll.u32 %s3, 4
          %s187 = int_to_ptr.hbm [resolvable:$true] %s186
          %s188 = sshll.u32 [#allocation4], 4
          %s189 = int_to_ptr.vmem [resolvable:$true] %s188
          %194 = dma.hbm_to_vmem [thread:$0]  %s187, 24576, %s189, [#allocation5], 768, 768, 48
        $region24: #{tpu_custom_call.1} parent=11 // pred_fallthru
          _
        // Predicated region
        $region25: #{tpu_custom_call.1} parent=11 // pred_check
          %p195 = pneg %p123
        $region26: #{tpu_custom_call.1} parent=11 // pred_check_branch
          %197 = sbr.rel (%p195) target = $region28
        $region27: #{tpu_custom_call.1} parent=11 // pred_region
          _
        $region28: #{tpu_custom_call.1} parent=11 // pred_fallthru
          _
      $region12: #{tpu_custom_call.1} parent=5 // pred_fallthru
        _
      %p198 = scmp.lt.s32.totalorder %s13, 2
      // Predicated region
      $region29: #{tpu_custom_call.1} parent=5 // pred_check
        %p199 = pneg %p198
      $region30: #{tpu_custom_call.1} parent=5 // pred_check_branch
        %201 = sbr.rel (%p199) target = $region32
      $region31: #{tpu_custom_call.1} parent=5 // pred_region
        // Predicated region
        $region33: #{tpu_custom_call.1} parent=31 // pred_check
          %p202 = pneg %p33
        $region34: #{tpu_custom_call.1} parent=31 // pred_check_branch
          %204 = sbr.rel (%p202) target = $region36
        $region35: #{tpu_custom_call.1} parent=31 // pred_region
          %p205 = scmp.lt.s32.totalorder %s13, 1
          %s206 = scalar_select %p205, %s13, 1
          %s207 = smul.addr %s206, 2
          %s208 = smul.addr %s207, 8
          %s209 = scalar_lea.vmem %s0, %s208
        $region36: #{tpu_custom_call.1} parent=31 // pred_fallthru
          _
      $region32: #{tpu_custom_call.1} parent=5 // pred_fallthru
        _
      %p210 = scmp.le.s32.totalorder 1, %s13
      %p211 = scmp.lt.s32.totalorder %s13, 3
      %p212 = pnand %p210, %p211
      %p213 = pneg %p212
      // Predicated region
      $region37: #{tpu_custom_call.1} parent=5 // pred_check
        _
      $region38: #{tpu_custom_call.1} parent=5 // pred_check_branch
        %215 = sbr.rel (%p212) target = $region40
      $region39: #{tpu_custom_call.1} parent=5 // pred_region
        %s216 = ssub.s32 %s13, 1
        // Predicated region
        $region41: #{tpu_custom_call.1} parent=39 // pred_check
          %p217 = pneg %p60
        $region42: #{tpu_custom_call.1} parent=39 // pred_check_branch
          %219 = sbr.rel (%p217) target = $region44
        $region43: #{tpu_custom_call.1} parent=39 // pred_region
          %221 = dma.done [#allocation3], 24576
        $region44: #{tpu_custom_call.1} parent=39 // pred_fallthru
          _
        // Predicated region
        $region45: #{tpu_custom_call.1} parent=39 // pred_check
          %p222 = pneg %p102
        $region46: #{tpu_custom_call.1} parent=39 // pred_check_branch
          %224 = sbr.rel (%p222) target = $region48
        $region47: #{tpu_custom_call.1} parent=39 // pred_region
          %226 = dma.done [#allocation5], 24576
        $region48: #{tpu_custom_call.1} parent=39 // pred_fallthru
          _
        %p227 = scmp.lt.s32.totalorder %s18, 1
        %s228 = scalar_select %p227, %s18, 1
        %s229 = smul.addr %s228, 2
        %s230 = smul.addr %s229, 8
        %s231 = scalar_lea.vmem %s0, %s230
        %p232 = pneg %p39
        %p233 = pneg %p36
        %p234 = pneg %p60
        %p235 = pneg %p57
        %p236 = pneg %p81
        %p237 = pneg %p78
        %p238 = pneg %p102
        %p239 = pneg %p99
        %p240 = pneg %p123
        %p241 = pneg %p120
        %p242 = pneg %p149
        %p243 = pneg %p146
        %p244 = scmp.lt.s32.totalorder %s18, 1
        %s245 = scalar_select %p244, %s18, 1
        %s246 = smul.addr %s245, 2
        %s247 = smul.addr %s246, 8
        %s248 = scalar_lea.vmem %s5, %s247
        %p249 = scmp.lt.s32.totalorder %s18, 1
        %s250 = scalar_select %p249, %s18, 1
        %s251 = smul.addr %s250, 2
        %s252 = smul.addr %s251, 8
        %s253 = scalar_lea.vmem %s0, %s252
        %p254 = scmp.lt.s32.totalorder %s18, 1
        %s255 = scalar_select %p254, %s18, 1
        %s256 = smul.addr %s255, 2
        %s257 = smul.addr %s256, 8
        %s258 = scalar_lea.vmem %s5, %s257
        %v259 = vld [vmem:[%s253] sm:$0x3f]
        %v260 = vld [vmem:[%s253 + $0x8] sm:$0x3f]
        %v261 = vld [vmem:[#allocation2] sm:$0xff]
        %v262 = vld [vmem:[#allocation2 + $0x8] sm:$0xff]
        %v263 = vld [vmem:[#allocation2 + $0x10] sm:$0xff]
        %v264 = vld [vmem:[#allocation2 + $0x18] sm:$0xff]
        %v265 = vld [vmem:[#allocation2 + $0x20] sm:$0xff]
        %v266 = vld [vmem:[#allocation2 + $0x28] sm:$0xff]
        %v267 = vld [vmem:[#allocation2 + $0x30] sm:$0xff]
        %v268 = vld [vmem:[#allocation2 + $0x38] sm:$0xff]
        %v269 = vld [vmem:[#allocation2 + $0x40] sm:$0xff]
        %v270 = vld [vmem:[#allocation2 + $0x48] sm:$0xff]
        %v271 = vld [vmem:[#allocation2 + $0x50] sm:$0xff]
        %v272 = vld [vmem:[#allocation2 + $0x58] sm:$0xff]
        %v273 = vld [vmem:[#allocation2 + $0x60] sm:$0xff]
        %v274 = vld [vmem:[#allocation2 + $0x68] sm:$0xff]
        %v275 = vld [vmem:[#allocation2 + $0x70] sm:$0xff]
        %v276 = vld [vmem:[#allocation2 + $0x78] sm:$0xff]
        %v277 = vld [vmem:[#allocation2 + $0x80] sm:$0xff]
        %v278 = vld [vmem:[#allocation2 + $0x88] sm:$0xff]
        %v279 = vld [vmem:[#allocation2 + $0x90] sm:$0xff]
        %v280 = vld [vmem:[#allocation2 + $0x98] sm:$0xff]
        %v281 = vld [vmem:[#allocation2 + $0xa0] sm:$0xff]
        %v282 = vld [vmem:[#allocation2 + $0xa8] sm:$0xff]
        %v283 = vld [vmem:[#allocation2 + $0xb0] sm:$0xff]
        %v284 = vld [vmem:[#allocation2 + $0xb8] sm:$0xff]
        %v285 = vld [vmem:[#allocation2 + $0xc0] sm:$0xff]
        %v286 = vld [vmem:[#allocation2 + $0xc8] sm:$0xff]
        %v287 = vld [vmem:[#allocation2 + $0xd0] sm:$0xff]
        %v288 = vld [vmem:[#allocation2 + $0xd8] sm:$0xff]
        %v289 = vld [vmem:[#allocation2 + $0xe0] sm:$0xff]
        %v290 = vld [vmem:[#allocation2 + $0xe8] sm:$0xff]
        %v291 = vld [vmem:[#allocation2 + $0xf0] sm:$0xff]
        %v292 = vld [vmem:[#allocation2 + $0xf8] sm:$0xff]
        %v293 = vld [vmem:[#allocation2 + $0x100] sm:$0xff]
        %v294 = vld [vmem:[#allocation2 + $0x108] sm:$0xff]
        %v295 = vld [vmem:[#allocation2 + $0x110] sm:$0xff]
        %v296 = vld [vmem:[#allocation2 + $0x118] sm:$0xff]
        %v297 = vld [vmem:[#allocation2 + $0x120] sm:$0xff]
        %v298 = vld [vmem:[#allocation2 + $0x128] sm:$0xff]
        %v299 = vld [vmem:[#allocation2 + $0x130] sm:$0xff]
        %v300 = vld [vmem:[#allocation2 + $0x138] sm:$0xff]
        %v301 = vld [vmem:[#allocation2 + $0x140] sm:$0xff]
        %v302 = vld [vmem:[#allocation2 + $0x148] sm:$0xff]
        %v303 = vld [vmem:[#allocation2 + $0x150] sm:$0xff]
        %v304 = vld [vmem:[#allocation2 + $0x158] sm:$0xff]
        %v305 = vld [vmem:[#allocation2 + $0x160] sm:$0xff]
        %v306 = vld [vmem:[#allocation2 + $0x168] sm:$0xff]
        %v307 = vld [vmem:[#allocation2 + $0x170] sm:$0xff]
        %v308 = vld [vmem:[#allocation2 + $0x178] sm:$0xff]
        %v309 = vld [vmem:[#allocation2 + $0x180] sm:$0xff]
        %v310 = vld [vmem:[#allocation2 + $0x188] sm:$0xff]
        %v311 = vld [vmem:[#allocation2 + $0x190] sm:$0xff]
        %v312 = vld [vmem:[#allocation2 + $0x198] sm:$0xff]
        %v313 = vld [vmem:[#allocation2 + $0x1a0] sm:$0xff]
        %v314 = vld [vmem:[#allocation2 + $0x1a8] sm:$0xff]
        %v315 = vld [vmem:[#allocation2 + $0x1b0] sm:$0xff]
        %v316 = vld [vmem:[#allocation2 + $0x1b8] sm:$0xff]
        %v317 = vld [vmem:[#allocation2 + $0x1c0] sm:$0xff]
        %v318 = vld [vmem:[#allocation2 + $0x1c8] sm:$0xff]
        %v319 = vld [vmem:[#allocation2 + $0x1d0] sm:$0xff]
        %v320 = vld [vmem:[#allocation2 + $0x1d8] sm:$0xff]
        %v321 = vld [vmem:[#allocation2 + $0x1e0] sm:$0xff]
        %v322 = vld [vmem:[#allocation2 + $0x1e8] sm:$0xff]
        %v323 = vld [vmem:[#allocation2 + $0x1f0] sm:$0xff]
        %v324 = vld [vmem:[#allocation2 + $0x1f8] sm:$0xff]
        %v325 = vld [vmem:[#allocation2 + $0x200] sm:$0xff]
        %v326 = vld [vmem:[#allocation2 + $0x208] sm:$0xff]
        %v327 = vld [vmem:[#allocation2 + $0x210] sm:$0xff]
        %v328 = vld [vmem:[#allocation2 + $0x218] sm:$0xff]
        %v329 = vld [vmem:[#allocation2 + $0x220] sm:$0xff]
        %v330 = vld [vmem:[#allocation2 + $0x228] sm:$0xff]
        %v331 = vld [vmem:[#allocation2 + $0x230] sm:$0xff]
        %v332 = vld [vmem:[#allocation2 + $0x238] sm:$0xff]
        %v333 = vld [vmem:[#allocation2 + $0x240] sm:$0xff]
        %v334 = vld [vmem:[#allocation2 + $0x248] sm:$0xff]
        %v335 = vld [vmem:[#allocation2 + $0x250] sm:$0xff]
        %v336 = vld [vmem:[#allocation2 + $0x258] sm:$0xff]
        %v337 = vld [vmem:[#allocation2 + $0x260] sm:$0xff]
        %v338 = vld [vmem:[#allocation2 + $0x268] sm:$0xff]
        %v339 = vld [vmem:[#allocation2 + $0x270] sm:$0xff]
        %v340 = vld [vmem:[#allocation2 + $0x278] sm:$0xff]
        %v341 = vld [vmem:[#allocation2 + $0x280] sm:$0xff]
        %v342 = vld [vmem:[#allocation2 + $0x288] sm:$0xff]
        %v343 = vld [vmem:[#allocation2 + $0x290] sm:$0xff]
        %v344 = vld [vmem:[#allocation2 + $0x298] sm:$0xff]
        %v345 = vld [vmem:[#allocation2 + $0x2a0] sm:$0xff]
        %v346 = vld [vmem:[#allocation2 + $0x2a8] sm:$0xff]
        %v347 = vld [vmem:[#allocation2 + $0x2b0] sm:$0xff]
        %v348 = vld [vmem:[#allocation2 + $0x2b8] sm:$0xff]
        %v349 = vld [vmem:[#allocation2 + $0x2c0] sm:$0xff]
        %v350 = vld [vmem:[#allocation2 + $0x2c8] sm:$0xff]
        %v351 = vld [vmem:[#allocation2 + $0x2d0] sm:$0xff]
        %v352 = vld [vmem:[#allocation2 + $0x2d8] sm:$0xff]
        %v353 = vld [vmem:[#allocation2 + $0x2e0] sm:$0xff]
        %v354 = vld [vmem:[#allocation2 + $0x2e8] sm:$0xff]
        %v355 = vld [vmem:[#allocation2 + $0x2f0] sm:$0xff]
        %v356 = vld [vmem:[#allocation2 + $0x2f8] sm:$0xff]
        %v357 = vld [vmem:[#allocation2 + $0x300] sm:$0xff]
        %v358 = vld [vmem:[#allocation2 + $0x308] sm:$0xff]
        %v359 = vld [vmem:[#allocation2 + $0x310] sm:$0xff]
        %v360 = vld [vmem:[#allocation2 + $0x318] sm:$0xff]
        %v361 = vld [vmem:[#allocation2 + $0x320] sm:$0xff]
        %v362 = vld [vmem:[#allocation2 + $0x328] sm:$0xff]
        %v363 = vld [vmem:[#allocation2 + $0x330] sm:$0xff]
        %v364 = vld [vmem:[#allocation2 + $0x338] sm:$0xff]
        %v365 = vld [vmem:[#allocation2 + $0x340] sm:$0xff]
        %v366 = vld [vmem:[#allocation2 + $0x348] sm:$0xff]
        %v367 = vld [vmem:[#allocation2 + $0x350] sm:$0xff]
        %v368 = vld [vmem:[#allocation2 + $0x358] sm:$0xff]
        %v369 = vld [vmem:[#allocation2 + $0x360] sm:$0xff]
        %v370 = vld [vmem:[#allocation2 + $0x368] sm:$0xff]
        %v371 = vld [vmem:[#allocation2 + $0x370] sm:$0xff]
        %v372 = vld [vmem:[#allocation2 + $0x378] sm:$0xff]
        %v373 = vld [vmem:[#allocation2 + $0x380] sm:$0xff]
        %v374 = vld [vmem:[#allocation2 + $0x388] sm:$0xff]
        %v375 = vld [vmem:[#allocation2 + $0x390] sm:$0xff]
        %v376 = vld [vmem:[#allocation2 + $0x398] sm:$0xff]
        %v377 = vld [vmem:[#allocation2 + $0x3a0] sm:$0xff]
        %v378 = vld [vmem:[#allocation2 + $0x3a8] sm:$0xff]
        %v379 = vld [vmem:[#allocation2 + $0x3b0] sm:$0xff]
        %v380 = vld [vmem:[#allocation2 + $0x3b8] sm:$0xff]
        %v381 = vld [vmem:[#allocation2 + $0x3c0] sm:$0xff]
        %v382 = vld [vmem:[#allocation2 + $0x3c8] sm:$0xff]
        %v383 = vld [vmem:[#allocation2 + $0x3d0] sm:$0xff]
        %v384 = vld [vmem:[#allocation2 + $0x3d8] sm:$0xff]
        %v385 = vld [vmem:[#allocation2 + $0x3e0] sm:$0xff]
        %v386 = vld [vmem:[#allocation2 + $0x3e8] sm:$0xff]
        %v387 = vld [vmem:[#allocation2 + $0x3f0] sm:$0xff]
        %v388 = vld [vmem:[#allocation2 + $0x3f8] sm:$0xff]
        %v389 = vld [vmem:[#allocation2 + $0x400] sm:$0xff]
        %v390 = vld [vmem:[#allocation2 + $0x408] sm:$0xff]
        %v391 = vld [vmem:[#allocation2 + $0x410] sm:$0xff]
        %v392 = vld [vmem:[#allocation2 + $0x418] sm:$0xff]
        %v393 = vld [vmem:[#allocation2 + $0x420] sm:$0xff]
        %v394 = vld [vmem:[#allocation2 + $0x428] sm:$0xff]
        %v395 = vld [vmem:[#allocation2 + $0x430] sm:$0xff]
        %v396 = vld [vmem:[#allocation2 + $0x438] sm:$0xff]
        %v397 = vld [vmem:[#allocation2 + $0x440] sm:$0xff]
        %v398 = vld [vmem:[#allocation2 + $0x448] sm:$0xff]
        %v399 = vld [vmem:[#allocation2 + $0x450] sm:$0xff]
        %v400 = vld [vmem:[#allocation2 + $0x458] sm:$0xff]
        %v401 = vld [vmem:[#allocation2 + $0x460] sm:$0xff]
        %v402 = vld [vmem:[#allocation2 + $0x468] sm:$0xff]
        %v403 = vld [vmem:[#allocation2 + $0x470] sm:$0xff]
        %v404 = vld [vmem:[#allocation2 + $0x478] sm:$0xff]
        %v405 = vld [vmem:[#allocation2 + $0x480] sm:$0xff]
        %v406 = vld [vmem:[#allocation2 + $0x488] sm:$0xff]
        %v407 = vld [vmem:[#allocation2 + $0x490] sm:$0xff]
        %v408 = vld [vmem:[#allocation2 + $0x498] sm:$0xff]
        %v409 = vld [vmem:[#allocation2 + $0x4a0] sm:$0xff]
        %v410 = vld [vmem:[#allocation2 + $0x4a8] sm:$0xff]
        %v411 = vld [vmem:[#allocation2 + $0x4b0] sm:$0xff]
        %v412 = vld [vmem:[#allocation2 + $0x4b8] sm:$0xff]
        %v413 = vld [vmem:[#allocation2 + $0x4c0] sm:$0xff]
        %v414 = vld [vmem:[#allocation2 + $0x4c8] sm:$0xff]
        %v415 = vld [vmem:[#allocation2 + $0x4d0] sm:$0xff]
        %v416 = vld [vmem:[#allocation2 + $0x4d8] sm:$0xff]
        %v417 = vld [vmem:[#allocation2 + $0x4e0] sm:$0xff]
        %v418 = vld [vmem:[#allocation2 + $0x4e8] sm:$0xff]
        %v419 = vld [vmem:[#allocation2 + $0x4f0] sm:$0xff]
        %v420 = vld [vmem:[#allocation2 + $0x4f8] sm:$0xff]
        %v421 = vld [vmem:[#allocation2 + $0x500] sm:$0xff]
        %v422 = vld [vmem:[#allocation2 + $0x508] sm:$0xff]
        %v423 = vld [vmem:[#allocation2 + $0x510] sm:$0xff]
        %v424 = vld [vmem:[#allocation2 + $0x518] sm:$0xff]
        %v425 = vld [vmem:[#allocation2 + $0x520] sm:$0xff]
        %v426 = vld [vmem:[#allocation2 + $0x528] sm:$0xff]
        %v427 = vld [vmem:[#allocation2 + $0x530] sm:$0xff]
        %v428 = vld [vmem:[#allocation2 + $0x538] sm:$0xff]
        %v429 = vld [vmem:[#allocation2 + $0x540] sm:$0xff]
        %v430 = vld [vmem:[#allocation2 + $0x548] sm:$0xff]
        %v431 = vld [vmem:[#allocation2 + $0x550] sm:$0xff]
        %v432 = vld [vmem:[#allocation2 + $0x558] sm:$0xff]
        %v433 = vld [vmem:[#allocation2 + $0x560] sm:$0xff]
        %v434 = vld [vmem:[#allocation2 + $0x568] sm:$0xff]
        %v435 = vld [vmem:[#allocation2 + $0x570] sm:$0xff]
        %v436 = vld [vmem:[#allocation2 + $0x578] sm:$0xff]
        %v437 = vld [vmem:[#allocation2 + $0x580] sm:$0xff]
        %v438 = vld [vmem:[#allocation2 + $0x588] sm:$0xff]
        %v439 = vld [vmem:[#allocation2 + $0x590] sm:$0xff]
        %v440 = vld [vmem:[#allocation2 + $0x598] sm:$0xff]
        %v441 = vld [vmem:[#allocation2 + $0x5a0] sm:$0xff]
        %v442 = vld [vmem:[#allocation2 + $0x5a8] sm:$0xff]
        %v443 = vld [vmem:[#allocation2 + $0x5b0] sm:$0xff]
        %v444 = vld [vmem:[#allocation2 + $0x5b8] sm:$0xff]
        %v445 = vld [vmem:[#allocation2 + $0x5c0] sm:$0xff]
        %v446 = vld [vmem:[#allocation2 + $0x5c8] sm:$0xff]
        %v447 = vld [vmem:[#allocation2 + $0x5d0] sm:$0xff]
        %v448 = vld [vmem:[#allocation2 + $0x5d8] sm:$0xff]
        %v449 = vld [vmem:[#allocation2 + $0x5e0] sm:$0xff]
        %v450 = vld [vmem:[#allocation2 + $0x5e8] sm:$0xff]
        %v451 = vld [vmem:[#allocation2 + $0x5f0] sm:$0xff]
        %v452 = vld [vmem:[#allocation2 + $0x5f8] sm:$0xff]
        %v453 = vld [vmem:[%s2] sm:$0x3f]
        %v454 = vld [vmem:[#allocation4] sm:$0xff]
        %v455 = vld [vmem:[#allocation4 + $0x8] sm:$0xff]
        %v456 = vld [vmem:[#allocation4 + $0x10] sm:$0xff]
        %v457 = vld [vmem:[#allocation4 + $0x18] sm:$0xff]
        %v458 = vld [vmem:[#allocation4 + $0x20] sm:$0xff]
        %v459 = vld [vmem:[#allocation4 + $0x28] sm:$0xff]
        %v460 = vld [vmem:[#allocation4 + $0x30] sm:$0xff]
        %v461 = vld [vmem:[#allocation4 + $0x38] sm:$0xff]
        %v462 = vld [vmem:[#allocation4 + $0x40] sm:$0xff]
        %v463 = vld [vmem:[#allocation4 + $0x48] sm:$0xff]
        %v464 = vld [vmem:[#allocation4 + $0x50] sm:$0xff]
        %v465 = vld [vmem:[#allocation4 + $0x58] sm:$0xff]
        %v466 = vld [vmem:[#allocation4 + $0x60] sm:$0xff]
        %v467 = vld [vmem:[#allocation4 + $0x68] sm:$0xff]
        %v468 = vld [vmem:[#allocation4 + $0x70] sm:$0xff]
        %v469 = vld [vmem:[#allocation4 + $0x78] sm:$0xff]
        %v470 = vld [vmem:[#allocation4 + $0x80] sm:$0xff]
        %v471 = vld [vmem:[#allocation4 + $0x88] sm:$0xff]
        %v472 = vld [vmem:[#allocation4 + $0x90] sm:$0xff]
        %v473 = vld [vmem:[#allocation4 + $0x98] sm:$0xff]
        %v474 = vld [vmem:[#allocation4 + $0xa0] sm:$0xff]
        %v475 = vld [vmem:[#allocation4 + $0xa8] sm:$0xff]
        %v476 = vld [vmem:[#allocation4 + $0xb0] sm:$0xff]
        %v477 = vld [vmem:[#allocation4 + $0xb8] sm:$0xff]
        %v478 = vld [vmem:[#allocation4 + $0xc0] sm:$0xff]
        %v479 = vld [vmem:[#allocation4 + $0xc8] sm:$0xff]
        %v480 = vld [vmem:[#allocation4 + $0xd0] sm:$0xff]
        %v481 = vld [vmem:[#allocation4 + $0xd8] sm:$0xff]
        %v482 = vld [vmem:[#allocation4 + $0xe0] sm:$0xff]
        %v483 = vld [vmem:[#allocation4 + $0xe8] sm:$0xff]
        %v484 = vld [vmem:[#allocation4 + $0xf0] sm:$0xff]
        %v485 = vld [vmem:[#allocation4 + $0xf8] sm:$0xff]
        %v486 = vld [vmem:[#allocation4 + $0x100] sm:$0xff]
        %v487 = vld [vmem:[#allocation4 + $0x108] sm:$0xff]
        %v488 = vld [vmem:[#allocation4 + $0x110] sm:$0xff]
        %v489 = vld [vmem:[#allocation4 + $0x118] sm:$0xff]
        %v490 = vld [vmem:[#allocation4 + $0x120] sm:$0xff]
        %v491 = vld [vmem:[#allocation4 + $0x128] sm:$0xff]
        %v492 = vld [vmem:[#allocation4 + $0x130] sm:$0xff]
        %v493 = vld [vmem:[#allocation4 + $0x138] sm:$0xff]
        %v494 = vld [vmem:[#allocation4 + $0x140] sm:$0xff]
        %v495 = vld [vmem:[#allocation4 + $0x148] sm:$0xff]
        %v496 = vld [vmem:[#allocation4 + $0x150] sm:$0xff]
        %v497 = vld [vmem:[#allocation4 + $0x158] sm:$0xff]
        %v498 = vld [vmem:[#allocation4 + $0x160] sm:$0xff]
        %v499 = vld [vmem:[#allocation4 + $0x168] sm:$0xff]
        %v500 = vld [vmem:[#allocation4 + $0x170] sm:$0xff]
        %v501 = vld [vmem:[#allocation4 + $0x178] sm:$0xff]
        %v502 = vld [vmem:[#allocation4 + $0x180] sm:$0xff]
        %v503 = vld [vmem:[#allocation4 + $0x188] sm:$0xff]
        %v504 = vld [vmem:[#allocation4 + $0x190] sm:$0xff]
        %v505 = vld [vmem:[#allocation4 + $0x198] sm:$0xff]
        %v506 = vld [vmem:[#allocation4 + $0x1a0] sm:$0xff]
        %v507 = vld [vmem:[#allocation4 + $0x1a8] sm:$0xff]
        %v508 = vld [vmem:[#allocation4 + $0x1b0] sm:$0xff]
        %v509 = vld [vmem:[#allocation4 + $0x1b8] sm:$0xff]
        %v510 = vld [vmem:[#allocation4 + $0x1c0] sm:$0xff]
        %v511 = vld [vmem:[#allocation4 + $0x1c8] sm:$0xff]
        %v512 = vld [vmem:[#allocation4 + $0x1d0] sm:$0xff]
        %v513 = vld [vmem:[#allocation4 + $0x1d8] sm:$0xff]
        %v514 = vld [vmem:[#allocation4 + $0x1e0] sm:$0xff]
        %v515 = vld [vmem:[#allocation4 + $0x1e8] sm:$0xff]
        %v516 = vld [vmem:[#allocation4 + $0x1f0] sm:$0xff]
        %v517 = vld [vmem:[#allocation4 + $0x1f8] sm:$0xff]
        %v518 = vld [vmem:[#allocation4 + $0x200] sm:$0xff]
        %v519 = vld [vmem:[#allocation4 + $0x208] sm:$0xff]
        %v520 = vld [vmem:[#allocation4 + $0x210] sm:$0xff]
        %v521 = vld [vmem:[#allocation4 + $0x218] sm:$0xff]
        %v522 = vld [vmem:[#allocation4 + $0x220] sm:$0xff]
        %v523 = vld [vmem:[#allocation4 + $0x228] sm:$0xff]
        %v524 = vld [vmem:[#allocation4 + $0x230] sm:$0xff]
        %v525 = vld [vmem:[#allocation4 + $0x238] sm:$0xff]
        %v526 = vld [vmem:[#allocation4 + $0x240] sm:$0xff]
        %v527 = vld [vmem:[#allocation4 + $0x248] sm:$0xff]
        %v528 = vld [vmem:[#allocation4 + $0x250] sm:$0xff]
        %v529 = vld [vmem:[#allocation4 + $0x258] sm:$0xff]
        %v530 = vld [vmem:[#allocation4 + $0x260] sm:$0xff]
        %v531 = vld [vmem:[#allocation4 + $0x268] sm:$0xff]
        %v532 = vld [vmem:[#allocation4 + $0x270] sm:$0xff]
        %v533 = vld [vmem:[#allocation4 + $0x278] sm:$0xff]
        %v534 = vld [vmem:[#allocation4 + $0x280] sm:$0xff]
        %v535 = vld [vmem:[#allocation4 + $0x288] sm:$0xff]
        %v536 = vld [vmem:[#allocation4 + $0x290] sm:$0xff]
        %v537 = vld [vmem:[#allocation4 + $0x298] sm:$0xff]
        %v538 = vld [vmem:[#allocation4 + $0x2a0] sm:$0xff]
        %v539 = vld [vmem:[#allocation4 + $0x2a8] sm:$0xff]
        %v540 = vld [vmem:[#allocation4 + $0x2b0] sm:$0xff]
        %v541 = vld [vmem:[#allocation4 + $0x2b8] sm:$0xff]
        %v542 = vld [vmem:[#allocation4 + $0x2c0] sm:$0xff]
        %v543 = vld [vmem:[#allocation4 + $0x2c8] sm:$0xff]
        %v544 = vld [vmem:[#allocation4 + $0x2d0] sm:$0xff]
        %v545 = vld [vmem:[#allocation4 + $0x2d8] sm:$0xff]
        %v546 = vld [vmem:[#allocation4 + $0x2e0] sm:$0xff]
        %v547 = vld [vmem:[#allocation4 + $0x2e8] sm:$0xff]
        %v548 = vld [vmem:[#allocation4 + $0x2f0] sm:$0xff]
        %v549 = vld [vmem:[#allocation4 + $0x2f8] sm:$0xff]
        %v550 = vld [vmem:[#allocation4 + $0x300] sm:$0xff]
        %v551 = vld [vmem:[#allocation4 + $0x308] sm:$0xff]
        %v552 = vld [vmem:[#allocation4 + $0x310] sm:$0xff]
        %v553 = vld [vmem:[#allocation4 + $0x318] sm:$0xff]
        %v554 = vld [vmem:[#allocation4 + $0x320] sm:$0xff]
        %v555 = vld [vmem:[#allocation4 + $0x328] sm:$0xff]
        %v556 = vld [vmem:[#allocation4 + $0x330] sm:$0xff]
        %v557 = vld [vmem:[#allocation4 + $0x338] sm:$0xff]
        %v558 = vld [vmem:[#allocation4 + $0x340] sm:$0xff]
        %v559 = vld [vmem:[#allocation4 + $0x348] sm:$0xff]
        %v560 = vld [vmem:[#allocation4 + $0x350] sm:$0xff]
        %v561 = vld [vmem:[#allocation4 + $0x358] sm:$0xff]
        %v562 = vld [vmem:[#allocation4 + $0x360] sm:$0xff]
        %v563 = vld [vmem:[#allocation4 + $0x368] sm:$0xff]
        %v564 = vld [vmem:[#allocation4 + $0x370] sm:$0xff]
        %v565 = vld [vmem:[#allocation4 + $0x378] sm:$0xff]
        %v566 = vld [vmem:[#allocation4 + $0x380] sm:$0xff]
        %v567 = vld [vmem:[#allocation4 + $0x388] sm:$0xff]
        %v568 = vld [vmem:[#allocation4 + $0x390] sm:$0xff]
        %v569 = vld [vmem:[#allocation4 + $0x398] sm:$0xff]
        %v570 = vld [vmem:[#allocation4 + $0x3a0] sm:$0xff]
        %v571 = vld [vmem:[#allocation4 + $0x3a8] sm:$0xff]
        %v572 = vld [vmem:[#allocation4 + $0x3b0] sm:$0xff]
        %v573 = vld [vmem:[#allocation4 + $0x3b8] sm:$0xff]
        %v574 = vld [vmem:[#allocation4 + $0x3c0] sm:$0xff]
        %v575 = vld [vmem:[#allocation4 + $0x3c8] sm:$0xff]
        %v576 = vld [vmem:[#allocation4 + $0x3d0] sm:$0xff]
        %v577 = vld [vmem:[#allocation4 + $0x3d8] sm:$0xff]
        %v578 = vld [vmem:[#allocation4 + $0x3e0] sm:$0xff]
        %v579 = vld [vmem:[#allocation4 + $0x3e8] sm:$0xff]
        %v580 = vld [vmem:[#allocation4 + $0x3f0] sm:$0xff]
        %v581 = vld [vmem:[#allocation4 + $0x3f8] sm:$0xff]
        %v582 = vld [vmem:[#allocation4 + $0x400] sm:$0xff]
        %v583 = vld [vmem:[#allocation4 + $0x408] sm:$0xff]
        %v584 = vld [vmem:[#allocation4 + $0x410] sm:$0xff]
        %v585 = vld [vmem:[#allocation4 + $0x418] sm:$0xff]
        %v586 = vld [vmem:[#allocation4 + $0x420] sm:$0xff]
        %v587 = vld [vmem:[#allocation4 + $0x428] sm:$0xff]
        %v588 = vld [vmem:[#allocation4 + $0x430] sm:$0xff]
        %v589 = vld [vmem:[#allocation4 + $0x438] sm:$0xff]
        %v590 = vld [vmem:[#allocation4 + $0x440] sm:$0xff]
        %v591 = vld [vmem:[#allocation4 + $0x448] sm:$0xff]
        %v592 = vld [vmem:[#allocation4 + $0x450] sm:$0xff]
        %v593 = vld [vmem:[#allocation4 + $0x458] sm:$0xff]
        %v594 = vld [vmem:[#allocation4 + $0x460] sm:$0xff]
        %v595 = vld [vmem:[#allocation4 + $0x468] sm:$0xff]
        %v596 = vld [vmem:[#allocation4 + $0x470] sm:$0xff]
        %v597 = vld [vmem:[#allocation4 + $0x478] sm:$0xff]
        %v598 = vld [vmem:[#allocation4 + $0x480] sm:$0xff]
        %v599 = vld [vmem:[#allocation4 + $0x488] sm:$0xff]
        %v600 = vld [vmem:[#allocation4 + $0x490] sm:$0xff]
        %v601 = vld [vmem:[#allocation4 + $0x498] sm:$0xff]
        %v602 = vld [vmem:[#allocation4 + $0x4a0] sm:$0xff]
        %v603 = vld [vmem:[#allocation4 + $0x4a8] sm:$0xff]
        %v604 = vld [vmem:[#allocation4 + $0x4b0] sm:$0xff]
        %v605 = vld [vmem:[#allocation4 + $0x4b8] sm:$0xff]
        %v606 = vld [vmem:[#allocation4 + $0x4c0] sm:$0xff]
        %v607 = vld [vmem:[#allocation4 + $0x4c8] sm:$0xff]
        %v608 = vld [vmem:[#allocation4 + $0x4d0] sm:$0xff]
        %v609 = vld [vmem:[#allocation4 + $0x4d8] sm:$0xff]
        %v610 = vld [vmem:[#allocation4 + $0x4e0] sm:$0xff]
        %v611 = vld [vmem:[#allocation4 + $0x4e8] sm:$0xff]
        %v612 = vld [vmem:[#allocation4 + $0x4f0] sm:$0xff]
        %v613 = vld [vmem:[#allocation4 + $0x4f8] sm:$0xff]
        %v614 = vld [vmem:[#allocation4 + $0x500] sm:$0xff]
        %v615 = vld [vmem:[#allocation4 + $0x508] sm:$0xff]
        %v616 = vld [vmem:[#allocation4 + $0x510] sm:$0xff]
        %v617 = vld [vmem:[#allocation4 + $0x518] sm:$0xff]
        %v618 = vld [vmem:[#allocation4 + $0x520] sm:$0xff]
        %v619 = vld [vmem:[#allocation4 + $0x528] sm:$0xff]
        %v620 = vld [vmem:[#allocation4 + $0x530] sm:$0xff]
        %v621 = vld [vmem:[#allocation4 + $0x538] sm:$0xff]
        %v622 = vld [vmem:[#allocation4 + $0x540] sm:$0xff]
        %v623 = vld [vmem:[#allocation4 + $0x548] sm:$0xff]
        %v624 = vld [vmem:[#allocation4 + $0x550] sm:$0xff]
        %v625 = vld [vmem:[#allocation4 + $0x558] sm:$0xff]
        %v626 = vld [vmem:[#allocation4 + $0x560] sm:$0xff]
        %v627 = vld [vmem:[#allocation4 + $0x568] sm:$0xff]
        %v628 = vld [vmem:[#allocation4 + $0x570] sm:$0xff]
        %v629 = vld [vmem:[#allocation4 + $0x578] sm:$0xff]
        %v630 = vld [vmem:[#allocation4 + $0x580] sm:$0xff]
        %v631 = vld [vmem:[#allocation4 + $0x588] sm:$0xff]
        %v632 = vld [vmem:[#allocation4 + $0x590] sm:$0xff]
        %v633 = vld [vmem:[#allocation4 + $0x598] sm:$0xff]
        %v634 = vld [vmem:[#allocation4 + $0x5a0] sm:$0xff]
        %v635 = vld [vmem:[#allocation4 + $0x5a8] sm:$0xff]
        %v636 = vld [vmem:[#allocation4 + $0x5b0] sm:$0xff]
        %v637 = vld [vmem:[#allocation4 + $0x5b8] sm:$0xff]
        %v638 = vld [vmem:[#allocation4 + $0x5c0] sm:$0xff]
        %v639 = vld [vmem:[#allocation4 + $0x5c8] sm:$0xff]
        %v640 = vld [vmem:[#allocation4 + $0x5d0] sm:$0xff]
        %v641 = vld [vmem:[#allocation4 + $0x5d8] sm:$0xff]
        %v642 = vld [vmem:[#allocation4 + $0x5e0] sm:$0xff]
        %v643 = vld [vmem:[#allocation4 + $0x5e8] sm:$0xff]
        %v644 = vld [vmem:[#allocation4 + $0x5f0] sm:$0xff]
        %v645 = vld [vmem:[#allocation4 + $0x5f8] sm:$0xff]
        %v646 = vld [vmem:[%s4] sm:$0x3f]
        %v648 = vperm.slane %v646, 0
        %v649 = vperm.slane %v646, 1
        %v650 = vperm.slane %v646, 2
        %v651 = vperm.slane %v646, 3
        %v652 = vperm.slane %v646, 4
        %v653 = vperm.slane %v646, 5
        %660 = vmatpush.msra.mxu0 %v544
        %661 = vmatpush.msra.mxu0 %v538
        %662 = vmatpush.msra.mxu0 %v532
        %663 = vmatpush.msra.mxu0 %v526
        %664 = vmatpush.msra.mxu0 %v520
        %665 = vmatpush.msra.mxu0 %v514
        %666 = vmatpush.msra.mxu0 %v508
        %667 = vmatpush.msra.mxu0 %v502
        %668 = vmatpush.msra.mxu0 %v496
        %669 = vmatpush.msra.mxu0 %v490
        %670 = vmatpush.msra.mxu0 %v484
        %671 = vmatpush.msra.mxu0 %v478
        %672 = vmatpush.msra.mxu0 %v472
        %673 = vmatpush.msra.mxu0 %v466
        %674 = vmatpush.msra.mxu0 %v460
        %675 = vmatpush.msra.mxu0 %v454
        %676 = vmatmul.f32.gmra.mxu0 %v259
        %v677 = vpop.f32.mrf.mxu0
        %v678 = vadd.f32 %v648, %v677
        %679 = vdwg.mxu0
        %680 = vmatpush.msra.mxu0 %v640
        %681 = vmatpush.msra.mxu0 %v634
        %682 = vmatpush.msra.mxu0 %v628
        %683 = vmatpush.msra.mxu0 %v622
        %684 = vmatpush.msra.mxu0 %v616
        %685 = vmatpush.msra.mxu0 %v610
        %686 = vmatpush.msra.mxu0 %v604
        %687 = vmatpush.msra.mxu0 %v598
        %688 = vmatpush.msra.mxu0 %v592
        %689 = vmatpush.msra.mxu0 %v586
        %690 = vmatpush.msra.mxu0 %v580
        %691 = vmatpush.msra.mxu0 %v574
        %692 = vmatpush.msra.mxu0 %v568
        %693 = vmatpush.msra.mxu0 %v562
        %694 = vmatpush.msra.mxu0 %v556
        %695 = vmatpush.msra.mxu0 %v550
        %696 = vmatmul.f32.gmra.mxu0 %v260
        %v697 = vpop.f32.mrf.mxu0
        %v698 = vadd.f32 %v678, %v697
        %699 = vdwg.mxu0
        %700 = vmatpush.msra.mxu0 %v545
        %701 = vmatpush.msra.mxu0 %v539
        %702 = vmatpush.msra.mxu0 %v533
        %703 = vmatpush.msra.mxu0 %v527
        %704 = vmatpush.msra.mxu0 %v521
        %705 = vmatpush.msra.mxu0 %v515
        %706 = vmatpush.msra.mxu0 %v509
        %707 = vmatpush.msra.mxu0 %v503
        %708 = vmatpush.msra.mxu0 %v497
        %709 = vmatpush.msra.mxu0 %v491
        %710 = vmatpush.msra.mxu0 %v485
        %711 = vmatpush.msra.mxu0 %v479
        %712 = vmatpush.msra.mxu0 %v473
        %713 = vmatpush.msra.mxu0 %v467
        %714 = vmatpush.msra.mxu0 %v461
        %715 = vmatpush.msra.mxu0 %v455
        %716 = vmatmul.f32.gmra.mxu0 %v259
        %v717 = vpop.f32.mrf.mxu0
        %v718 = vadd.f32 %v649, %v717
        %719 = vdwg.mxu0
        %720 = vmatpush.msra.mxu0 %v641
        %721 = vmatpush.msra.mxu0 %v635
        %722 = vmatpush.msra.mxu0 %v629
        %723 = vmatpush.msra.mxu0 %v623
        %724 = vmatpush.msra.mxu0 %v617
        %725 = vmatpush.msra.mxu0 %v611
        %726 = vmatpush.msra.mxu0 %v605
        %727 = vmatpush.msra.mxu0 %v599
        %728 = vmatpush.msra.mxu0 %v593
        %729 = vmatpush.msra.mxu0 %v587
        %730 = vmatpush.msra.mxu0 %v581
        %731 = vmatpush.msra.mxu0 %v575
        %732 = vmatpush.msra.mxu0 %v569
        %733 = vmatpush.msra.mxu0 %v563
        %734 = vmatpush.msra.mxu0 %v557
        %735 = vmatpush.msra.mxu0 %v551
        %736 = vmatmul.f32.gmra.mxu0 %v260
        %v737 = vpop.f32.mrf.mxu0
        %v738 = vadd.f32 %v718, %v737
        %739 = vdwg.mxu0
        %740 = vmatpush.msra.mxu0 %v546
        %741 = vmatpush.msra.mxu0 %v540
        %742 = vmatpush.msra.mxu0 %v534
        %743 = vmatpush.msra.mxu0 %v528
        %744 = vmatpush.msra.mxu0 %v522
        %745 = vmatpush.msra.mxu0 %v516
        %746 = vmatpush.msra.mxu0 %v510
        %747 = vmatpush.msra.mxu0 %v504
        %748 = vmatpush.msra.mxu0 %v498
        %749 = vmatpush.msra.mxu0 %v492
        %750 = vmatpush.msra.mxu0 %v486
        %751 = vmatpush.msra.mxu0 %v480
        %752 = vmatpush.msra.mxu0 %v474
        %753 = vmatpush.msra.mxu0 %v468
        %754 = vmatpush.msra.mxu0 %v462
        %755 = vmatpush.msra.mxu0 %v456
        %756 = vmatmul.f32.gmra.mxu0 %v259
        %v757 = vpop.f32.mrf.mxu0
        %v758 = vadd.f32 %v650, %v757
        %759 = vdwg.mxu0
        %760 = vmatpush.msra.mxu0 %v642
        %761 = vmatpush.msra.mxu0 %v636
        %762 = vmatpush.msra.mxu0 %v630
        %763 = vmatpush.msra.mxu0 %v624
        %764 = vmatpush.msra.mxu0 %v618
        %765 = vmatpush.msra.mxu0 %v612
        %766 = vmatpush.msra.mxu0 %v606
        %767 = vmatpush.msra.mxu0 %v600
        %768 = vmatpush.msra.mxu0 %v594
        %769 = vmatpush.msra.mxu0 %v588
        %770 = vmatpush.msra.mxu0 %v582
        %771 = vmatpush.msra.mxu0 %v576
        %772 = vmatpush.msra.mxu0 %v570
        %773 = vmatpush.msra.mxu0 %v564
        %774 = vmatpush.msra.mxu0 %v558
        %775 = vmatpush.msra.mxu0 %v552
        %776 = vmatmul.f32.gmra.mxu0 %v260
        %v777 = vpop.f32.mrf.mxu0
        %v778 = vadd.f32 %v758, %v777
        %779 = vdwg.mxu0
        %780 = vmatpush.msra.mxu0 %v547
        %781 = vmatpush.msra.mxu0 %v541
        %782 = vmatpush.msra.mxu0 %v535
        %783 = vmatpush.msra.mxu0 %v529
        %784 = vmatpush.msra.mxu0 %v523
        %785 = vmatpush.msra.mxu0 %v517
        %786 = vmatpush.msra.mxu0 %v511
        %787 = vmatpush.msra.mxu0 %v505
        %788 = vmatpush.msra.mxu0 %v499
        %789 = vmatpush.msra.mxu0 %v493
        %790 = vmatpush.msra.mxu0 %v487
        %791 = vmatpush.msra.mxu0 %v481
        %792 = vmatpush.msra.mxu0 %v475
        %793 = vmatpush.msra.mxu0 %v469
        %794 = vmatpush.msra.mxu0 %v463
        %795 = vmatpush.msra.mxu0 %v457
        %796 = vmatmul.f32.gmra.mxu0 %v259
        %v797 = vpop.f32.mrf.mxu0
        %v798 = vadd.f32 %v651, %v797
        %799 = vdwg.mxu0
        %800 = vmatpush.msra.mxu0 %v643
        %801 = vmatpush.msra.mxu0 %v637
        %802 = vmatpush.msra.mxu0 %v631
        %803 = vmatpush.msra.mxu0 %v625
        %804 = vmatpush.msra.mxu0 %v619
        %805 = vmatpush.msra.mxu0 %v613
        %806 = vmatpush.msra.mxu0 %v607
        %807 = vmatpush.msra.mxu0 %v601
        %808 = vmatpush.msra.mxu0 %v595
        %809 = vmatpush.msra.mxu0 %v589
        %810 = vmatpush.msra.mxu0 %v583
        %811 = vmatpush.msra.mxu0 %v577
        %812 = vmatpush.msra.mxu0 %v571
        %813 = vmatpush.msra.mxu0 %v565
        %814 = vmatpush.msra.mxu0 %v559
        %815 = vmatpush.msra.mxu0 %v553
        %816 = vmatmul.f32.gmra.mxu0 %v260
        %v817 = vpop.f32.mrf.mxu0
        %v818 = vadd.f32 %v798, %v817
        %819 = vdwg.mxu0
        %820 = vmatpush.msra.mxu0 %v548
        %821 = vmatpush.msra.mxu0 %v542
        %822 = vmatpush.msra.mxu0 %v536
        %823 = vmatpush.msra.mxu0 %v530
        %824 = vmatpush.msra.mxu0 %v524
        %825 = vmatpush.msra.mxu0 %v518
        %826 = vmatpush.msra.mxu0 %v512
        %827 = vmatpush.msra.mxu0 %v506
        %828 = vmatpush.msra.mxu0 %v500
        %829 = vmatpush.msra.mxu0 %v494
        %830 = vmatpush.msra.mxu0 %v488
        %831 = vmatpush.msra.mxu0 %v482
        %832 = vmatpush.msra.mxu0 %v476
        %833 = vmatpush.msra.mxu0 %v470
        %834 = vmatpush.msra.mxu0 %v464
        %835 = vmatpush.msra.mxu0 %v458
        %836 = vmatmul.f32.gmra.mxu0 %v259
        %v837 = vpop.f32.mrf.mxu0
        %v838 = vadd.f32 %v652, %v837
        %839 = vdwg.mxu0
        %840 = vmatpush.msra.mxu0 %v644
        %841 = vmatpush.msra.mxu0 %v638
        %842 = vmatpush.msra.mxu0 %v632
        %843 = vmatpush.msra.mxu0 %v626
        %844 = vmatpush.msra.mxu0 %v620
        %845 = vmatpush.msra.mxu0 %v614
        %846 = vmatpush.msra.mxu0 %v608
        %847 = vmatpush.msra.mxu0 %v602
        %848 = vmatpush.msra.mxu0 %v596
        %849 = vmatpush.msra.mxu0 %v590
        %850 = vmatpush.msra.mxu0 %v584
        %851 = vmatpush.msra.mxu0 %v578
        %852 = vmatpush.msra.mxu0 %v572
        %853 = vmatpush.msra.mxu0 %v566
        %854 = vmatpush.msra.mxu0 %v560
        %855 = vmatpush.msra.mxu0 %v554
        %856 = vmatmul.f32.gmra.mxu0 %v260
        %v857 = vpop.f32.mrf.mxu0
        %v858 = vadd.f32 %v838, %v857
        %859 = vdwg.mxu0
        %860 = vmatpush.msra.mxu0 %v549
        %861 = vmatpush.msra.mxu0 %v543
        %862 = vmatpush.msra.mxu0 %v537
        %863 = vmatpush.msra.mxu0 %v531
        %864 = vmatpush.msra.mxu0 %v525
        %865 = vmatpush.msra.mxu0 %v519
        %866 = vmatpush.msra.mxu0 %v513
        %867 = vmatpush.msra.mxu0 %v507
        %868 = vmatpush.msra.mxu0 %v501
        %869 = vmatpush.msra.mxu0 %v495
        %870 = vmatpush.msra.mxu0 %v489
        %871 = vmatpush.msra.mxu0 %v483
        %872 = vmatpush.msra.mxu0 %v477
        %873 = vmatpush.msra.mxu0 %v471
        %874 = vmatpush.msra.mxu0 %v465
        %875 = vmatpush.msra.mxu0 %v459
        %876 = vmatmul.f32.gmra.mxu0 %v259
        %v877 = vpop.f32.mrf.mxu0
        %v878 = vadd.f32 %v653, %v877
        %879 = vdwg.mxu0
        %880 = vmatpush.msra.mxu0 %v645
        %881 = vmatpush.msra.mxu0 %v639
        %882 = vmatpush.msra.mxu0 %v633
        %883 = vmatpush.msra.mxu0 %v627
        %884 = vmatpush.msra.mxu0 %v621
        %885 = vmatpush.msra.mxu0 %v615
        %886 = vmatpush.msra.mxu0 %v609
        %887 = vmatpush.msra.mxu0 %v603
        %888 = vmatpush.msra.mxu0 %v597
        %889 = vmatpush.msra.mxu0 %v591
        %890 = vmatpush.msra.mxu0 %v585
        %891 = vmatpush.msra.mxu0 %v579
        %892 = vmatpush.msra.mxu0 %v573
        %893 = vmatpush.msra.mxu0 %v567
        %894 = vmatpush.msra.mxu0 %v561
        %895 = vmatpush.msra.mxu0 %v555
        %896 = vmatmul.f32.gmra.mxu0 %v260
        %v897 = vpop.f32.mrf.mxu0
        %v898 = vadd.f32 %v878, %v897
        %899 = vdwg.mxu0
        %v901 = vperm.slane %v453, 0
        %v902 = vperm.slane %v453, 1
        %v903 = vperm.slane %v453, 2
        %v904 = vperm.slane %v453, 3
        %v905 = vperm.slane %v453, 4
        %v906 = vperm.slane %v453, 5
        %913 = vmatpush.msra.mxu0 %v351
        %914 = vmatpush.msra.mxu0 %v345
        %915 = vmatpush.msra.mxu0 %v339
        %916 = vmatpush.msra.mxu0 %v333
        %917 = vmatpush.msra.mxu0 %v327
        %918 = vmatpush.msra.mxu0 %v321
        %919 = vmatpush.msra.mxu0 %v315
        %920 = vmatpush.msra.mxu0 %v309
        %921 = vmatpush.msra.mxu0 %v303
        %922 = vmatpush.msra.mxu0 %v297
        %923 = vmatpush.msra.mxu0 %v291
        %924 = vmatpush.msra.mxu0 %v285
        %925 = vmatpush.msra.mxu0 %v279
        %926 = vmatpush.msra.mxu0 %v273
        %927 = vmatpush.msra.mxu0 %v267
        %928 = vmatpush.msra.mxu0 %v261
        %929 = vmatmul.f32.gmra.mxu0 0.0
        %v930 = vpop.f32.mrf.mxu0
        %v931 = vadd.f32 %v901, %v930
        %932 = vdwg.mxu0
        %933 = vmatpush.msra.mxu0 %v447
        %934 = vmatpush.msra.mxu0 %v441
        %935 = vmatpush.msra.mxu0 %v435
        %936 = vmatpush.msra.mxu0 %v429
        %937 = vmatpush.msra.mxu0 %v423
        %938 = vmatpush.msra.mxu0 %v417
        %939 = vmatpush.msra.mxu0 %v411
        %940 = vmatpush.msra.mxu0 %v405
        %941 = vmatpush.msra.mxu0 %v399
        %942 = vmatpush.msra.mxu0 %v393
        %943 = vmatpush.msra.mxu0 %v387
        %944 = vmatpush.msra.mxu0 %v381
        %945 = vmatpush.msra.mxu0 %v375
        %946 = vmatpush.msra.mxu0 %v369
        %947 = vmatpush.msra.mxu0 %v363
        %948 = vmatpush.msra.mxu0 %v357
        %949 = vmatmul.f32.gmra.mxu0 0.0
        %v950 = vpop.f32.mrf.mxu0
        %v951 = vadd.f32 %v931, %v950
        %952 = vdwg.mxu0
        %953 = vmatpush.msra.mxu0 %v352
        %954 = vmatpush.msra.mxu0 %v346
        %955 = vmatpush.msra.mxu0 %v340
        %956 = vmatpush.msra.mxu0 %v334
        %957 = vmatpush.msra.mxu0 %v328
        %958 = vmatpush.msra.mxu0 %v322
        %959 = vmatpush.msra.mxu0 %v316
        %960 = vmatpush.msra.mxu0 %v310
        %961 = vmatpush.msra.mxu0 %v304
        %962 = vmatpush.msra.mxu0 %v298
        %963 = vmatpush.msra.mxu0 %v292
        %964 = vmatpush.msra.mxu0 %v286
        %965 = vmatpush.msra.mxu0 %v280
        %966 = vmatpush.msra.mxu0 %v274
        %967 = vmatpush.msra.mxu0 %v268
        %968 = vmatpush.msra.mxu0 %v262
        %969 = vmatmul.f32.gmra.mxu0 0.0
        %v970 = vpop.f32.mrf.mxu0
        %v971 = vadd.f32 %v902, %v970
        %972 = vdwg.mxu0
        %973 = vmatpush.msra.mxu0 %v448
        %974 = vmatpush.msra.mxu0 %v442
        %975 = vmatpush.msra.mxu0 %v436
        %976 = vmatpush.msra.mxu0 %v430
        %977 = vmatpush.msra.mxu0 %v424
        %978 = vmatpush.msra.mxu0 %v418
        %979 = vmatpush.msra.mxu0 %v412
        %980 = vmatpush.msra.mxu0 %v406
        %981 = vmatpush.msra.mxu0 %v400
        %982 = vmatpush.msra.mxu0 %v394
        %983 = vmatpush.msra.mxu0 %v388
        %984 = vmatpush.msra.mxu0 %v382
        %985 = vmatpush.msra.mxu0 %v376
        %986 = vmatpush.msra.mxu0 %v370
        %987 = vmatpush.msra.mxu0 %v364
        %988 = vmatpush.msra.mxu0 %v358
        %989 = vmatmul.f32.gmra.mxu0 0.0
        %v990 = vpop.f32.mrf.mxu0
        %v991 = vadd.f32 %v971, %v990
        %992 = vdwg.mxu0
        %993 = vmatpush.msra.mxu0 %v353
        %994 = vmatpush.msra.mxu0 %v347
        %995 = vmatpush.msra.mxu0 %v341
        %996 = vmatpush.msra.mxu0 %v335
        %997 = vmatpush.msra.mxu0 %v329
        %998 = vmatpush.msra.mxu0 %v323
        %999 = vmatpush.msra.mxu0 %v317
        %1000 = vmatpush.msra.mxu0 %v311
        %1001 = vmatpush.msra.mxu0 %v305
        %1002 = vmatpush.msra.mxu0 %v299
        %1003 = vmatpush.msra.mxu0 %v293
        %1004 = vmatpush.msra.mxu0 %v287
        %1005 = vmatpush.msra.mxu0 %v281
        %1006 = vmatpush.msra.mxu0 %v275
        %1007 = vmatpush.msra.mxu0 %v269
        %1008 = vmatpush.msra.mxu0 %v263
        %1009 = vmatmul.f32.gmra.mxu0 0.0
        %v1010 = vpop.f32.mrf.mxu0
        %v1011 = vadd.f32 %v903, %v1010
        %1012 = vdwg.mxu0
        %1013 = vmatpush.msra.mxu0 %v449
        %1014 = vmatpush.msra.mxu0 %v443
        %1015 = vmatpush.msra.mxu0 %v437
        %1016 = vmatpush.msra.mxu0 %v431
        %1017 = vmatpush.msra.mxu0 %v425
        %1018 = vmatpush.msra.mxu0 %v419
        %1019 = vmatpush.msra.mxu0 %v413
        %1020 = vmatpush.msra.mxu0 %v407
        %1021 = vmatpush.msra.mxu0 %v401
        %1022 = vmatpush.msra.mxu0 %v395
        %1023 = vmatpush.msra.mxu0 %v389
        %1024 = vmatpush.msra.mxu0 %v383
        %1025 = vmatpush.msra.mxu0 %v377
        %1026 = vmatpush.msra.mxu0 %v371
        %1027 = vmatpush.msra.mxu0 %v365
        %1028 = vmatpush.msra.mxu0 %v359
        %1029 = vmatmul.f32.gmra.mxu0 0.0
        %v1030 = vpop.f32.mrf.mxu0
        %v1031 = vadd.f32 %v1011, %v1030
        %1032 = vdwg.mxu0
        %1033 = vmatpush.msra.mxu0 %v354
        %1034 = vmatpush.msra.mxu0 %v348
        %1035 = vmatpush.msra.mxu0 %v342
        %1036 = vmatpush.msra.mxu0 %v336
        %1037 = vmatpush.msra.mxu0 %v330
        %1038 = vmatpush.msra.mxu0 %v324
        %1039 = vmatpush.msra.mxu0 %v318
        %1040 = vmatpush.msra.mxu0 %v312
        %1041 = vmatpush.msra.mxu0 %v306
        %1042 = vmatpush.msra.mxu0 %v300
        %1043 = vmatpush.msra.mxu0 %v294
        %1044 = vmatpush.msra.mxu0 %v288
        %1045 = vmatpush.msra.mxu0 %v282
        %1046 = vmatpush.msra.mxu0 %v276
        %1047 = vmatpush.msra.mxu0 %v270
        %1048 = vmatpush.msra.mxu0 %v264
        %1049 = vmatmul.f32.gmra.mxu0 0.0
        %v1050 = vpop.f32.mrf.mxu0
        %v1051 = vadd.f32 %v904, %v1050
        %1052 = vdwg.mxu0
        %1053 = vmatpush.msra.mxu0 %v450
        %1054 = vmatpush.msra.mxu0 %v444
        %1055 = vmatpush.msra.mxu0 %v438
        %1056 = vmatpush.msra.mxu0 %v432
        %1057 = vmatpush.msra.mxu0 %v426
        %1058 = vmatpush.msra.mxu0 %v420
        %1059 = vmatpush.msra.mxu0 %v414
        %1060 = vmatpush.msra.mxu0 %v408
        %1061 = vmatpush.msra.mxu0 %v402
        %1062 = vmatpush.msra.mxu0 %v396
        %1063 = vmatpush.msra.mxu0 %v390
        %1064 = vmatpush.msra.mxu0 %v384
        %1065 = vmatpush.msra.mxu0 %v378
        %1066 = vmatpush.msra.mxu0 %v372
        %1067 = vmatpush.msra.mxu0 %v366
        %1068 = vmatpush.msra.mxu0 %v360
        %1069 = vmatmul.f32.gmra.mxu0 0.0
        %v1070 = vpop.f32.mrf.mxu0
        %v1071 = vadd.f32 %v1051, %v1070
        %1072 = vdwg.mxu0
        %1073 = vmatpush.msra.mxu0 %v355
        %1074 = vmatpush.msra.mxu0 %v349
        %1075 = vmatpush.msra.mxu0 %v343
        %1076 = vmatpush.msra.mxu0 %v337
        %1077 = vmatpush.msra.mxu0 %v331
        %1078 = vmatpush.msra.mxu0 %v325
        %1079 = vmatpush.msra.mxu0 %v319
        %1080 = vmatpush.msra.mxu0 %v313
        %1081 = vmatpush.msra.mxu0 %v307
        %1082 = vmatpush.msra.mxu0 %v301
        %1083 = vmatpush.msra.mxu0 %v295
        %1084 = vmatpush.msra.mxu0 %v289
        %1085 = vmatpush.msra.mxu0 %v283
        %1086 = vmatpush.msra.mxu0 %v277
        %1087 = vmatpush.msra.mxu0 %v271
        %1088 = vmatpush.msra.mxu0 %v265
        %1089 = vmatmul.f32.gmra.mxu0 0.0
        %v1090 = vpop.f32.mrf.mxu0
        %v1091 = vadd.f32 %v905, %v1090
        %1092 = vdwg.mxu0
        %1093 = vmatpush.msra.mxu0 %v451
        %1094 = vmatpush.msra.mxu0 %v445
        %1095 = vmatpush.msra.mxu0 %v439
        %1096 = vmatpush.msra.mxu0 %v433
        %1097 = vmatpush.msra.mxu0 %v427
        %1098 = vmatpush.msra.mxu0 %v421
        %1099 = vmatpush.msra.mxu0 %v415
        %1100 = vmatpush.msra.mxu0 %v409
        %1101 = vmatpush.msra.mxu0 %v403
        %1102 = vmatpush.msra.mxu0 %v397
        %1103 = vmatpush.msra.mxu0 %v391
        %1104 = vmatpush.msra.mxu0 %v385
        %1105 = vmatpush.msra.mxu0 %v379
        %1106 = vmatpush.msra.mxu0 %v373
        %1107 = vmatpush.msra.mxu0 %v367
        %1108 = vmatpush.msra.mxu0 %v361
        %1109 = vmatmul.f32.gmra.mxu0 0.0
        %v1110 = vpop.f32.mrf.mxu0
        %v1111 = vadd.f32 %v1091, %v1110
        %1112 = vdwg.mxu0
        %1113 = vmatpush.msra.mxu0 %v356
        %1114 = vmatpush.msra.mxu0 %v350
        %1115 = vmatpush.msra.mxu0 %v344
        %1116 = vmatpush.msra.mxu0 %v338
        %1117 = vmatpush.msra.mxu0 %v332
        %1118 = vmatpush.msra.mxu0 %v326
        %1119 = vmatpush.msra.mxu0 %v320
        %1120 = vmatpush.msra.mxu0 %v314
        %1121 = vmatpush.msra.mxu0 %v308
        %1122 = vmatpush.msra.mxu0 %v302
        %1123 = vmatpush.msra.mxu0 %v296
        %1124 = vmatpush.msra.mxu0 %v290
        %1125 = vmatpush.msra.mxu0 %v284
        %1126 = vmatpush.msra.mxu0 %v278
        %1127 = vmatpush.msra.mxu0 %v272
        %1128 = vmatpush.msra.mxu0 %v266
        %1129 = vmatmul.f32.gmra.mxu0 0.0
        %v1130 = vpop.f32.mrf.mxu0
        %v1131 = vadd.f32 %v906, %v1130
        %1132 = vdwg.mxu0
        %1133 = vmatpush.msra.mxu0 %v452
        %1134 = vmatpush.msra.mxu0 %v446
        %1135 = vmatpush.msra.mxu0 %v440
        %1136 = vmatpush.msra.mxu0 %v434
        %1137 = vmatpush.msra.mxu0 %v428
        %1138 = vmatpush.msra.mxu0 %v422
        %1139 = vmatpush.msra.mxu0 %v416
        %1140 = vmatpush.msra.mxu0 %v410
        %1141 = vmatpush.msra.mxu0 %v404
        %1142 = vmatpush.msra.mxu0 %v398
        %1143 = vmatpush.msra.mxu0 %v392
        %1144 = vmatpush.msra.mxu0 %v386
        %1145 = vmatpush.msra.mxu0 %v380
        %1146 = vmatpush.msra.mxu0 %v374
        %1147 = vmatpush.msra.mxu0 %v368
        %1148 = vmatpush.msra.mxu0 %v362
        %1149 = vmatmul.f32.gmra.mxu0 0.0
        %v1150 = vpop.f32.mrf.mxu0
        %v1151 = vadd.f32 %v1131, %v1150
        %1152 = vdwg.mxu0
        %v1153 = vadd.f32 %v951, %v698
        %v1154 = vxor.u32 %v1153, 2147483648
        %v1155 = vmul.f32 %v1154, 1.442695
        %v1156 = vpow.pop %v1155
        %v1157 = vadd.f32 %v1156, 1.0
        %v1158 = vrcp.pop %v1157
        %v1159 = vmul.f32 %v1157, %v1158
        %v1160 = vsub.f32 1.0, %v1159
        %v1161 = vmul.f32 %v1158, %v1160
        %v1162 = vadd.f32 %v1158, %v1161
        %vm1163 = vweird.f32 %v1157
        %vm1164 = vweird.f32 %v1158
        %vm1165 = vmor %vm1163, %vm1164
        %v1166 = vsel %vm1165, %v1158, %v1162
        %v1167 = vand.u32 2147483647, %v1157
        %vm1168 = vcmp.eq.f32.partialorder %v1167, 8.507059e+37
        %v1169 = vand.u32 %v1157, 2147483648
        %v1170 = vor.u32 1.1754944e-38, %v1169
        %v1171 = vsel %vm1168, %v1170, %v1166
        %v1172 = vmul.f32 1.0, %v1171
        %v1173 = vadd.f32 %v991, %v738
        %v1174 = vxor.u32 %v1173, 2147483648
        %v1175 = vmul.f32 %v1174, 1.442695
        %v1176 = vpow.pop %v1175
        %v1177 = vadd.f32 %v1176, 1.0
        %v1178 = vrcp.pop %v1177
        %v1179 = vmul.f32 %v1177, %v1178
        %v1180 = vsub.f32 1.0, %v1179
        %v1181 = vmul.f32 %v1178, %v1180
        %v1182 = vadd.f32 %v1178, %v1181
        %vm1183 = vweird.f32 %v1177
        %vm1184 = vweird.f32 %v1178
        %vm1185 = vmor %vm1183, %vm1184
        %v1186 = vsel %vm1185, %v1178, %v1182
        %v1187 = vand.u32 2147483647, %v1177
        %vm1188 = vcmp.eq.f32.partialorder %v1187, 8.507059e+37
        %v1189 = vand.u32 %v1177, 2147483648
        %v1190 = vor.u32 1.1754944e-38, %v1189
        %v1191 = vsel %vm1188, %v1190, %v1186
        %v1192 = vmul.f32 1.0, %v1191
        %v1193 = vmul.f32 %v1172, %v778
        %v1194 = vadd.f32 %v1031, %v1193
        %v1195 = vtanh.pop %v1194
        %v1196 = vsub.f32 1.0, %v1192
        %v1197 = vmul.f32 %v1196, %v1195
        %v1198 = vmul.f32 %v1192, %v259
        %v1199 = vadd.f32 %v1197, %v1198
        %v1200 = vadd.f32 %v1071, %v818
        %v1201 = vxor.u32 %v1200, 2147483648
        %v1202 = vmul.f32 %v1201, 1.442695
        %v1203 = vpow.pop %v1202
        %v1204 = vadd.f32 %v1203, 1.0
        %v1205 = vrcp.pop %v1204
        %v1206 = vmul.f32 %v1204, %v1205
        %v1207 = vsub.f32 1.0, %v1206
        %v1208 = vmul.f32 %v1205, %v1207
        %v1209 = vadd.f32 %v1205, %v1208
        %vm1210 = vweird.f32 %v1204
        %vm1211 = vweird.f32 %v1205
        %vm1212 = vmor %vm1210, %vm1211
        %v1213 = vsel %vm1212, %v1205, %v1209
        %v1214 = vand.u32 2147483647, %v1204
        %vm1215 = vcmp.eq.f32.partialorder %v1214, 8.507059e+37
        %v1216 = vand.u32 %v1204, 2147483648
        %v1217 = vor.u32 1.1754944e-38, %v1216
        %v1218 = vsel %vm1215, %v1217, %v1213
        %v1219 = vmul.f32 1.0, %v1218
        %v1220 = vadd.f32 %v1111, %v858
        %v1221 = vxor.u32 %v1220, 2147483648
        %v1222 = vmul.f32 %v1221, 1.442695
        %v1223 = vpow.pop %v1222
        %v1224 = vadd.f32 %v1223, 1.0
        %v1225 = vrcp.pop %v1224
        %v1226 = vmul.f32 %v1224, %v1225
        %v1227 = vsub.f32 1.0, %v1226
        %v1228 = vmul.f32 %v1225, %v1227
        %v1229 = vadd.f32 %v1225, %v1228
        %vm1230 = vweird.f32 %v1224
        %vm1231 = vweird.f32 %v1225
        %vm1232 = vmor %vm1230, %vm1231
        %v1233 = vsel %vm1232, %v1225, %v1229
        %v1234 = vand.u32 2147483647, %v1224
        %vm1235 = vcmp.eq.f32.partialorder %v1234, 8.507059e+37
        %v1236 = vand.u32 %v1224, 2147483648
        %v1237 = vor.u32 1.1754944e-38, %v1236
        %v1238 = vsel %vm1235, %v1237, %v1233
        %v1239 = vmul.f32 1.0, %v1238
        %v1240 = vmul.f32 %v1219, %v898
        %v1241 = vadd.f32 %v1151, %v1240
        %v1242 = vtanh.pop %v1241
        %v1243 = vsub.f32 1.0, %v1239
        %v1244 = vmul.f32 %v1243, %v1242
        %v1245 = vmul.f32 %v1239, %v260
        %v1246 = vadd.f32 %v1244, %v1245
        %1247 = vmatpush.msra.mxu0 %v351
        %1248 = vmatpush.msra.mxu0 %v345
        %1249 = vmatpush.msra.mxu0 %v339
        %1250 = vmatpush.msra.mxu0 %v333
        %1251 = vmatpush.msra.mxu0 %v327
        %1252 = vmatpush.msra.mxu0 %v321
        %1253 = vmatpush.msra.mxu0 %v315
        %1254 = vmatpush.msra.mxu0 %v309
        %1255 = vmatpush.msra.mxu0 %v303
        %1256 = vmatpush.msra.mxu0 %v297
        %1257 = vmatpush.msra.mxu0 %v291
        %1258 = vmatpush.msra.mxu0 %v285
        %1259 = vmatpush.msra.mxu0 %v279
        %1260 = vmatpush.msra.mxu0 %v273
        %1261 = vmatpush.msra.mxu0 %v267
        %1262 = vmatpush.msra.mxu0 %v261
        %1263 = vmatmul.f32.gmra.mxu0 %v1199
        %v1264 = vpop.f32.mrf.mxu0
        %v1265 = vadd.f32 %v901, %v1264
        %1266 = vdwg.mxu0
        %1267 = vmatpush.msra.mxu0 %v447
        %1268 = vmatpush.msra.mxu0 %v441
        %1269 = vmatpush.msra.mxu0 %v435
        %1270 = vmatpush.msra.mxu0 %v429
        %1271 = vmatpush.msra.mxu0 %v423
        %1272 = vmatpush.msra.mxu0 %v417
        %1273 = vmatpush.msra.mxu0 %v411
        %1274 = vmatpush.msra.mxu0 %v405
        %1275 = vmatpush.msra.mxu0 %v399
        %1276 = vmatpush.msra.mxu0 %v393
        %1277 = vmatpush.msra.mxu0 %v387
        %1278 = vmatpush.msra.mxu0 %v381
        %1279 = vmatpush.msra.mxu0 %v375
        %1280 = vmatpush.msra.mxu0 %v369
        %1281 = vmatpush.msra.mxu0 %v363
        %1282 = vmatpush.msra.mxu0 %v357
        %1283 = vmatmul.f32.gmra.mxu0 %v1246
        %v1284 = vpop.f32.mrf.mxu0
        %v1285 = vadd.f32 %v1265, %v1284
        %1286 = vdwg.mxu0
        %1287 = vmatpush.msra.mxu0 %v352
        %1288 = vmatpush.msra.mxu0 %v346
        %1289 = vmatpush.msra.mxu0 %v340
        %1290 = vmatpush.msra.mxu0 %v334
        %1291 = vmatpush.msra.mxu0 %v328
        %1292 = vmatpush.msra.mxu0 %v322
        %1293 = vmatpush.msra.mxu0 %v316
        %1294 = vmatpush.msra.mxu0 %v310
        %1295 = vmatpush.msra.mxu0 %v304
        %1296 = vmatpush.msra.mxu0 %v298
        %1297 = vmatpush.msra.mxu0 %v292
        %1298 = vmatpush.msra.mxu0 %v286
        %1299 = vmatpush.msra.mxu0 %v280
        %1300 = vmatpush.msra.mxu0 %v274
        %1301 = vmatpush.msra.mxu0 %v268
        %1302 = vmatpush.msra.mxu0 %v262
        %1303 = vmatmul.f32.gmra.mxu0 %v1199
        %v1304 = vpop.f32.mrf.mxu0
        %v1305 = vadd.f32 %v902, %v1304
        %1306 = vdwg.mxu0
        %1307 = vmatpush.msra.mxu0 %v448
        %1308 = vmatpush.msra.mxu0 %v442
        %1309 = vmatpush.msra.mxu0 %v436
        %1310 = vmatpush.msra.mxu0 %v430
        %1311 = vmatpush.msra.mxu0 %v424
        %1312 = vmatpush.msra.mxu0 %v418
        %1313 = vmatpush.msra.mxu0 %v412
        %1314 = vmatpush.msra.mxu0 %v406
        %1315 = vmatpush.msra.mxu0 %v400
        %1316 = vmatpush.msra.mxu0 %v394
        %1317 = vmatpush.msra.mxu0 %v388
        %1318 = vmatpush.msra.mxu0 %v382
        %1319 = vmatpush.msra.mxu0 %v376
        %1320 = vmatpush.msra.mxu0 %v370
        %1321 = vmatpush.msra.mxu0 %v364
        %1322 = vmatpush.msra.mxu0 %v358
        %1323 = vmatmul.f32.gmra.mxu0 %v1246
        %v1324 = vpop.f32.mrf.mxu0
        %v1325 = vadd.f32 %v1305, %v1324
        %1326 = vdwg.mxu0
        %1327 = vmatpush.msra.mxu0 %v353
        %1328 = vmatpush.msra.mxu0 %v347
        %1329 = vmatpush.msra.mxu0 %v341
        %1330 = vmatpush.msra.mxu0 %v335
        %1331 = vmatpush.msra.mxu0 %v329
        %1332 = vmatpush.msra.mxu0 %v323
        %1333 = vmatpush.msra.mxu0 %v317
        %1334 = vmatpush.msra.mxu0 %v311
        %1335 = vmatpush.msra.mxu0 %v305
        %1336 = vmatpush.msra.mxu0 %v299
        %1337 = vmatpush.msra.mxu0 %v293
        %1338 = vmatpush.msra.mxu0 %v287
        %1339 = vmatpush.msra.mxu0 %v281
        %1340 = vmatpush.msra.mxu0 %v275
        %1341 = vmatpush.msra.mxu0 %v269
        %1342 = vmatpush.msra.mxu0 %v263
        %1343 = vmatmul.f32.gmra.mxu0 %v1199
        %v1344 = vpop.f32.mrf.mxu0
        %v1345 = vadd.f32 %v903, %v1344
        %1346 = vdwg.mxu0
        %1347 = vmatpush.msra.mxu0 %v449
        %1348 = vmatpush.msra.mxu0 %v443
        %1349 = vmatpush.msra.mxu0 %v437
        %1350 = vmatpush.msra.mxu0 %v431
        %1351 = vmatpush.msra.mxu0 %v425
        %1352 = vmatpush.msra.mxu0 %v419
        %1353 = vmatpush.msra.mxu0 %v413
        %1354 = vmatpush.msra.mxu0 %v407
        %1355 = vmatpush.msra.mxu0 %v401
        %1356 = vmatpush.msra.mxu0 %v395
        %1357 = vmatpush.msra.mxu0 %v389
        %1358 = vmatpush.msra.mxu0 %v383
        %1359 = vmatpush.msra.mxu0 %v377
        %1360 = vmatpush.msra.mxu0 %v371
        %1361 = vmatpush.msra.mxu0 %v365
        %1362 = vmatpush.msra.mxu0 %v359
        %1363 = vmatmul.f32.gmra.mxu0 %v1246
        %v1364 = vpop.f32.mrf.mxu0
        %v1365 = vadd.f32 %v1345, %v1364
        %1366 = vdwg.mxu0
        %1367 = vmatpush.msra.mxu0 %v354
        %1368 = vmatpush.msra.mxu0 %v348
        %1369 = vmatpush.msra.mxu0 %v342
        %1370 = vmatpush.msra.mxu0 %v336
        %1371 = vmatpush.msra.mxu0 %v330
        %1372 = vmatpush.msra.mxu0 %v324
        %1373 = vmatpush.msra.mxu0 %v318
        %1374 = vmatpush.msra.mxu0 %v312
        %1375 = vmatpush.msra.mxu0 %v306
        %1376 = vmatpush.msra.mxu0 %v300
        %1377 = vmatpush.msra.mxu0 %v294
        %1378 = vmatpush.msra.mxu0 %v288
        %1379 = vmatpush.msra.mxu0 %v282
        %1380 = vmatpush.msra.mxu0 %v276
        %1381 = vmatpush.msra.mxu0 %v270
        %1382 = vmatpush.msra.mxu0 %v264
        %1383 = vmatmul.f32.gmra.mxu0 %v1199
        %v1384 = vpop.f32.mrf.mxu0
        %v1385 = vadd.f32 %v904, %v1384
        %1386 = vdwg.mxu0
        %1387 = vmatpush.msra.mxu0 %v450
        %1388 = vmatpush.msra.mxu0 %v444
        %1389 = vmatpush.msra.mxu0 %v438
        %1390 = vmatpush.msra.mxu0 %v432
        %1391 = vmatpush.msra.mxu0 %v426
        %1392 = vmatpush.msra.mxu0 %v420
        %1393 = vmatpush.msra.mxu0 %v414
        %1394 = vmatpush.msra.mxu0 %v408
        %1395 = vmatpush.msra.mxu0 %v402
        %1396 = vmatpush.msra.mxu0 %v396
        %1397 = vmatpush.msra.mxu0 %v390
        %1398 = vmatpush.msra.mxu0 %v384
        %1399 = vmatpush.msra.mxu0 %v378
        %1400 = vmatpush.msra.mxu0 %v372
        %1401 = vmatpush.msra.mxu0 %v366
        %1402 = vmatpush.msra.mxu0 %v360
        %1403 = vmatmul.f32.gmra.mxu0 %v1246
        %v1404 = vpop.f32.mrf.mxu0
        %v1405 = vadd.f32 %v1385, %v1404
        %1406 = vdwg.mxu0
        %1407 = vmatpush.msra.mxu0 %v355
        %1408 = vmatpush.msra.mxu0 %v349
        %1409 = vmatpush.msra.mxu0 %v343
        %1410 = vmatpush.msra.mxu0 %v337
        %1411 = vmatpush.msra.mxu0 %v331
        %1412 = vmatpush.msra.mxu0 %v325
        %1413 = vmatpush.msra.mxu0 %v319
        %1414 = vmatpush.msra.mxu0 %v313
        %1415 = vmatpush.msra.mxu0 %v307
        %1416 = vmatpush.msra.mxu0 %v301
        %1417 = vmatpush.msra.mxu0 %v295
        %1418 = vmatpush.msra.mxu0 %v289
        %1419 = vmatpush.msra.mxu0 %v283
        %1420 = vmatpush.msra.mxu0 %v277
        %1421 = vmatpush.msra.mxu0 %v271
        %1422 = vmatpush.msra.mxu0 %v265
        %1423 = vmatmul.f32.gmra.mxu0 %v1199
        %v1424 = vpop.f32.mrf.mxu0
        %v1425 = vadd.f32 %v905, %v1424
        %1426 = vdwg.mxu0
        %1427 = vmatpush.msra.mxu0 %v451
        %1428 = vmatpush.msra.mxu0 %v445
        %1429 = vmatpush.msra.mxu0 %v439
        %1430 = vmatpush.msra.mxu0 %v433
        %1431 = vmatpush.msra.mxu0 %v427
        %1432 = vmatpush.msra.mxu0 %v421
        %1433 = vmatpush.msra.mxu0 %v415
        %1434 = vmatpush.msra.mxu0 %v409
        %1435 = vmatpush.msra.mxu0 %v403
        %1436 = vmatpush.msra.mxu0 %v397
        %1437 = vmatpush.msra.mxu0 %v391
        %1438 = vmatpush.msra.mxu0 %v385
        %1439 = vmatpush.msra.mxu0 %v379
        %1440 = vmatpush.msra.mxu0 %v373
        %1441 = vmatpush.msra.mxu0 %v367
        %1442 = vmatpush.msra.mxu0 %v361
        %1443 = vmatmul.f32.gmra.mxu0 %v1246
        %v1444 = vpop.f32.mrf.mxu0
        %v1445 = vadd.f32 %v1425, %v1444
        %1446 = vdwg.mxu0
        %1447 = vmatpush.msra.mxu0 %v356
        %1448 = vmatpush.msra.mxu0 %v350
        %1449 = vmatpush.msra.mxu0 %v344
        %1450 = vmatpush.msra.mxu0 %v338
        %1451 = vmatpush.msra.mxu0 %v332
        %1452 = vmatpush.msra.mxu0 %v326
        %1453 = vmatpush.msra.mxu0 %v320
        %1454 = vmatpush.msra.mxu0 %v314
        %1455 = vmatpush.msra.mxu0 %v308
        %1456 = vmatpush.msra.mxu0 %v302
        %1457 = vmatpush.msra.mxu0 %v296
        %1458 = vmatpush.msra.mxu0 %v290
        %1459 = vmatpush.msra.mxu0 %v284
        %1460 = vmatpush.msra.mxu0 %v278
        %1461 = vmatpush.msra.mxu0 %v272
        %1462 = vmatpush.msra.mxu0 %v266
        %1463 = vmatmul.f32.gmra.mxu0 %v1199
        %v1464 = vpop.f32.mrf.mxu0
        %v1465 = vadd.f32 %v906, %v1464
        %1466 = vdwg.mxu0
        %1467 = vmatpush.msra.mxu0 %v452
        %1468 = vmatpush.msra.mxu0 %v446
        %1469 = vmatpush.msra.mxu0 %v440
        %1470 = vmatpush.msra.mxu0 %v434
        %1471 = vmatpush.msra.mxu0 %v428
        %1472 = vmatpush.msra.mxu0 %v422
        %1473 = vmatpush.msra.mxu0 %v416
        %1474 = vmatpush.msra.mxu0 %v410
        %1475 = vmatpush.msra.mxu0 %v404
        %1476 = vmatpush.msra.mxu0 %v398
        %1477 = vmatpush.msra.mxu0 %v392
        %1478 = vmatpush.msra.mxu0 %v386
        %1479 = vmatpush.msra.mxu0 %v380
        %1480 = vmatpush.msra.mxu0 %v374
        %1481 = vmatpush.msra.mxu0 %v368
        %1482 = vmatpush.msra.mxu0 %v362
        %1483 = vmatmul.f32.gmra.mxu0 %v1246
        %v1484 = vpop.f32.mrf.mxu0
        %v1485 = vadd.f32 %v1465, %v1484
        %1486 = vdwg.mxu0
        %v1488 = vrot.slane %v698, 1
        %v1490 = vadd.f32 %v1285, %v1488
        %v1491 = vxor.u32 %v1490, 2147483648
        %v1492 = vmul.f32 %v1491, 1.442695
        %v1493 = vpow.pop %v1492
        %v1494 = vadd.f32 %v1493, 1.0
        %v1495 = vrcp.pop %v1494
        %v1496 = vmul.f32 %v1494, %v1495
        %v1497 = vsub.f32 1.0, %v1496
        %v1498 = vmul.f32 %v1495, %v1497
        %v1499 = vadd.f32 %v1495, %v1498
        %vm1500 = vweird.f32 %v1494
        %vm1501 = vweird.f32 %v1495
        %vm1502 = vmor %vm1500, %vm1501
        %v1503 = vsel %vm1502, %v1495, %v1499
        %v1504 = vand.u32 2147483647, %v1494
        %vm1505 = vcmp.eq.f32.partialorder %v1504, 8.507059e+37
        %v1506 = vand.u32 %v1494, 2147483648
        %v1507 = vor.u32 1.1754944e-38, %v1506
        %v1508 = vsel %vm1505, %v1507, %v1503
        %v1509 = vmul.f32 1.0, %v1508
        %v1511 = vrot.slane %v738, 1
        %v1513 = vadd.f32 %v1325, %v1511
        %v1514 = vxor.u32 %v1513, 2147483648
        %v1515 = vmul.f32 %v1514, 1.442695
        %v1516 = vpow.pop %v1515
        %v1517 = vadd.f32 %v1516, 1.0
        %v1518 = vrcp.pop %v1517
        %v1519 = vmul.f32 %v1517, %v1518
        %v1520 = vsub.f32 1.0, %v1519
        %v1521 = vmul.f32 %v1518, %v1520
        %v1522 = vadd.f32 %v1518, %v1521
        %vm1523 = vweird.f32 %v1517
        %vm1524 = vweird.f32 %v1518
        %vm1525 = vmor %vm1523, %vm1524
        %v1526 = vsel %vm1525, %v1518, %v1522
        %v1527 = vand.u32 2147483647, %v1517
        %vm1528 = vcmp.eq.f32.partialorder %v1527, 8.507059e+37
        %v1529 = vand.u32 %v1517, 2147483648
        %v1530 = vor.u32 1.1754944e-38, %v1529
        %v1531 = vsel %vm1528, %v1530, %v1526
        %v1532 = vmul.f32 1.0, %v1531
        %v1534 = vrot.slane %v778, 1
        %v1536 = vmul.f32 %v1509, %v1534
        %v1537 = vadd.f32 %v1365, %v1536
        %v1538 = vtanh.pop %v1537
        %v1539 = vsub.f32 1.0, %v1532
        %v1540 = vmul.f32 %v1539, %v1538
        %v1542 = vrot.slane %v259, 1
        %v1544 = vmul.f32 %v1532, %v1542
        %v1545 = vadd.f32 %v1540, %v1544
        %v1547 = vrot.slane %v818, 1
        %v1549 = vadd.f32 %v1405, %v1547
        %v1550 = vxor.u32 %v1549, 2147483648
        %v1551 = vmul.f32 %v1550, 1.442695
        %v1552 = vpow.pop %v1551
        %v1553 = vadd.f32 %v1552, 1.0
        %v1554 = vrcp.pop %v1553
        %v1555 = vmul.f32 %v1553, %v1554
        %v1556 = vsub.f32 1.0, %v1555
        %v1557 = vmul.f32 %v1554, %v1556
        %v1558 = vadd.f32 %v1554, %v1557
        %vm1559 = vweird.f32 %v1553
        %vm1560 = vweird.f32 %v1554
        %vm1561 = vmor %vm1559, %vm1560
        %v1562 = vsel %vm1561, %v1554, %v1558
        %v1563 = vand.u32 2147483647, %v1553
        %vm1564 = vcmp.eq.f32.partialorder %v1563, 8.507059e+37
        %v1565 = vand.u32 %v1553, 2147483648
        %v1566 = vor.u32 1.1754944e-38, %v1565
        %v1567 = vsel %vm1564, %v1566, %v1562
        %v1568 = vmul.f32 1.0, %v1567
        %v1570 = vrot.slane %v858, 1
        %v1572 = vadd.f32 %v1445, %v1570
        %v1573 = vxor.u32 %v1572, 2147483648
        %v1574 = vmul.f32 %v1573, 1.442695
        %v1575 = vpow.pop %v1574
        %v1576 = vadd.f32 %v1575, 1.0
        %v1577 = vrcp.pop %v1576
        %v1578 = vmul.f32 %v1576, %v1577
        %v1579 = vsub.f32 1.0, %v1578
        %v1580 = vmul.f32 %v1577, %v1579
        %v1581 = vadd.f32 %v1577, %v1580
        %vm1582 = vweird.f32 %v1576
        %vm1583 = vweird.f32 %v1577
        %vm1584 = vmor %vm1582, %vm1583
        %v1585 = vsel %vm1584, %v1577, %v1581
        %v1586 = vand.u32 2147483647, %v1576
        %vm1587 = vcmp.eq.f32.partialorder %v1586, 8.507059e+37
        %v1588 = vand.u32 %v1576, 2147483648
        %v1589 = vor.u32 1.1754944e-38, %v1588
        %v1590 = vsel %vm1587, %v1589, %v1585
        %v1591 = vmul.f32 1.0, %v1590
        %v1593 = vrot.slane %v898, 1
        %v1595 = vmul.f32 %v1568, %v1593
        %v1596 = vadd.f32 %v1485, %v1595
        %v1597 = vtanh.pop %v1596
        %v1598 = vsub.f32 1.0, %v1591
        %v1599 = vmul.f32 %v1598, %v1597
        %v1601 = vrot.slane %v260, 1
        %v1603 = vmul.f32 %v1591, %v1601
        %v1604 = vadd.f32 %v1599, %v1603
        %1605 = vmatpush.msra.mxu0 %v351
        %1606 = vmatpush.msra.mxu0 %v345
        %1607 = vmatpush.msra.mxu0 %v339
        %1608 = vmatpush.msra.mxu0 %v333
        %1609 = vmatpush.msra.mxu0 %v327
        %1610 = vmatpush.msra.mxu0 %v321
        %1611 = vmatpush.msra.mxu0 %v315
        %1612 = vmatpush.msra.mxu0 %v309
        %1613 = vmatpush.msra.mxu0 %v303
        %1614 = vmatpush.msra.mxu0 %v297
        %1615 = vmatpush.msra.mxu0 %v291
        %1616 = vmatpush.msra.mxu0 %v285
        %1617 = vmatpush.msra.mxu0 %v279
        %1618 = vmatpush.msra.mxu0 %v273
        %1619 = vmatpush.msra.mxu0 %v267
        %1620 = vmatpush.msra.mxu0 %v261
        %1621 = vmatmul.f32.gmra.mxu0 %v1545
        %v1622 = vpop.f32.mrf.mxu0
        %v1623 = vadd.f32 %v901, %v1622
        %1624 = vdwg.mxu0
        %1625 = vmatpush.msra.mxu0 %v447
        %1626 = vmatpush.msra.mxu0 %v441
        %1627 = vmatpush.msra.mxu0 %v435
        %1628 = vmatpush.msra.mxu0 %v429
        %1629 = vmatpush.msra.mxu0 %v423
        %1630 = vmatpush.msra.mxu0 %v417
        %1631 = vmatpush.msra.mxu0 %v411
        %1632 = vmatpush.msra.mxu0 %v405
        %1633 = vmatpush.msra.mxu0 %v399
        %1634 = vmatpush.msra.mxu0 %v393
        %1635 = vmatpush.msra.mxu0 %v387
        %1636 = vmatpush.msra.mxu0 %v381
        %1637 = vmatpush.msra.mxu0 %v375
        %1638 = vmatpush.msra.mxu0 %v369
        %1639 = vmatpush.msra.mxu0 %v363
        %1640 = vmatpush.msra.mxu0 %v357
        %1641 = vmatmul.f32.gmra.mxu0 %v1604
        %v1642 = vpop.f32.mrf.mxu0
        %v1643 = vadd.f32 %v1623, %v1642
        %1644 = vdwg.mxu0
        %1645 = vmatpush.msra.mxu0 %v352
        %1646 = vmatpush.msra.mxu0 %v346
        %1647 = vmatpush.msra.mxu0 %v340
        %1648 = vmatpush.msra.mxu0 %v334
        %1649 = vmatpush.msra.mxu0 %v328
        %1650 = vmatpush.msra.mxu0 %v322
        %1651 = vmatpush.msra.mxu0 %v316
        %1652 = vmatpush.msra.mxu0 %v310
        %1653 = vmatpush.msra.mxu0 %v304
        %1654 = vmatpush.msra.mxu0 %v298
        %1655 = vmatpush.msra.mxu0 %v292
        %1656 = vmatpush.msra.mxu0 %v286
        %1657 = vmatpush.msra.mxu0 %v280
        %1658 = vmatpush.msra.mxu0 %v274
        %1659 = vmatpush.msra.mxu0 %v268
        %1660 = vmatpush.msra.mxu0 %v262
        %1661 = vmatmul.f32.gmra.mxu0 %v1545
        %v1662 = vpop.f32.mrf.mxu0
        %v1663 = vadd.f32 %v902, %v1662
        %1664 = vdwg.mxu0
        %1665 = vmatpush.msra.mxu0 %v448
        %1666 = vmatpush.msra.mxu0 %v442
        %1667 = vmatpush.msra.mxu0 %v436
        %1668 = vmatpush.msra.mxu0 %v430
        %1669 = vmatpush.msra.mxu0 %v424
        %1670 = vmatpush.msra.mxu0 %v418
        %1671 = vmatpush.msra.mxu0 %v412
        %1672 = vmatpush.msra.mxu0 %v406
        %1673 = vmatpush.msra.mxu0 %v400
        %1674 = vmatpush.msra.mxu0 %v394
        %1675 = vmatpush.msra.mxu0 %v388
        %1676 = vmatpush.msra.mxu0 %v382
        %1677 = vmatpush.msra.mxu0 %v376
        %1678 = vmatpush.msra.mxu0 %v370
        %1679 = vmatpush.msra.mxu0 %v364
        %1680 = vmatpush.msra.mxu0 %v358
        %1681 = vmatmul.f32.gmra.mxu0 %v1604
        %v1682 = vpop.f32.mrf.mxu0
        %v1683 = vadd.f32 %v1663, %v1682
        %1684 = vdwg.mxu0
        %1685 = vmatpush.msra.mxu0 %v353
        %1686 = vmatpush.msra.mxu0 %v347
        %1687 = vmatpush.msra.mxu0 %v341
        %1688 = vmatpush.msra.mxu0 %v335
        %1689 = vmatpush.msra.mxu0 %v329
        %1690 = vmatpush.msra.mxu0 %v323
        %1691 = vmatpush.msra.mxu0 %v317
        %1692 = vmatpush.msra.mxu0 %v311
        %1693 = vmatpush.msra.mxu0 %v305
        %1694 = vmatpush.msra.mxu0 %v299
        %1695 = vmatpush.msra.mxu0 %v293
        %1696 = vmatpush.msra.mxu0 %v287
        %1697 = vmatpush.msra.mxu0 %v281
        %1698 = vmatpush.msra.mxu0 %v275
        %1699 = vmatpush.msra.mxu0 %v269
        %1700 = vmatpush.msra.mxu0 %v263
        %1701 = vmatmul.f32.gmra.mxu0 %v1545
        %v1702 = vpop.f32.mrf.mxu0
        %v1703 = vadd.f32 %v903, %v1702
        %1704 = vdwg.mxu0
        %1705 = vmatpush.msra.mxu0 %v449
        %1706 = vmatpush.msra.mxu0 %v443
        %1707 = vmatpush.msra.mxu0 %v437
        %1708 = vmatpush.msra.mxu0 %v431
        %1709 = vmatpush.msra.mxu0 %v425
        %1710 = vmatpush.msra.mxu0 %v419
        %1711 = vmatpush.msra.mxu0 %v413
        %1712 = vmatpush.msra.mxu0 %v407
        %1713 = vmatpush.msra.mxu0 %v401
        %1714 = vmatpush.msra.mxu0 %v395
        %1715 = vmatpush.msra.mxu0 %v389
        %1716 = vmatpush.msra.mxu0 %v383
        %1717 = vmatpush.msra.mxu0 %v377
        %1718 = vmatpush.msra.mxu0 %v371
        %1719 = vmatpush.msra.mxu0 %v365
        %1720 = vmatpush.msra.mxu0 %v359
        %1721 = vmatmul.f32.gmra.mxu0 %v1604
        %v1722 = vpop.f32.mrf.mxu0
        %v1723 = vadd.f32 %v1703, %v1722
        %1724 = vdwg.mxu0
        %1725 = vmatpush.msra.mxu0 %v354
        %1726 = vmatpush.msra.mxu0 %v348
        %1727 = vmatpush.msra.mxu0 %v342
        %1728 = vmatpush.msra.mxu0 %v336
        %1729 = vmatpush.msra.mxu0 %v330
        %1730 = vmatpush.msra.mxu0 %v324
        %1731 = vmatpush.msra.mxu0 %v318
        %1732 = vmatpush.msra.mxu0 %v312
        %1733 = vmatpush.msra.mxu0 %v306
        %1734 = vmatpush.msra.mxu0 %v300
        %1735 = vmatpush.msra.mxu0 %v294
        %1736 = vmatpush.msra.mxu0 %v288
        %1737 = vmatpush.msra.mxu0 %v282
        %1738 = vmatpush.msra.mxu0 %v276
        %1739 = vmatpush.msra.mxu0 %v270
        %1740 = vmatpush.msra.mxu0 %v264
        %1741 = vmatmul.f32.gmra.mxu0 %v1545
        %v1742 = vpop.f32.mrf.mxu0
        %v1743 = vadd.f32 %v904, %v1742
        %1744 = vdwg.mxu0
        %1745 = vmatpush.msra.mxu0 %v450
        %1746 = vmatpush.msra.mxu0 %v444
        %1747 = vmatpush.msra.mxu0 %v438
        %1748 = vmatpush.msra.mxu0 %v432
        %1749 = vmatpush.msra.mxu0 %v426
        %1750 = vmatpush.msra.mxu0 %v420
        %1751 = vmatpush.msra.mxu0 %v414
        %1752 = vmatpush.msra.mxu0 %v408
        %1753 = vmatpush.msra.mxu0 %v402
        %1754 = vmatpush.msra.mxu0 %v396
        %1755 = vmatpush.msra.mxu0 %v390
        %1756 = vmatpush.msra.mxu0 %v384
        %1757 = vmatpush.msra.mxu0 %v378
        %1758 = vmatpush.msra.mxu0 %v372
        %1759 = vmatpush.msra.mxu0 %v366
        %1760 = vmatpush.msra.mxu0 %v360
        %1761 = vmatmul.f32.gmra.mxu0 %v1604
        %v1762 = vpop.f32.mrf.mxu0
        %v1763 = vadd.f32 %v1743, %v1762
        %1764 = vdwg.mxu0
        %1765 = vmatpush.msra.mxu0 %v355
        %1766 = vmatpush.msra.mxu0 %v349
        %1767 = vmatpush.msra.mxu0 %v343
        %1768 = vmatpush.msra.mxu0 %v337
        %1769 = vmatpush.msra.mxu0 %v331
        %1770 = vmatpush.msra.mxu0 %v325
        %1771 = vmatpush.msra.mxu0 %v319
        %1772 = vmatpush.msra.mxu0 %v313
        %1773 = vmatpush.msra.mxu0 %v307
        %1774 = vmatpush.msra.mxu0 %v301
        %1775 = vmatpush.msra.mxu0 %v295
        %1776 = vmatpush.msra.mxu0 %v289
        %1777 = vmatpush.msra.mxu0 %v283
        %1778 = vmatpush.msra.mxu0 %v277
        %1779 = vmatpush.msra.mxu0 %v271
        %1780 = vmatpush.msra.mxu0 %v265
        %1781 = vmatmul.f32.gmra.mxu0 %v1545
        %v1782 = vpop.f32.mrf.mxu0
        %v1783 = vadd.f32 %v905, %v1782
        %1784 = vdwg.mxu0
        %1785 = vmatpush.msra.mxu0 %v451
        %1786 = vmatpush.msra.mxu0 %v445
        %1787 = vmatpush.msra.mxu0 %v439
        %1788 = vmatpush.msra.mxu0 %v433
        %1789 = vmatpush.msra.mxu0 %v427
        %1790 = vmatpush.msra.mxu0 %v421
        %1791 = vmatpush.msra.mxu0 %v415
        %1792 = vmatpush.msra.mxu0 %v409
        %1793 = vmatpush.msra.mxu0 %v403
        %1794 = vmatpush.msra.mxu0 %v397
        %1795 = vmatpush.msra.mxu0 %v391
        %1796 = vmatpush.msra.mxu0 %v385
        %1797 = vmatpush.msra.mxu0 %v379
        %1798 = vmatpush.msra.mxu0 %v373
        %1799 = vmatpush.msra.mxu0 %v367
        %1800 = vmatpush.msra.mxu0 %v361
        %1801 = vmatmul.f32.gmra.mxu0 %v1604
        %v1802 = vpop.f32.mrf.mxu0
        %v1803 = vadd.f32 %v1783, %v1802
        %1804 = vdwg.mxu0
        %1805 = vmatpush.msra.mxu0 %v356
        %1806 = vmatpush.msra.mxu0 %v350
        %1807 = vmatpush.msra.mxu0 %v344
        %1808 = vmatpush.msra.mxu0 %v338
        %1809 = vmatpush.msra.mxu0 %v332
        %1810 = vmatpush.msra.mxu0 %v326
        %1811 = vmatpush.msra.mxu0 %v320
        %1812 = vmatpush.msra.mxu0 %v314
        %1813 = vmatpush.msra.mxu0 %v308
        %1814 = vmatpush.msra.mxu0 %v302
        %1815 = vmatpush.msra.mxu0 %v296
        %1816 = vmatpush.msra.mxu0 %v290
        %1817 = vmatpush.msra.mxu0 %v284
        %1818 = vmatpush.msra.mxu0 %v278
        %1819 = vmatpush.msra.mxu0 %v272
        %1820 = vmatpush.msra.mxu0 %v266
        %1821 = vmatmul.f32.gmra.mxu0 %v1545
        %v1822 = vpop.f32.mrf.mxu0
        %v1823 = vadd.f32 %v906, %v1822
        %1824 = vdwg.mxu0
        %1825 = vmatpush.msra.mxu0 %v452
        %1826 = vmatpush.msra.mxu0 %v446
        %1827 = vmatpush.msra.mxu0 %v440
        %1828 = vmatpush.msra.mxu0 %v434
        %1829 = vmatpush.msra.mxu0 %v428
        %1830 = vmatpush.msra.mxu0 %v422
        %1831 = vmatpush.msra.mxu0 %v416
        %1832 = vmatpush.msra.mxu0 %v410
        %1833 = vmatpush.msra.mxu0 %v404
        %1834 = vmatpush.msra.mxu0 %v398
        %1835 = vmatpush.msra.mxu0 %v392
        %1836 = vmatpush.msra.mxu0 %v386
        %1837 = vmatpush.msra.mxu0 %v380
        %1838 = vmatpush.msra.mxu0 %v374
        %1839 = vmatpush.msra.mxu0 %v368
        %1840 = vmatpush.msra.mxu0 %v362
        %1841 = vmatmul.f32.gmra.mxu0 %v1604
        %v1842 = vpop.f32.mrf.mxu0
        %v1843 = vadd.f32 %v1823, %v1842
        %1844 = vdwg.mxu0
        %v1845 = vrot.slane %v698, 2
        %v1847 = vadd.f32 %v1643, %v1845
        %v1848 = vxor.u32 %v1847, 2147483648
        %v1849 = vmul.f32 %v1848, 1.442695
        %v1850 = vpow.pop %v1849
        %v1851 = vadd.f32 %v1850, 1.0
        %v1852 = vrcp.pop %v1851
        %v1853 = vmul.f32 %v1851, %v1852
        %v1854 = vsub.f32 1.0, %v1853
        %v1855 = vmul.f32 %v1852, %v1854
        %v1856 = vadd.f32 %v1852, %v1855
        %vm1857 = vweird.f32 %v1851
        %vm1858 = vweird.f32 %v1852
        %vm1859 = vmor %vm1857, %vm1858
        %v1860 = vsel %vm1859, %v1852, %v1856
        %v1861 = vand.u32 2147483647, %v1851
        %vm1862 = vcmp.eq.f32.partialorder %v1861, 8.507059e+37
        %v1863 = vand.u32 %v1851, 2147483648
        %v1864 = vor.u32 1.1754944e-38, %v1863
        %v1865 = vsel %vm1862, %v1864, %v1860
        %v1866 = vmul.f32 1.0, %v1865
        %v1867 = vrot.slane %v738, 2
        %v1869 = vadd.f32 %v1683, %v1867
        %v1870 = vxor.u32 %v1869, 2147483648
        %v1871 = vmul.f32 %v1870, 1.442695
        %v1872 = vpow.pop %v1871
        %v1873 = vadd.f32 %v1872, 1.0
        %v1874 = vrcp.pop %v1873
        %v1875 = vmul.f32 %v1873, %v1874
        %v1876 = vsub.f32 1.0, %v1875
        %v1877 = vmul.f32 %v1874, %v1876
        %v1878 = vadd.f32 %v1874, %v1877
        %vm1879 = vweird.f32 %v1873
        %vm1880 = vweird.f32 %v1874
        %vm1881 = vmor %vm1879, %vm1880
        %v1882 = vsel %vm1881, %v1874, %v1878
        %v1883 = vand.u32 2147483647, %v1873
        %vm1884 = vcmp.eq.f32.partialorder %v1883, 8.507059e+37
        %v1885 = vand.u32 %v1873, 2147483648
        %v1886 = vor.u32 1.1754944e-38, %v1885
        %v1887 = vsel %vm1884, %v1886, %v1882
        %v1888 = vmul.f32 1.0, %v1887
        %v1889 = vrot.slane %v778, 2
        %v1891 = vmul.f32 %v1866, %v1889
        %v1892 = vadd.f32 %v1723, %v1891
        %v1893 = vtanh.pop %v1892
        %v1894 = vsub.f32 1.0, %v1888
        %v1895 = vmul.f32 %v1894, %v1893
        %v1896 = vrot.slane %v259, 2
        %v1898 = vmul.f32 %v1888, %v1896
        %v1899 = vadd.f32 %v1895, %v1898
        %v1900 = vrot.slane %v818, 2
        %v1902 = vadd.f32 %v1763, %v1900
        %v1903 = vxor.u32 %v1902, 2147483648
        %v1904 = vmul.f32 %v1903, 1.442695
        %v1905 = vpow.pop %v1904
        %v1906 = vadd.f32 %v1905, 1.0
        %v1907 = vrcp.pop %v1906
        %v1908 = vmul.f32 %v1906, %v1907
        %v1909 = vsub.f32 1.0, %v1908
        %v1910 = vmul.f32 %v1907, %v1909
        %v1911 = vadd.f32 %v1907, %v1910
        %vm1912 = vweird.f32 %v1906
        %vm1913 = vweird.f32 %v1907
        %vm1914 = vmor %vm1912, %vm1913
        %v1915 = vsel %vm1914, %v1907, %v1911
        %v1916 = vand.u32 2147483647, %v1906
        %vm1917 = vcmp.eq.f32.partialorder %v1916, 8.507059e+37
        %v1918 = vand.u32 %v1906, 2147483648
        %v1919 = vor.u32 1.1754944e-38, %v1918
        %v1920 = vsel %vm1917, %v1919, %v1915
        %v1921 = vmul.f32 1.0, %v1920
        %v1922 = vrot.slane %v858, 2
        %v1924 = vadd.f32 %v1803, %v1922
        %v1925 = vxor.u32 %v1924, 2147483648
        %v1926 = vmul.f32 %v1925, 1.442695
        %v1927 = vpow.pop %v1926
        %v1928 = vadd.f32 %v1927, 1.0
        %v1929 = vrcp.pop %v1928
        %v1930 = vmul.f32 %v1928, %v1929
        %v1931 = vsub.f32 1.0, %v1930
        %v1932 = vmul.f32 %v1929, %v1931
        %v1933 = vadd.f32 %v1929, %v1932
        %vm1934 = vweird.f32 %v1928
        %vm1935 = vweird.f32 %v1929
        %vm1936 = vmor %vm1934, %vm1935
        %v1937 = vsel %vm1936, %v1929, %v1933
        %v1938 = vand.u32 2147483647, %v1928
        %vm1939 = vcmp.eq.f32.partialorder %v1938, 8.507059e+37
        %v1940 = vand.u32 %v1928, 2147483648
        %v1941 = vor.u32 1.1754944e-38, %v1940
        %v1942 = vsel %vm1939, %v1941, %v1937
        %v1943 = vmul.f32 1.0, %v1942
        %v1944 = vrot.slane %v898, 2
        %v1946 = vmul.f32 %v1921, %v1944
        %v1947 = vadd.f32 %v1843, %v1946
        %v1948 = vtanh.pop %v1947
        %v1949 = vsub.f32 1.0, %v1943
        %v1950 = vmul.f32 %v1949, %v1948
        %v1951 = vrot.slane %v260, 2
        %v1953 = vmul.f32 %v1943, %v1951
        %v1954 = vadd.f32 %v1950, %v1953
        %1955 = vmatpush.msra.mxu0 %v351
        %1956 = vmatpush.msra.mxu0 %v345
        %1957 = vmatpush.msra.mxu0 %v339
        %1958 = vmatpush.msra.mxu0 %v333
        %1959 = vmatpush.msra.mxu0 %v327
        %1960 = vmatpush.msra.mxu0 %v321
        %1961 = vmatpush.msra.mxu0 %v315
        %1962 = vmatpush.msra.mxu0 %v309
        %1963 = vmatpush.msra.mxu0 %v303
        %1964 = vmatpush.msra.mxu0 %v297
        %1965 = vmatpush.msra.mxu0 %v291
        %1966 = vmatpush.msra.mxu0 %v285
        %1967 = vmatpush.msra.mxu0 %v279
        %1968 = vmatpush.msra.mxu0 %v273
        %1969 = vmatpush.msra.mxu0 %v267
        %1970 = vmatpush.msra.mxu0 %v261
        %1971 = vmatmul.f32.gmra.mxu0 %v1899
        %v1972 = vpop.f32.mrf.mxu0
        %v1973 = vadd.f32 %v901, %v1972
        %1974 = vdwg.mxu0
        %1975 = vmatpush.msra.mxu0 %v447
        %1976 = vmatpush.msra.mxu0 %v441
        %1977 = vmatpush.msra.mxu0 %v435
        %1978 = vmatpush.msra.mxu0 %v429
        %1979 = vmatpush.msra.mxu0 %v423
        %1980 = vmatpush.msra.mxu0 %v417
        %1981 = vmatpush.msra.mxu0 %v411
        %1982 = vmatpush.msra.mxu0 %v405
        %1983 = vmatpush.msra.mxu0 %v399
        %1984 = vmatpush.msra.mxu0 %v393
        %1985 = vmatpush.msra.mxu0 %v387
        %1986 = vmatpush.msra.mxu0 %v381
        %1987 = vmatpush.msra.mxu0 %v375
        %1988 = vmatpush.msra.mxu0 %v369
        %1989 = vmatpush.msra.mxu0 %v363
        %1990 = vmatpush.msra.mxu0 %v357
        %1991 = vmatmul.f32.gmra.mxu0 %v1954
        %v1992 = vpop.f32.mrf.mxu0
        %v1993 = vadd.f32 %v1973, %v1992
        %1994 = vdwg.mxu0
        %1995 = vmatpush.msra.mxu0 %v352
        %1996 = vmatpush.msra.mxu0 %v346
        %1997 = vmatpush.msra.mxu0 %v340
        %1998 = vmatpush.msra.mxu0 %v334
        %1999 = vmatpush.msra.mxu0 %v328
        %2000 = vmatpush.msra.mxu0 %v322
        %2001 = vmatpush.msra.mxu0 %v316
        %2002 = vmatpush.msra.mxu0 %v310
        %2003 = vmatpush.msra.mxu0 %v304
        %2004 = vmatpush.msra.mxu0 %v298
        %2005 = vmatpush.msra.mxu0 %v292
        %2006 = vmatpush.msra.mxu0 %v286
        %2007 = vmatpush.msra.mxu0 %v280
        %2008 = vmatpush.msra.mxu0 %v274
        %2009 = vmatpush.msra.mxu0 %v268
        %2010 = vmatpush.msra.mxu0 %v262
        %2011 = vmatmul.f32.gmra.mxu0 %v1899
        %v2012 = vpop.f32.mrf.mxu0
        %v2013 = vadd.f32 %v902, %v2012
        %2014 = vdwg.mxu0
        %2015 = vmatpush.msra.mxu0 %v448
        %2016 = vmatpush.msra.mxu0 %v442
        %2017 = vmatpush.msra.mxu0 %v436
        %2018 = vmatpush.msra.mxu0 %v430
        %2019 = vmatpush.msra.mxu0 %v424
        %2020 = vmatpush.msra.mxu0 %v418
        %2021 = vmatpush.msra.mxu0 %v412
        %2022 = vmatpush.msra.mxu0 %v406
        %2023 = vmatpush.msra.mxu0 %v400
        %2024 = vmatpush.msra.mxu0 %v394
        %2025 = vmatpush.msra.mxu0 %v388
        %2026 = vmatpush.msra.mxu0 %v382
        %2027 = vmatpush.msra.mxu0 %v376
        %2028 = vmatpush.msra.mxu0 %v370
        %2029 = vmatpush.msra.mxu0 %v364
        %2030 = vmatpush.msra.mxu0 %v358
        %2031 = vmatmul.f32.gmra.mxu0 %v1954
        %v2032 = vpop.f32.mrf.mxu0
        %v2033 = vadd.f32 %v2013, %v2032
        %2034 = vdwg.mxu0
        %2035 = vmatpush.msra.mxu0 %v353
        %2036 = vmatpush.msra.mxu0 %v347
        %2037 = vmatpush.msra.mxu0 %v341
        %2038 = vmatpush.msra.mxu0 %v335
        %2039 = vmatpush.msra.mxu0 %v329
        %2040 = vmatpush.msra.mxu0 %v323
        %2041 = vmatpush.msra.mxu0 %v317
        %2042 = vmatpush.msra.mxu0 %v311
        %2043 = vmatpush.msra.mxu0 %v305
        %2044 = vmatpush.msra.mxu0 %v299
        %2045 = vmatpush.msra.mxu0 %v293
        %2046 = vmatpush.msra.mxu0 %v287
        %2047 = vmatpush.msra.mxu0 %v281
        %2048 = vmatpush.msra.mxu0 %v275
        %2049 = vmatpush.msra.mxu0 %v269
        %2050 = vmatpush.msra.mxu0 %v263
        %2051 = vmatmul.f32.gmra.mxu0 %v1899
        %v2052 = vpop.f32.mrf.mxu0
        %v2053 = vadd.f32 %v903, %v2052
        %2054 = vdwg.mxu0
        %2055 = vmatpush.msra.mxu0 %v449
        %2056 = vmatpush.msra.mxu0 %v443
        %2057 = vmatpush.msra.mxu0 %v437
        %2058 = vmatpush.msra.mxu0 %v431
        %2059 = vmatpush.msra.mxu0 %v425
        %2060 = vmatpush.msra.mxu0 %v419
        %2061 = vmatpush.msra.mxu0 %v413
        %2062 = vmatpush.msra.mxu0 %v407
        %2063 = vmatpush.msra.mxu0 %v401
        %2064 = vmatpush.msra.mxu0 %v395
        %2065 = vmatpush.msra.mxu0 %v389
        %2066 = vmatpush.msra.mxu0 %v383
        %2067 = vmatpush.msra.mxu0 %v377
        %2068 = vmatpush.msra.mxu0 %v371
        %2069 = vmatpush.msra.mxu0 %v365
        %2070 = vmatpush.msra.mxu0 %v359
        %2071 = vmatmul.f32.gmra.mxu0 %v1954
        %v2072 = vpop.f32.mrf.mxu0
        %v2073 = vadd.f32 %v2053, %v2072
        %2074 = vdwg.mxu0
        %2075 = vmatpush.msra.mxu0 %v354
        %2076 = vmatpush.msra.mxu0 %v348
        %2077 = vmatpush.msra.mxu0 %v342
        %2078 = vmatpush.msra.mxu0 %v336
        %2079 = vmatpush.msra.mxu0 %v330
        %2080 = vmatpush.msra.mxu0 %v324
        %2081 = vmatpush.msra.mxu0 %v318
        %2082 = vmatpush.msra.mxu0 %v312
        %2083 = vmatpush.msra.mxu0 %v306
        %2084 = vmatpush.msra.mxu0 %v300
        %2085 = vmatpush.msra.mxu0 %v294
        %2086 = vmatpush.msra.mxu0 %v288
        %2087 = vmatpush.msra.mxu0 %v282
        %2088 = vmatpush.msra.mxu0 %v276
        %2089 = vmatpush.msra.mxu0 %v270
        %2090 = vmatpush.msra.mxu0 %v264
        %2091 = vmatmul.f32.gmra.mxu0 %v1899
        %v2092 = vpop.f32.mrf.mxu0
        %v2093 = vadd.f32 %v904, %v2092
        %2094 = vdwg.mxu0
        %2095 = vmatpush.msra.mxu0 %v450
        %2096 = vmatpush.msra.mxu0 %v444
        %2097 = vmatpush.msra.mxu0 %v438
        %2098 = vmatpush.msra.mxu0 %v432
        %2099 = vmatpush.msra.mxu0 %v426
        %2100 = vmatpush.msra.mxu0 %v420
        %2101 = vmatpush.msra.mxu0 %v414
        %2102 = vmatpush.msra.mxu0 %v408
        %2103 = vmatpush.msra.mxu0 %v402
        %2104 = vmatpush.msra.mxu0 %v396
        %2105 = vmatpush.msra.mxu0 %v390
        %2106 = vmatpush.msra.mxu0 %v384
        %2107 = vmatpush.msra.mxu0 %v378
        %2108 = vmatpush.msra.mxu0 %v372
        %2109 = vmatpush.msra.mxu0 %v366
        %2110 = vmatpush.msra.mxu0 %v360
        %2111 = vmatmul.f32.gmra.mxu0 %v1954
        %v2112 = vpop.f32.mrf.mxu0
        %v2113 = vadd.f32 %v2093, %v2112
        %2114 = vdwg.mxu0
        %2115 = vmatpush.msra.mxu0 %v355
        %2116 = vmatpush.msra.mxu0 %v349
        %2117 = vmatpush.msra.mxu0 %v343
        %2118 = vmatpush.msra.mxu0 %v337
        %2119 = vmatpush.msra.mxu0 %v331
        %2120 = vmatpush.msra.mxu0 %v325
        %2121 = vmatpush.msra.mxu0 %v319
        %2122 = vmatpush.msra.mxu0 %v313
        %2123 = vmatpush.msra.mxu0 %v307
        %2124 = vmatpush.msra.mxu0 %v301
        %2125 = vmatpush.msra.mxu0 %v295
        %2126 = vmatpush.msra.mxu0 %v289
        %2127 = vmatpush.msra.mxu0 %v283
        %2128 = vmatpush.msra.mxu0 %v277
        %2129 = vmatpush.msra.mxu0 %v271
        %2130 = vmatpush.msra.mxu0 %v265
        %2131 = vmatmul.f32.gmra.mxu0 %v1899
        %v2132 = vpop.f32.mrf.mxu0
        %v2133 = vadd.f32 %v905, %v2132
        %2134 = vdwg.mxu0
        %2135 = vmatpush.msra.mxu0 %v451
        %2136 = vmatpush.msra.mxu0 %v445
        %2137 = vmatpush.msra.mxu0 %v439
        %2138 = vmatpush.msra.mxu0 %v433
        %2139 = vmatpush.msra.mxu0 %v427
        %2140 = vmatpush.msra.mxu0 %v421
        %2141 = vmatpush.msra.mxu0 %v415
        %2142 = vmatpush.msra.mxu0 %v409
        %2143 = vmatpush.msra.mxu0 %v403
        %2144 = vmatpush.msra.mxu0 %v397
        %2145 = vmatpush.msra.mxu0 %v391
        %2146 = vmatpush.msra.mxu0 %v385
        %2147 = vmatpush.msra.mxu0 %v379
        %2148 = vmatpush.msra.mxu0 %v373
        %2149 = vmatpush.msra.mxu0 %v367
        %2150 = vmatpush.msra.mxu0 %v361
        %2151 = vmatmul.f32.gmra.mxu0 %v1954
        %v2152 = vpop.f32.mrf.mxu0
        %v2153 = vadd.f32 %v2133, %v2152
        %2154 = vdwg.mxu0
        %2155 = vmatpush.msra.mxu0 %v356
        %2156 = vmatpush.msra.mxu0 %v350
        %2157 = vmatpush.msra.mxu0 %v344
        %2158 = vmatpush.msra.mxu0 %v338
        %2159 = vmatpush.msra.mxu0 %v332
        %2160 = vmatpush.msra.mxu0 %v326
        %2161 = vmatpush.msra.mxu0 %v320
        %2162 = vmatpush.msra.mxu0 %v314
        %2163 = vmatpush.msra.mxu0 %v308
        %2164 = vmatpush.msra.mxu0 %v302
        %2165 = vmatpush.msra.mxu0 %v296
        %2166 = vmatpush.msra.mxu0 %v290
        %2167 = vmatpush.msra.mxu0 %v284
        %2168 = vmatpush.msra.mxu0 %v278
        %2169 = vmatpush.msra.mxu0 %v272
        %2170 = vmatpush.msra.mxu0 %v266
        %2171 = vmatmul.f32.gmra.mxu0 %v1899
        %v2172 = vpop.f32.mrf.mxu0
        %v2173 = vadd.f32 %v906, %v2172
        %2174 = vdwg.mxu0
        %2175 = vmatpush.msra.mxu0 %v452
        %2176 = vmatpush.msra.mxu0 %v446
        %2177 = vmatpush.msra.mxu0 %v440
        %2178 = vmatpush.msra.mxu0 %v434
        %2179 = vmatpush.msra.mxu0 %v428
        %2180 = vmatpush.msra.mxu0 %v422
        %2181 = vmatpush.msra.mxu0 %v416
        %2182 = vmatpush.msra.mxu0 %v410
        %2183 = vmatpush.msra.mxu0 %v404
        %2184 = vmatpush.msra.mxu0 %v398
        %2185 = vmatpush.msra.mxu0 %v392
        %2186 = vmatpush.msra.mxu0 %v386
        %2187 = vmatpush.msra.mxu0 %v380
        %2188 = vmatpush.msra.mxu0 %v374
        %2189 = vmatpush.msra.mxu0 %v368
        %2190 = vmatpush.msra.mxu0 %v362
        %2191 = vmatmul.f32.gmra.mxu0 %v1954
        %v2192 = vpop.f32.mrf.mxu0
        %v2193 = vadd.f32 %v2173, %v2192
        %2194 = vdwg.mxu0
        %v2195 = vrot.slane %v698, 3
        %v2197 = vadd.f32 %v1993, %v2195
        %v2198 = vxor.u32 %v2197, 2147483648
        %v2199 = vmul.f32 %v2198, 1.442695
        %v2200 = vpow.pop %v2199
        %v2201 = vadd.f32 %v2200, 1.0
        %v2202 = vrcp.pop %v2201
        %v2203 = vmul.f32 %v2201, %v2202
        %v2204 = vsub.f32 1.0, %v2203
        %v2205 = vmul.f32 %v2202, %v2204
        %v2206 = vadd.f32 %v2202, %v2205
        %vm2207 = vweird.f32 %v2201
        %vm2208 = vweird.f32 %v2202
        %vm2209 = vmor %vm2207, %vm2208
        %v2210 = vsel %vm2209, %v2202, %v2206
        %v2211 = vand.u32 2147483647, %v2201
        %vm2212 = vcmp.eq.f32.partialorder %v2211, 8.507059e+37
        %v2213 = vand.u32 %v2201, 2147483648
        %v2214 = vor.u32 1.1754944e-38, %v2213
        %v2215 = vsel %vm2212, %v2214, %v2210
        %v2216 = vmul.f32 1.0, %v2215
        %v2217 = vrot.slane %v738, 3
        %v2219 = vadd.f32 %v2033, %v2217
        %v2220 = vxor.u32 %v2219, 2147483648
        %v2221 = vmul.f32 %v2220, 1.442695
        %v2222 = vpow.pop %v2221
        %v2223 = vadd.f32 %v2222, 1.0
        %v2224 = vrcp.pop %v2223
        %v2225 = vmul.f32 %v2223, %v2224
        %v2226 = vsub.f32 1.0, %v2225
        %v2227 = vmul.f32 %v2224, %v2226
        %v2228 = vadd.f32 %v2224, %v2227
        %vm2229 = vweird.f32 %v2223
        %vm2230 = vweird.f32 %v2224
        %vm2231 = vmor %vm2229, %vm2230
        %v2232 = vsel %vm2231, %v2224, %v2228
        %v2233 = vand.u32 2147483647, %v2223
        %vm2234 = vcmp.eq.f32.partialorder %v2233, 8.507059e+37
        %v2235 = vand.u32 %v2223, 2147483648
        %v2236 = vor.u32 1.1754944e-38, %v2235
        %v2237 = vsel %vm2234, %v2236, %v2232
        %v2238 = vmul.f32 1.0, %v2237
        %v2239 = vrot.slane %v778, 3
        %v2241 = vmul.f32 %v2216, %v2239
        %v2242 = vadd.f32 %v2073, %v2241
        %v2243 = vtanh.pop %v2242
        %v2244 = vsub.f32 1.0, %v2238
        %v2245 = vmul.f32 %v2244, %v2243
        %v2246 = vrot.slane %v259, 3
        %v2248 = vmul.f32 %v2238, %v2246
        %v2249 = vadd.f32 %v2245, %v2248
        %v2250 = vrot.slane %v818, 3
        %v2252 = vadd.f32 %v2113, %v2250
        %v2253 = vxor.u32 %v2252, 2147483648
        %v2254 = vmul.f32 %v2253, 1.442695
        %v2255 = vpow.pop %v2254
        %v2256 = vadd.f32 %v2255, 1.0
        %v2257 = vrcp.pop %v2256
        %v2258 = vmul.f32 %v2256, %v2257
        %v2259 = vsub.f32 1.0, %v2258
        %v2260 = vmul.f32 %v2257, %v2259
        %v2261 = vadd.f32 %v2257, %v2260
        %vm2262 = vweird.f32 %v2256
        %vm2263 = vweird.f32 %v2257
        %vm2264 = vmor %vm2262, %vm2263
        %v2265 = vsel %vm2264, %v2257, %v2261
        %v2266 = vand.u32 2147483647, %v2256
        %vm2267 = vcmp.eq.f32.partialorder %v2266, 8.507059e+37
        %v2268 = vand.u32 %v2256, 2147483648
        %v2269 = vor.u32 1.1754944e-38, %v2268
        %v2270 = vsel %vm2267, %v2269, %v2265
        %v2271 = vmul.f32 1.0, %v2270
        %v2272 = vrot.slane %v858, 3
        %v2274 = vadd.f32 %v2153, %v2272
        %v2275 = vxor.u32 %v2274, 2147483648
        %v2276 = vmul.f32 %v2275, 1.442695
        %v2277 = vpow.pop %v2276
        %v2278 = vadd.f32 %v2277, 1.0
        %v2279 = vrcp.pop %v2278
        %v2280 = vmul.f32 %v2278, %v2279
        %v2281 = vsub.f32 1.0, %v2280
        %v2282 = vmul.f32 %v2279, %v2281
        %v2283 = vadd.f32 %v2279, %v2282
        %vm2284 = vweird.f32 %v2278
        %vm2285 = vweird.f32 %v2279
        %vm2286 = vmor %vm2284, %vm2285
        %v2287 = vsel %vm2286, %v2279, %v2283
        %v2288 = vand.u32 2147483647, %v2278
        %vm2289 = vcmp.eq.f32.partialorder %v2288, 8.507059e+37
        %v2290 = vand.u32 %v2278, 2147483648
        %v2291 = vor.u32 1.1754944e-38, %v2290
        %v2292 = vsel %vm2289, %v2291, %v2287
        %v2293 = vmul.f32 1.0, %v2292
        %v2294 = vrot.slane %v898, 3
        %v2296 = vmul.f32 %v2271, %v2294
        %v2297 = vadd.f32 %v2193, %v2296
        %v2298 = vtanh.pop %v2297
        %v2299 = vsub.f32 1.0, %v2293
        %v2300 = vmul.f32 %v2299, %v2298
        %v2301 = vrot.slane %v260, 3
        %v2303 = vmul.f32 %v2293, %v2301
        %v2304 = vadd.f32 %v2300, %v2303
        %2305 = vmatpush.msra.mxu0 %v351
        %2306 = vmatpush.msra.mxu0 %v345
        %2307 = vmatpush.msra.mxu0 %v339
        %2308 = vmatpush.msra.mxu0 %v333
        %2309 = vmatpush.msra.mxu0 %v327
        %2310 = vmatpush.msra.mxu0 %v321
        %2311 = vmatpush.msra.mxu0 %v315
        %2312 = vmatpush.msra.mxu0 %v309
        %2313 = vmatpush.msra.mxu0 %v303
        %2314 = vmatpush.msra.mxu0 %v297
        %2315 = vmatpush.msra.mxu0 %v291
        %2316 = vmatpush.msra.mxu0 %v285
        %2317 = vmatpush.msra.mxu0 %v279
        %2318 = vmatpush.msra.mxu0 %v273
        %2319 = vmatpush.msra.mxu0 %v267
        %2320 = vmatpush.msra.mxu0 %v261
        %2321 = vmatmul.f32.gmra.mxu0 %v2249
        %v2322 = vpop.f32.mrf.mxu0
        %v2323 = vadd.f32 %v901, %v2322
        %2324 = vdwg.mxu0
        %2325 = vmatpush.msra.mxu0 %v447
        %2326 = vmatpush.msra.mxu0 %v441
        %2327 = vmatpush.msra.mxu0 %v435
        %2328 = vmatpush.msra.mxu0 %v429
        %2329 = vmatpush.msra.mxu0 %v423
        %2330 = vmatpush.msra.mxu0 %v417
        %2331 = vmatpush.msra.mxu0 %v411
        %2332 = vmatpush.msra.mxu0 %v405
        %2333 = vmatpush.msra.mxu0 %v399
        %2334 = vmatpush.msra.mxu0 %v393
        %2335 = vmatpush.msra.mxu0 %v387
        %2336 = vmatpush.msra.mxu0 %v381
        %2337 = vmatpush.msra.mxu0 %v375
        %2338 = vmatpush.msra.mxu0 %v369
        %2339 = vmatpush.msra.mxu0 %v363
        %2340 = vmatpush.msra.mxu0 %v357
        %2341 = vmatmul.f32.gmra.mxu0 %v2304
        %v2342 = vpop.f32.mrf.mxu0
        %v2343 = vadd.f32 %v2323, %v2342
        %2344 = vdwg.mxu0
        %2345 = vmatpush.msra.mxu0 %v352
        %2346 = vmatpush.msra.mxu0 %v346
        %2347 = vmatpush.msra.mxu0 %v340
        %2348 = vmatpush.msra.mxu0 %v334
        %2349 = vmatpush.msra.mxu0 %v328
        %2350 = vmatpush.msra.mxu0 %v322
        %2351 = vmatpush.msra.mxu0 %v316
        %2352 = vmatpush.msra.mxu0 %v310
        %2353 = vmatpush.msra.mxu0 %v304
        %2354 = vmatpush.msra.mxu0 %v298
        %2355 = vmatpush.msra.mxu0 %v292
        %2356 = vmatpush.msra.mxu0 %v286
        %2357 = vmatpush.msra.mxu0 %v280
        %2358 = vmatpush.msra.mxu0 %v274
        %2359 = vmatpush.msra.mxu0 %v268
        %2360 = vmatpush.msra.mxu0 %v262
        %2361 = vmatmul.f32.gmra.mxu0 %v2249
        %v2362 = vpop.f32.mrf.mxu0
        %v2363 = vadd.f32 %v902, %v2362
        %2364 = vdwg.mxu0
        %2365 = vmatpush.msra.mxu0 %v448
        %2366 = vmatpush.msra.mxu0 %v442
        %2367 = vmatpush.msra.mxu0 %v436
        %2368 = vmatpush.msra.mxu0 %v430
        %2369 = vmatpush.msra.mxu0 %v424
        %2370 = vmatpush.msra.mxu0 %v418
        %2371 = vmatpush.msra.mxu0 %v412
        %2372 = vmatpush.msra.mxu0 %v406
        %2373 = vmatpush.msra.mxu0 %v400
        %2374 = vmatpush.msra.mxu0 %v394
        %2375 = vmatpush.msra.mxu0 %v388
        %2376 = vmatpush.msra.mxu0 %v382
        %2377 = vmatpush.msra.mxu0 %v376
        %2378 = vmatpush.msra.mxu0 %v370
        %2379 = vmatpush.msra.mxu0 %v364
        %2380 = vmatpush.msra.mxu0 %v358
        %2381 = vmatmul.f32.gmra.mxu0 %v2304
        %v2382 = vpop.f32.mrf.mxu0
        %v2383 = vadd.f32 %v2363, %v2382
        %2384 = vdwg.mxu0
        %2385 = vmatpush.msra.mxu0 %v353
        %2386 = vmatpush.msra.mxu0 %v347
        %2387 = vmatpush.msra.mxu0 %v341
        %2388 = vmatpush.msra.mxu0 %v335
        %2389 = vmatpush.msra.mxu0 %v329
        %2390 = vmatpush.msra.mxu0 %v323
        %2391 = vmatpush.msra.mxu0 %v317
        %2392 = vmatpush.msra.mxu0 %v311
        %2393 = vmatpush.msra.mxu0 %v305
        %2394 = vmatpush.msra.mxu0 %v299
        %2395 = vmatpush.msra.mxu0 %v293
        %2396 = vmatpush.msra.mxu0 %v287
        %2397 = vmatpush.msra.mxu0 %v281
        %2398 = vmatpush.msra.mxu0 %v275
        %2399 = vmatpush.msra.mxu0 %v269
        %2400 = vmatpush.msra.mxu0 %v263
        %2401 = vmatmul.f32.gmra.mxu0 %v2249
        %v2402 = vpop.f32.mrf.mxu0
        %v2403 = vadd.f32 %v903, %v2402
        %2404 = vdwg.mxu0
        %2405 = vmatpush.msra.mxu0 %v449
        %2406 = vmatpush.msra.mxu0 %v443
        %2407 = vmatpush.msra.mxu0 %v437
        %2408 = vmatpush.msra.mxu0 %v431
        %2409 = vmatpush.msra.mxu0 %v425
        %2410 = vmatpush.msra.mxu0 %v419
        %2411 = vmatpush.msra.mxu0 %v413
        %2412 = vmatpush.msra.mxu0 %v407
        %2413 = vmatpush.msra.mxu0 %v401
        %2414 = vmatpush.msra.mxu0 %v395
        %2415 = vmatpush.msra.mxu0 %v389
        %2416 = vmatpush.msra.mxu0 %v383
        %2417 = vmatpush.msra.mxu0 %v377
        %2418 = vmatpush.msra.mxu0 %v371
        %2419 = vmatpush.msra.mxu0 %v365
        %2420 = vmatpush.msra.mxu0 %v359
        %2421 = vmatmul.f32.gmra.mxu0 %v2304
        %v2422 = vpop.f32.mrf.mxu0
        %v2423 = vadd.f32 %v2403, %v2422
        %2424 = vdwg.mxu0
        %2425 = vmatpush.msra.mxu0 %v354
        %2426 = vmatpush.msra.mxu0 %v348
        %2427 = vmatpush.msra.mxu0 %v342
        %2428 = vmatpush.msra.mxu0 %v336
        %2429 = vmatpush.msra.mxu0 %v330
        %2430 = vmatpush.msra.mxu0 %v324
        %2431 = vmatpush.msra.mxu0 %v318
        %2432 = vmatpush.msra.mxu0 %v312
        %2433 = vmatpush.msra.mxu0 %v306
        %2434 = vmatpush.msra.mxu0 %v300
        %2435 = vmatpush.msra.mxu0 %v294
        %2436 = vmatpush.msra.mxu0 %v288
        %2437 = vmatpush.msra.mxu0 %v282
        %2438 = vmatpush.msra.mxu0 %v276
        %2439 = vmatpush.msra.mxu0 %v270
        %2440 = vmatpush.msra.mxu0 %v264
        %2441 = vmatmul.f32.gmra.mxu0 %v2249
        %v2442 = vpop.f32.mrf.mxu0
        %v2443 = vadd.f32 %v904, %v2442
        %2444 = vdwg.mxu0
        %2445 = vmatpush.msra.mxu0 %v450
        %2446 = vmatpush.msra.mxu0 %v444
        %2447 = vmatpush.msra.mxu0 %v438
        %2448 = vmatpush.msra.mxu0 %v432
        %2449 = vmatpush.msra.mxu0 %v426
        %2450 = vmatpush.msra.mxu0 %v420
        %2451 = vmatpush.msra.mxu0 %v414
        %2452 = vmatpush.msra.mxu0 %v408
        %2453 = vmatpush.msra.mxu0 %v402
        %2454 = vmatpush.msra.mxu0 %v396
        %2455 = vmatpush.msra.mxu0 %v390
        %2456 = vmatpush.msra.mxu0 %v384
        %2457 = vmatpush.msra.mxu0 %v378
        %2458 = vmatpush.msra.mxu0 %v372
        %2459 = vmatpush.msra.mxu0 %v366
        %2460 = vmatpush.msra.mxu0 %v360
        %2461 = vmatmul.f32.gmra.mxu0 %v2304
        %v2462 = vpop.f32.mrf.mxu0
        %v2463 = vadd.f32 %v2443, %v2462
        %2464 = vdwg.mxu0
        %2465 = vmatpush.msra.mxu0 %v355
        %2466 = vmatpush.msra.mxu0 %v349
        %2467 = vmatpush.msra.mxu0 %v343
        %2468 = vmatpush.msra.mxu0 %v337
        %2469 = vmatpush.msra.mxu0 %v331
        %2470 = vmatpush.msra.mxu0 %v325
        %2471 = vmatpush.msra.mxu0 %v319
        %2472 = vmatpush.msra.mxu0 %v313
        %2473 = vmatpush.msra.mxu0 %v307
        %2474 = vmatpush.msra.mxu0 %v301
        %2475 = vmatpush.msra.mxu0 %v295
        %2476 = vmatpush.msra.mxu0 %v289
        %2477 = vmatpush.msra.mxu0 %v283
        %2478 = vmatpush.msra.mxu0 %v277
        %2479 = vmatpush.msra.mxu0 %v271
        %2480 = vmatpush.msra.mxu0 %v265
        %2481 = vmatmul.f32.gmra.mxu0 %v2249
        %v2482 = vpop.f32.mrf.mxu0
        %v2483 = vadd.f32 %v905, %v2482
        %2484 = vdwg.mxu0
        %2485 = vmatpush.msra.mxu0 %v451
        %2486 = vmatpush.msra.mxu0 %v445
        %2487 = vmatpush.msra.mxu0 %v439
        %2488 = vmatpush.msra.mxu0 %v433
        %2489 = vmatpush.msra.mxu0 %v427
        %2490 = vmatpush.msra.mxu0 %v421
        %2491 = vmatpush.msra.mxu0 %v415
        %2492 = vmatpush.msra.mxu0 %v409
        %2493 = vmatpush.msra.mxu0 %v403
        %2494 = vmatpush.msra.mxu0 %v397
        %2495 = vmatpush.msra.mxu0 %v391
        %2496 = vmatpush.msra.mxu0 %v385
        %2497 = vmatpush.msra.mxu0 %v379
        %2498 = vmatpush.msra.mxu0 %v373
        %2499 = vmatpush.msra.mxu0 %v367
        %2500 = vmatpush.msra.mxu0 %v361
        %2501 = vmatmul.f32.gmra.mxu0 %v2304
        %v2502 = vpop.f32.mrf.mxu0
        %v2503 = vadd.f32 %v2483, %v2502
        %2504 = vdwg.mxu0
        %2505 = vmatpush.msra.mxu0 %v356
        %2506 = vmatpush.msra.mxu0 %v350
        %2507 = vmatpush.msra.mxu0 %v344
        %2508 = vmatpush.msra.mxu0 %v338
        %2509 = vmatpush.msra.mxu0 %v332
        %2510 = vmatpush.msra.mxu0 %v326
        %2511 = vmatpush.msra.mxu0 %v320
        %2512 = vmatpush.msra.mxu0 %v314
        %2513 = vmatpush.msra.mxu0 %v308
        %2514 = vmatpush.msra.mxu0 %v302
        %2515 = vmatpush.msra.mxu0 %v296
        %2516 = vmatpush.msra.mxu0 %v290
        %2517 = vmatpush.msra.mxu0 %v284
        %2518 = vmatpush.msra.mxu0 %v278
        %2519 = vmatpush.msra.mxu0 %v272
        %2520 = vmatpush.msra.mxu0 %v266
        %2521 = vmatmul.f32.gmra.mxu0 %v2249
        %v2522 = vpop.f32.mrf.mxu0
        %v2523 = vadd.f32 %v906, %v2522
        %2524 = vdwg.mxu0
        %2525 = vmatpush.msra.mxu0 %v452
        %2526 = vmatpush.msra.mxu0 %v446
        %2527 = vmatpush.msra.mxu0 %v440
        %2528 = vmatpush.msra.mxu0 %v434
        %2529 = vmatpush.msra.mxu0 %v428
        %2530 = vmatpush.msra.mxu0 %v422
        %2531 = vmatpush.msra.mxu0 %v416
        %2532 = vmatpush.msra.mxu0 %v410
        %2533 = vmatpush.msra.mxu0 %v404
        %2534 = vmatpush.msra.mxu0 %v398
        %2535 = vmatpush.msra.mxu0 %v392
        %2536 = vmatpush.msra.mxu0 %v386
        %2537 = vmatpush.msra.mxu0 %v380
        %2538 = vmatpush.msra.mxu0 %v374
        %2539 = vmatpush.msra.mxu0 %v368
        %2540 = vmatpush.msra.mxu0 %v362
        %2541 = vmatmul.f32.gmra.mxu0 %v2304
        %v2542 = vpop.f32.mrf.mxu0
        %v2543 = vadd.f32 %v2523, %v2542
        %2544 = vdwg.mxu0
        %v2545 = vrot.slane %v698, 4
        %v2547 = vadd.f32 %v2343, %v2545
        %v2548 = vxor.u32 %v2547, 2147483648
        %v2549 = vmul.f32 %v2548, 1.442695
        %v2550 = vpow.pop %v2549
        %v2551 = vadd.f32 %v2550, 1.0
        %v2552 = vrcp.pop %v2551
        %v2553 = vmul.f32 %v2551, %v2552
        %v2554 = vsub.f32 1.0, %v2553
        %v2555 = vmul.f32 %v2552, %v2554
        %v2556 = vadd.f32 %v2552, %v2555
        %vm2557 = vweird.f32 %v2551
        %vm2558 = vweird.f32 %v2552
        %vm2559 = vmor %vm2557, %vm2558
        %v2560 = vsel %vm2559, %v2552, %v2556
        %v2561 = vand.u32 2147483647, %v2551
        %vm2562 = vcmp.eq.f32.partialorder %v2561, 8.507059e+37
        %v2563 = vand.u32 %v2551, 2147483648
        %v2564 = vor.u32 1.1754944e-38, %v2563
        %v2565 = vsel %vm2562, %v2564, %v2560
        %v2566 = vmul.f32 1.0, %v2565
        %v2567 = vrot.slane %v738, 4
        %v2569 = vadd.f32 %v2383, %v2567
        %v2570 = vxor.u32 %v2569, 2147483648
        %v2571 = vmul.f32 %v2570, 1.442695
        %v2572 = vpow.pop %v2571
        %v2573 = vadd.f32 %v2572, 1.0
        %v2574 = vrcp.pop %v2573
        %v2575 = vmul.f32 %v2573, %v2574
        %v2576 = vsub.f32 1.0, %v2575
        %v2577 = vmul.f32 %v2574, %v2576
        %v2578 = vadd.f32 %v2574, %v2577
        %vm2579 = vweird.f32 %v2573
        %vm2580 = vweird.f32 %v2574
        %vm2581 = vmor %vm2579, %vm2580
        %v2582 = vsel %vm2581, %v2574, %v2578
        %v2583 = vand.u32 2147483647, %v2573
        %vm2584 = vcmp.eq.f32.partialorder %v2583, 8.507059e+37
        %v2585 = vand.u32 %v2573, 2147483648
        %v2586 = vor.u32 1.1754944e-38, %v2585
        %v2587 = vsel %vm2584, %v2586, %v2582
        %v2588 = vmul.f32 1.0, %v2587
        %v2589 = vrot.slane %v778, 4
        %v2591 = vmul.f32 %v2566, %v2589
        %v2592 = vadd.f32 %v2423, %v2591
        %v2593 = vtanh.pop %v2592
        %v2594 = vsub.f32 1.0, %v2588
        %v2595 = vmul.f32 %v2594, %v2593
        %v2596 = vrot.slane %v259, 4
        %v2598 = vmul.f32 %v2588, %v2596
        %v2599 = vadd.f32 %v2595, %v2598
        %v2600 = vrot.slane %v818, 4
        %v2602 = vadd.f32 %v2463, %v2600
        %v2603 = vxor.u32 %v2602, 2147483648
        %v2604 = vmul.f32 %v2603, 1.442695
        %v2605 = vpow.pop %v2604
        %v2606 = vadd.f32 %v2605, 1.0
        %v2607 = vrcp.pop %v2606
        %v2608 = vmul.f32 %v2606, %v2607
        %v2609 = vsub.f32 1.0, %v2608
        %v2610 = vmul.f32 %v2607, %v2609
        %v2611 = vadd.f32 %v2607, %v2610
        %vm2612 = vweird.f32 %v2606
        %vm2613 = vweird.f32 %v2607
        %vm2614 = vmor %vm2612, %vm2613
        %v2615 = vsel %vm2614, %v2607, %v2611
        %v2616 = vand.u32 2147483647, %v2606
        %vm2617 = vcmp.eq.f32.partialorder %v2616, 8.507059e+37
        %v2618 = vand.u32 %v2606, 2147483648
        %v2619 = vor.u32 1.1754944e-38, %v2618
        %v2620 = vsel %vm2617, %v2619, %v2615
        %v2621 = vmul.f32 1.0, %v2620
        %v2622 = vrot.slane %v858, 4
        %v2624 = vadd.f32 %v2503, %v2622
        %v2625 = vxor.u32 %v2624, 2147483648
        %v2626 = vmul.f32 %v2625, 1.442695
        %v2627 = vpow.pop %v2626
        %v2628 = vadd.f32 %v2627, 1.0
        %v2629 = vrcp.pop %v2628
        %v2630 = vmul.f32 %v2628, %v2629
        %v2631 = vsub.f32 1.0, %v2630
        %v2632 = vmul.f32 %v2629, %v2631
        %v2633 = vadd.f32 %v2629, %v2632
        %vm2634 = vweird.f32 %v2628
        %vm2635 = vweird.f32 %v2629
        %vm2636 = vmor %vm2634, %vm2635
        %v2637 = vsel %vm2636, %v2629, %v2633
        %v2638 = vand.u32 2147483647, %v2628
        %vm2639 = vcmp.eq.f32.partialorder %v2638, 8.507059e+37
        %v2640 = vand.u32 %v2628, 2147483648
        %v2641 = vor.u32 1.1754944e-38, %v2640
        %v2642 = vsel %vm2639, %v2641, %v2637
        %v2643 = vmul.f32 1.0, %v2642
        %v2644 = vrot.slane %v898, 4
        %v2646 = vmul.f32 %v2621, %v2644
        %v2647 = vadd.f32 %v2543, %v2646
        %v2648 = vtanh.pop %v2647
        %v2649 = vsub.f32 1.0, %v2643
        %v2650 = vmul.f32 %v2649, %v2648
        %v2651 = vrot.slane %v260, 4
        %v2653 = vmul.f32 %v2643, %v2651
        %v2654 = vadd.f32 %v2650, %v2653
        %2655 = vmatpush.msra.mxu0 %v351
        %2656 = vmatpush.msra.mxu0 %v345
        %2657 = vmatpush.msra.mxu0 %v339
        %2658 = vmatpush.msra.mxu0 %v333
        %2659 = vmatpush.msra.mxu0 %v327
        %2660 = vmatpush.msra.mxu0 %v321
        %2661 = vmatpush.msra.mxu0 %v315
        %2662 = vmatpush.msra.mxu0 %v309
        %2663 = vmatpush.msra.mxu0 %v303
        %2664 = vmatpush.msra.mxu0 %v297
        %2665 = vmatpush.msra.mxu0 %v291
        %2666 = vmatpush.msra.mxu0 %v285
        %2667 = vmatpush.msra.mxu0 %v279
        %2668 = vmatpush.msra.mxu0 %v273
        %2669 = vmatpush.msra.mxu0 %v267
        %2670 = vmatpush.msra.mxu0 %v261
        %2671 = vmatmul.f32.gmra.mxu0 %v2599
        %v2672 = vpop.f32.mrf.mxu0
        %v2673 = vadd.f32 %v901, %v2672
        %2674 = vdwg.mxu0
        %2675 = vmatpush.msra.mxu0 %v447
        %2676 = vmatpush.msra.mxu0 %v441
        %2677 = vmatpush.msra.mxu0 %v435
        %2678 = vmatpush.msra.mxu0 %v429
        %2679 = vmatpush.msra.mxu0 %v423
        %2680 = vmatpush.msra.mxu0 %v417
        %2681 = vmatpush.msra.mxu0 %v411
        %2682 = vmatpush.msra.mxu0 %v405
        %2683 = vmatpush.msra.mxu0 %v399
        %2684 = vmatpush.msra.mxu0 %v393
        %2685 = vmatpush.msra.mxu0 %v387
        %2686 = vmatpush.msra.mxu0 %v381
        %2687 = vmatpush.msra.mxu0 %v375
        %2688 = vmatpush.msra.mxu0 %v369
        %2689 = vmatpush.msra.mxu0 %v363
        %2690 = vmatpush.msra.mxu0 %v357
        %2691 = vmatmul.f32.gmra.mxu0 %v2654
        %v2692 = vpop.f32.mrf.mxu0
        %v2693 = vadd.f32 %v2673, %v2692
        %2694 = vdwg.mxu0
        %2695 = vmatpush.msra.mxu0 %v352
        %2696 = vmatpush.msra.mxu0 %v346
        %2697 = vmatpush.msra.mxu0 %v340
        %2698 = vmatpush.msra.mxu0 %v334
        %2699 = vmatpush.msra.mxu0 %v328
        %2700 = vmatpush.msra.mxu0 %v322
        %2701 = vmatpush.msra.mxu0 %v316
        %2702 = vmatpush.msra.mxu0 %v310
        %2703 = vmatpush.msra.mxu0 %v304
        %2704 = vmatpush.msra.mxu0 %v298
        %2705 = vmatpush.msra.mxu0 %v292
        %2706 = vmatpush.msra.mxu0 %v286
        %2707 = vmatpush.msra.mxu0 %v280
        %2708 = vmatpush.msra.mxu0 %v274
        %2709 = vmatpush.msra.mxu0 %v268
        %2710 = vmatpush.msra.mxu0 %v262
        %2711 = vmatmul.f32.gmra.mxu0 %v2599
        %v2712 = vpop.f32.mrf.mxu0
        %v2713 = vadd.f32 %v902, %v2712
        %2714 = vdwg.mxu0
        %2715 = vmatpush.msra.mxu0 %v448
        %2716 = vmatpush.msra.mxu0 %v442
        %2717 = vmatpush.msra.mxu0 %v436
        %2718 = vmatpush.msra.mxu0 %v430
        %2719 = vmatpush.msra.mxu0 %v424
        %2720 = vmatpush.msra.mxu0 %v418
        %2721 = vmatpush.msra.mxu0 %v412
        %2722 = vmatpush.msra.mxu0 %v406
        %2723 = vmatpush.msra.mxu0 %v400
        %2724 = vmatpush.msra.mxu0 %v394
        %2725 = vmatpush.msra.mxu0 %v388
        %2726 = vmatpush.msra.mxu0 %v382
        %2727 = vmatpush.msra.mxu0 %v376
        %2728 = vmatpush.msra.mxu0 %v370
        %2729 = vmatpush.msra.mxu0 %v364
        %2730 = vmatpush.msra.mxu0 %v358
        %2731 = vmatmul.f32.gmra.mxu0 %v2654
        %v2732 = vpop.f32.mrf.mxu0
        %v2733 = vadd.f32 %v2713, %v2732
        %2734 = vdwg.mxu0
        %2735 = vmatpush.msra.mxu0 %v353
        %2736 = vmatpush.msra.mxu0 %v347
        %2737 = vmatpush.msra.mxu0 %v341
        %2738 = vmatpush.msra.mxu0 %v335
        %2739 = vmatpush.msra.mxu0 %v329
        %2740 = vmatpush.msra.mxu0 %v323
        %2741 = vmatpush.msra.mxu0 %v317
        %2742 = vmatpush.msra.mxu0 %v311
        %2743 = vmatpush.msra.mxu0 %v305
        %2744 = vmatpush.msra.mxu0 %v299
        %2745 = vmatpush.msra.mxu0 %v293
        %2746 = vmatpush.msra.mxu0 %v287
        %2747 = vmatpush.msra.mxu0 %v281
        %2748 = vmatpush.msra.mxu0 %v275
        %2749 = vmatpush.msra.mxu0 %v269
        %2750 = vmatpush.msra.mxu0 %v263
        %2751 = vmatmul.f32.gmra.mxu0 %v2599
        %v2752 = vpop.f32.mrf.mxu0
        %v2753 = vadd.f32 %v903, %v2752
        %2754 = vdwg.mxu0
        %2755 = vmatpush.msra.mxu0 %v449
        %2756 = vmatpush.msra.mxu0 %v443
        %2757 = vmatpush.msra.mxu0 %v437
        %2758 = vmatpush.msra.mxu0 %v431
        %2759 = vmatpush.msra.mxu0 %v425
        %2760 = vmatpush.msra.mxu0 %v419
        %2761 = vmatpush.msra.mxu0 %v413
        %2762 = vmatpush.msra.mxu0 %v407
        %2763 = vmatpush.msra.mxu0 %v401
        %2764 = vmatpush.msra.mxu0 %v395
        %2765 = vmatpush.msra.mxu0 %v389
        %2766 = vmatpush.msra.mxu0 %v383
        %2767 = vmatpush.msra.mxu0 %v377
        %2768 = vmatpush.msra.mxu0 %v371
        %2769 = vmatpush.msra.mxu0 %v365
        %2770 = vmatpush.msra.mxu0 %v359
        %2771 = vmatmul.f32.gmra.mxu0 %v2654
        %v2772 = vpop.f32.mrf.mxu0
        %v2773 = vadd.f32 %v2753, %v2772
        %2774 = vdwg.mxu0
        %2775 = vmatpush.msra.mxu0 %v354
        %2776 = vmatpush.msra.mxu0 %v348
        %2777 = vmatpush.msra.mxu0 %v342
        %2778 = vmatpush.msra.mxu0 %v336
        %2779 = vmatpush.msra.mxu0 %v330
        %2780 = vmatpush.msra.mxu0 %v324
        %2781 = vmatpush.msra.mxu0 %v318
        %2782 = vmatpush.msra.mxu0 %v312
        %2783 = vmatpush.msra.mxu0 %v306
        %2784 = vmatpush.msra.mxu0 %v300
        %2785 = vmatpush.msra.mxu0 %v294
        %2786 = vmatpush.msra.mxu0 %v288
        %2787 = vmatpush.msra.mxu0 %v282
        %2788 = vmatpush.msra.mxu0 %v276
        %2789 = vmatpush.msra.mxu0 %v270
        %2790 = vmatpush.msra.mxu0 %v264
        %2791 = vmatmul.f32.gmra.mxu0 %v2599
        %v2792 = vpop.f32.mrf.mxu0
        %v2793 = vadd.f32 %v904, %v2792
        %2794 = vdwg.mxu0
        %2795 = vmatpush.msra.mxu0 %v450
        %2796 = vmatpush.msra.mxu0 %v444
        %2797 = vmatpush.msra.mxu0 %v438
        %2798 = vmatpush.msra.mxu0 %v432
        %2799 = vmatpush.msra.mxu0 %v426
        %2800 = vmatpush.msra.mxu0 %v420
        %2801 = vmatpush.msra.mxu0 %v414
        %2802 = vmatpush.msra.mxu0 %v408
        %2803 = vmatpush.msra.mxu0 %v402
        %2804 = vmatpush.msra.mxu0 %v396
        %2805 = vmatpush.msra.mxu0 %v390
        %2806 = vmatpush.msra.mxu0 %v384
        %2807 = vmatpush.msra.mxu0 %v378
        %2808 = vmatpush.msra.mxu0 %v372
        %2809 = vmatpush.msra.mxu0 %v366
        %2810 = vmatpush.msra.mxu0 %v360
        %2811 = vmatmul.f32.gmra.mxu0 %v2654
        %v2812 = vpop.f32.mrf.mxu0
        %v2813 = vadd.f32 %v2793, %v2812
        %2814 = vdwg.mxu0
        %2815 = vmatpush.msra.mxu0 %v355
        %2816 = vmatpush.msra.mxu0 %v349
        %2817 = vmatpush.msra.mxu0 %v343
        %2818 = vmatpush.msra.mxu0 %v337
        %2819 = vmatpush.msra.mxu0 %v331
        %2820 = vmatpush.msra.mxu0 %v325
        %2821 = vmatpush.msra.mxu0 %v319
        %2822 = vmatpush.msra.mxu0 %v313
        %2823 = vmatpush.msra.mxu0 %v307
        %2824 = vmatpush.msra.mxu0 %v301
        %2825 = vmatpush.msra.mxu0 %v295
        %2826 = vmatpush.msra.mxu0 %v289
        %2827 = vmatpush.msra.mxu0 %v283
        %2828 = vmatpush.msra.mxu0 %v277
        %2829 = vmatpush.msra.mxu0 %v271
        %2830 = vmatpush.msra.mxu0 %v265
        %2831 = vmatmul.f32.gmra.mxu0 %v2599
        %v2832 = vpop.f32.mrf.mxu0
        %v2833 = vadd.f32 %v905, %v2832
        %2834 = vdwg.mxu0
        %2835 = vmatpush.msra.mxu0 %v451
        %2836 = vmatpush.msra.mxu0 %v445
        %2837 = vmatpush.msra.mxu0 %v439
        %2838 = vmatpush.msra.mxu0 %v433
        %2839 = vmatpush.msra.mxu0 %v427
        %2840 = vmatpush.msra.mxu0 %v421
        %2841 = vmatpush.msra.mxu0 %v415
        %2842 = vmatpush.msra.mxu0 %v409
        %2843 = vmatpush.msra.mxu0 %v403
        %2844 = vmatpush.msra.mxu0 %v397
        %2845 = vmatpush.msra.mxu0 %v391
        %2846 = vmatpush.msra.mxu0 %v385
        %2847 = vmatpush.msra.mxu0 %v379
        %2848 = vmatpush.msra.mxu0 %v373
        %2849 = vmatpush.msra.mxu0 %v367
        %2850 = vmatpush.msra.mxu0 %v361
        %2851 = vmatmul.f32.gmra.mxu0 %v2654
        %v2852 = vpop.f32.mrf.mxu0
        %v2853 = vadd.f32 %v2833, %v2852
        %2854 = vdwg.mxu0
        %2855 = vmatpush.msra.mxu0 %v356
        %2856 = vmatpush.msra.mxu0 %v350
        %2857 = vmatpush.msra.mxu0 %v344
        %2858 = vmatpush.msra.mxu0 %v338
        %2859 = vmatpush.msra.mxu0 %v332
        %2860 = vmatpush.msra.mxu0 %v326
        %2861 = vmatpush.msra.mxu0 %v320
        %2862 = vmatpush.msra.mxu0 %v314
        %2863 = vmatpush.msra.mxu0 %v308
        %2864 = vmatpush.msra.mxu0 %v302
        %2865 = vmatpush.msra.mxu0 %v296
        %2866 = vmatpush.msra.mxu0 %v290
        %2867 = vmatpush.msra.mxu0 %v284
        %2868 = vmatpush.msra.mxu0 %v278
        %2869 = vmatpush.msra.mxu0 %v272
        %2870 = vmatpush.msra.mxu0 %v266
        %2871 = vmatmul.f32.gmra.mxu0 %v2599
        %v2872 = vpop.f32.mrf.mxu0
        %v2873 = vadd.f32 %v906, %v2872
        %2874 = vdwg.mxu0
        %2875 = vmatpush.msra.mxu0 %v452
        %2876 = vmatpush.msra.mxu0 %v446
        %2877 = vmatpush.msra.mxu0 %v440
        %2878 = vmatpush.msra.mxu0 %v434
        %2879 = vmatpush.msra.mxu0 %v428
        %2880 = vmatpush.msra.mxu0 %v422
        %2881 = vmatpush.msra.mxu0 %v416
        %2882 = vmatpush.msra.mxu0 %v410
        %2883 = vmatpush.msra.mxu0 %v404
        %2884 = vmatpush.msra.mxu0 %v398
        %2885 = vmatpush.msra.mxu0 %v392
        %2886 = vmatpush.msra.mxu0 %v386
        %2887 = vmatpush.msra.mxu0 %v380
        %2888 = vmatpush.msra.mxu0 %v374
        %2889 = vmatpush.msra.mxu0 %v368
        %2890 = vmatpush.msra.mxu0 %v362
        %2891 = vmatmul.f32.gmra.mxu0 %v2654
        %v2892 = vpop.f32.mrf.mxu0
        %v2893 = vadd.f32 %v2873, %v2892
        %2894 = vdwg.mxu0
        %v2895 = vrot.slane %v698, 5
        %v2897 = vadd.f32 %v2693, %v2895
        %v2898 = vxor.u32 %v2897, 2147483648
        %v2899 = vmul.f32 %v2898, 1.442695
        %v2900 = vpow.pop %v2899
        %v2901 = vadd.f32 %v2900, 1.0
        %v2902 = vrcp.pop %v2901
        %v2903 = vmul.f32 %v2901, %v2902
        %v2904 = vsub.f32 1.0, %v2903
        %v2905 = vmul.f32 %v2902, %v2904
        %v2906 = vadd.f32 %v2902, %v2905
        %vm2907 = vweird.f32 %v2901
        %vm2908 = vweird.f32 %v2902
        %vm2909 = vmor %vm2907, %vm2908
        %v2910 = vsel %vm2909, %v2902, %v2906
        %v2911 = vand.u32 2147483647, %v2901
        %vm2912 = vcmp.eq.f32.partialorder %v2911, 8.507059e+37
        %v2913 = vand.u32 %v2901, 2147483648
        %v2914 = vor.u32 1.1754944e-38, %v2913
        %v2915 = vsel %vm2912, %v2914, %v2910
        %v2916 = vmul.f32 1.0, %v2915
        %v2917 = vrot.slane %v738, 5
        %v2919 = vadd.f32 %v2733, %v2917
        %v2920 = vxor.u32 %v2919, 2147483648
        %v2921 = vmul.f32 %v2920, 1.442695
        %v2922 = vpow.pop %v2921
        %v2923 = vadd.f32 %v2922, 1.0
        %v2924 = vrcp.pop %v2923
        %v2925 = vmul.f32 %v2923, %v2924
        %v2926 = vsub.f32 1.0, %v2925
        %v2927 = vmul.f32 %v2924, %v2926
        %v2928 = vadd.f32 %v2924, %v2927
        %vm2929 = vweird.f32 %v2923
        %vm2930 = vweird.f32 %v2924
        %vm2931 = vmor %vm2929, %vm2930
        %v2932 = vsel %vm2931, %v2924, %v2928
        %v2933 = vand.u32 2147483647, %v2923
        %vm2934 = vcmp.eq.f32.partialorder %v2933, 8.507059e+37
        %v2935 = vand.u32 %v2923, 2147483648
        %v2936 = vor.u32 1.1754944e-38, %v2935
        %v2937 = vsel %vm2934, %v2936, %v2932
        %v2938 = vmul.f32 1.0, %v2937
        %v2939 = vrot.slane %v778, 5
        %v2941 = vmul.f32 %v2916, %v2939
        %v2942 = vadd.f32 %v2773, %v2941
        %v2943 = vtanh.pop %v2942
        %v2944 = vsub.f32 1.0, %v2938
        %v2945 = vmul.f32 %v2944, %v2943
        %v2946 = vrot.slane %v259, 5
        %v2948 = vmul.f32 %v2938, %v2946
        %v2949 = vadd.f32 %v2945, %v2948
        %v2950 = vrot.slane %v818, 5
        %v2952 = vadd.f32 %v2813, %v2950
        %v2953 = vxor.u32 %v2952, 2147483648
        %v2954 = vmul.f32 %v2953, 1.442695
        %v2955 = vpow.pop %v2954
        %v2956 = vadd.f32 %v2955, 1.0
        %v2957 = vrcp.pop %v2956
        %v2958 = vmul.f32 %v2956, %v2957
        %v2959 = vsub.f32 1.0, %v2958
        %v2960 = vmul.f32 %v2957, %v2959
        %v2961 = vadd.f32 %v2957, %v2960
        %vm2962 = vweird.f32 %v2956
        %vm2963 = vweird.f32 %v2957
        %vm2964 = vmor %vm2962, %vm2963
        %v2965 = vsel %vm2964, %v2957, %v2961
        %v2966 = vand.u32 2147483647, %v2956
        %vm2967 = vcmp.eq.f32.partialorder %v2966, 8.507059e+37
        %v2968 = vand.u32 %v2956, 2147483648
        %v2969 = vor.u32 1.1754944e-38, %v2968
        %v2970 = vsel %vm2967, %v2969, %v2965
        %v2971 = vmul.f32 1.0, %v2970
        %v2972 = vrot.slane %v858, 5
        %v2974 = vadd.f32 %v2853, %v2972
        %v2975 = vxor.u32 %v2974, 2147483648
        %v2976 = vmul.f32 %v2975, 1.442695
        %v2977 = vpow.pop %v2976
        %v2978 = vadd.f32 %v2977, 1.0
        %v2979 = vrcp.pop %v2978
        %v2980 = vmul.f32 %v2978, %v2979
        %v2981 = vsub.f32 1.0, %v2980
        %v2982 = vmul.f32 %v2979, %v2981
        %v2983 = vadd.f32 %v2979, %v2982
        %vm2984 = vweird.f32 %v2978
        %vm2985 = vweird.f32 %v2979
        %vm2986 = vmor %vm2984, %vm2985
        %v2987 = vsel %vm2986, %v2979, %v2983
        %v2988 = vand.u32 2147483647, %v2978
        %vm2989 = vcmp.eq.f32.partialorder %v2988, 8.507059e+37
        %v2990 = vand.u32 %v2978, 2147483648
        %v2991 = vor.u32 1.1754944e-38, %v2990
        %v2992 = vsel %vm2989, %v2991, %v2987
        %v2993 = vmul.f32 1.0, %v2992
        %v2994 = vrot.slane %v898, 5
        %v2996 = vmul.f32 %v2971, %v2994
        %v2997 = vadd.f32 %v2893, %v2996
        %v2998 = vtanh.pop %v2997
        %v2999 = vsub.f32 1.0, %v2993
        %v3000 = vmul.f32 %v2999, %v2998
        %v3001 = vrot.slane %v260, 5
        %v3003 = vmul.f32 %v2993, %v3001
        %v3004 = vadd.f32 %v3000, %v3003
        %v3007 = vrot.slane %v1545, 7
        %v3008 = vrot.slane %v1604, 7
        %v3013 = vrot.slane %v1899, 6
        %v3014 = vrot.slane %v1954, 6
        %v3019 = vrot.slane %v2249, 5
        %v3020 = vrot.slane %v2304, 5
        %v3025 = vrot.slane %v2599, 4
        %v3026 = vrot.slane %v2654, 4
        %v3031 = vrot.slane %v2949, 3
        %v3032 = vrot.slane %v3004, 3
        %vm3035 = vcmask 1040384
        %v3036 = vsel %vm3035, %v1199, %v3007
        %v3037 = vsel %vm3035, %v1246, %v3008
        %vm3038 = vcmask 1041408
        %v3039 = vsel %vm3038, %v3036, %v3013
        %v3040 = vsel %vm3038, %v3037, %v3014
        %vm3041 = vcmask 1042432
        %v3042 = vsel %vm3041, %v3039, %v3019
        %v3043 = vsel %vm3041, %v3040, %v3020
        %vm3044 = vcmask 1043456
        %v3045 = vsel %vm3044, %v3042, %v3025
        %v3046 = vsel %vm3044, %v3043, %v3026
        %vm3047 = vcmask 1044480
        %v3048 = vsel %vm3047, %v3045, %v3031
        %v3049 = vsel %vm3047, %v3046, %v3032
        %3050 = vst [vmem:[%s258] sm:$0x3f] %v3048
        %3051 = vst [vmem:[%s258 + $0x8] sm:$0x3f] %v3049
        %p3052 = scmp.lt.s32.totalorder %s18, 1
        %s3053 = scalar_select %p3052, %s18, 1
        %s3054 = smul.addr %s3053, 2
        %s3055 = smul.addr %s3054, 8
        %s3056 = scalar_lea.vmem %s5, %s3055
        // Predicated region
        $region49: #{tpu_custom_call.1} parent=39 // pred_check
          %p3057 = pneg %p146
        $region50: #{tpu_custom_call.1} parent=39 // pred_check_branch
          %3059 = sbr.rel (%p3057) target = $region52
        $region51: #{tpu_custom_call.1} parent=39 // pred_region
          _
        $region52: #{tpu_custom_call.1} parent=39 // pred_fallthru
          _
      $region40: #{tpu_custom_call.1} parent=5 // pred_fallthru
        _
      %p3060 = scmp.le.s32.totalorder 2, %s13
      // Predicated region
      $region53: #{tpu_custom_call.1} parent=5 // pred_check
        %p3061 = pneg %p3060
      $region54: #{tpu_custom_call.1} parent=5 // pred_check_branch
        %3063 = sbr.rel (%p3061) target = $region56
      $region55: #{tpu_custom_call.1} parent=5 // pred_region
        %s3064 = ssub.s32 %s13, 2
        // Predicated region
        $region57: #{tpu_custom_call.1} parent=55 // pred_check
          %p3065 = pneg %p152
        $region58: #{tpu_custom_call.1} parent=55 // pred_check_branch
          %3067 = sbr.rel (%p3065) target = $region60
        $region59: #{tpu_custom_call.1} parent=55 // pred_region
          %p3068 = scmp.lt.s32.totalorder %s19, 1
          %s3069 = scalar_select %p3068, %s19, 1
          %s3070 = smul.addr %s3069, 2
          %s3071 = smul.addr %s3070, 8
          %s3072 = scalar_lea.vmem %s5, %s3071
        $region60: #{tpu_custom_call.1} parent=55 // pred_fallthru
          _
      $region56: #{tpu_custom_call.1} parent=5 // pred_fallthru
        _
    $region6: #{tpu_custom_call.1} parent=1 // loop_footer
      %s17 = sadd.s32 1, %s13
    $region7: #{tpu_custom_call.1} parent=1 // loop_footer_branch
      %12 = sbr.rel target = $region3
    $region8: #{tpu_custom_call.1} parent=1 // loop_exit
      _
    %3073 = vsyncpa [#allocation3], 1
    %s3074 = scalar_lea.sflag [#allocation3], 1
    %3075 = vsyncpa %s3074, 1
    %3076 = vsyncpa [#allocation5], 1

</llo_original>
